<compile_context>
chip_gen: v7x
topology: tpu7x:2x2x1
jax: 0.10.0
libtpu: 0.0.40
codegen_flags: <defaults>
</compile_context>

<pallas_src>
import math
import numpy as np
import jax
import jax.numpy as jnp
from jax import lax
from jax.experimental import pallas as pl
from jax.experimental.pallas import tpu as pltpu

NUM_HEADS = 8
LN_EPS = 1e-6          # MCAN LayerNorm: a_2*(x-mean)/(std+eps)+b_2, unbiased std
NEG_INF = -1e9


# ---------------------------------------------------------------------------
# in-kernel helpers
# ---------------------------------------------------------------------------
def _layernorm(z, gamma, beta):
    """MCAN LayerNorm (unbiased std); exact division for accuracy."""
    h = z.shape[-1]
    mean = jnp.mean(z, axis=-1, keepdims=True)
    d = z - mean
    var = jnp.sum(d * d, axis=-1, keepdims=True) * (1.0 / (h - 1))
    return gamma * (d / (jnp.sqrt(var) + LN_EPS)) + beta


# ---------------------------------------------------------------------------
# fused SGA kernel
# ---------------------------------------------------------------------------
def sga_kernel(x_ref, y_ref, xbias_ref, ybias_ref,
               wq1_ref, bq1_ref, wkv1_ref, bkv1_ref, wm1_ref, bm1_ref,
               g1_ref, be1_ref,
               wq2_ref, bq2_ref, wkv2_ref, bkv2_ref, wm2_ref, bm2_ref,
               g2_ref, be2_ref,
               w1_ref, b1_ref, w2_ref, b2_ref, g3_ref, be3_ref,
               o_ref,
               kv1_scr, kv2_scr, head_scr):
    H = wq1_ref.shape[0]
    dh = H // NUM_HEADS
    scale = 1.0 / math.sqrt(dh)
    TQ = o_ref.shape[1]
    qi = pl.program_id(1)

    # ---- K/V projections for BOTH stages: once per batch (qi is inner) -----
    @pl.when(qi == 0)
    def _():
        xf = x_ref[0]                                            # (Lx, H) f32
        yf = y_ref[0]                                            # (Ly, D2) f32
        kv1 = jnp.dot(xf.astype(jnp.bfloat16), wkv1_ref[...],
                      preferred_element_type=jnp.float32) + bkv1_ref[...]
        kv1_scr[...] = kv1.astype(jnp.bfloat16)                  # (Lx, 2H)
        kv2 = jnp.dot(yf.astype(jnp.bfloat16), wkv2_ref[...],
                      preferred_element_type=jnp.float32) + bkv2_ref[...]
        kv2_scr[...] = kv2.astype(jnp.bfloat16)                  # (Ly, 2H)

    # ---- query tile (and residual stream), sliced from resident full-x -----
    row0 = pl.multiple_of(qi * TQ, TQ)
    xq = x_ref[0, pl.ds(row0, TQ), :]                            # (TQ, H) f32

    xbias = xbias_ref[0]                                         # (1, Lx)
    ybias = ybias_ref[0]                                         # (1, Ly)

    def mha(q_f32, kv, bias, wm_ref, bm_ref):
        """q_f32: (TQ,H) f32; kv: (Lk,2H) bf16; bias: (1,Lk) additive mask."""
        Lk = kv.shape[0]
        qb = q_f32.astype(jnp.bfloat16)
        bias_b = jnp.broadcast_to(bias, (TQ, Lk))     # hoisted out of head loop
        # static head loop: dh may be < 128 lanes, so slices must be static
        for h in range(NUM_HEADS):
            lo, hi = h * dh, (h + 1) * dh
            qh = qb[:, lo:hi]                                    # (TQ, dh)
            kh = kv[:, lo:hi]                                    # (Lk, dh)
            vh = kv[:, H + lo:H + hi]                            # (Lk, dh)
            s = lax.dot_general(qh, kh, (((1,), (1,)), ((), ())),
                                preferred_element_type=jnp.float32) * scale + bias_b
            s = s - jnp.max(s, axis=-1, keepdims=True)
            p = jnp.exp(s)
            p = p * pl.reciprocal(jnp.sum(p, axis=-1, keepdims=True), approx=True)
            oh = jnp.dot(p.astype(jnp.bfloat16), vh,
                         preferred_element_type=jnp.float32)     # (TQ, dh)
            head_scr[:, lo:hi] = oh.astype(jnp.bfloat16)         # static lane write
        # one full-width merge matmul (K = H) instead of 8 K=dh matmuls
        return jnp.dot(head_scr[...], wm_ref[...],
                       preferred_element_type=jnp.float32) + bm_ref[...]

    # ---- stage 1: self attention + residual + LayerNorm ---------------------
    q1 = jnp.dot(xq.astype(jnp.bfloat16), wq1_ref[...],
                 preferred_element_type=jnp.float32) + bq1_ref[...]
    att1 = mha(q1, kv1_scr[...], xbias, wm1_ref, bm1_ref)
    x1 = _layernorm(xq + att1, g1_ref[...], be1_ref[...])        # dropout == id

    # ---- stage 2: cross attention (keys/values from y) + residual + LN ------
    q2 = jnp.dot(x1.astype(jnp.bfloat16), wq2_ref[...],
                 preferred_element_type=jnp.float32) + bq2_ref[...]
    att2 = mha(q2, kv2_scr[...], ybias, wm2_ref, bm2_ref)
    x2 = _layernorm(x1 + att2, g2_ref[...], be2_ref[...])

    # ---- stage 3: FFN (Linear -> ReLU -> Linear) + residual + LN ------------
    mid = jnp.dot(x2.astype(jnp.bfloat16), w1_ref[...],
                  preferred_element_type=jnp.float32) + b1_ref[...]
    mid = jnp.maximum(mid, 0.0)
    ff = jnp.dot(mid.astype(jnp.bfloat16), w2_ref[...],
                 preferred_element_type=jnp.float32) + b2_ref[...]
    o_ref[0] = _layernorm(x2 + ff, g3_ref[...], be3_ref[...]).astype(o_ref.dtype)


# ---------------------------------------------------------------------------
# wrapper
# ---------------------------------------------------------------------------
def _pick_tile(L, cap=256):
    """Largest query tile <= cap that divides L (multiple of 8); else L."""
    if L <= cap:
        return L
    for t in range(cap - (cap % 8), 7, -8):
        if L % t == 0:
            return t
    return L


def sga_forward(x, y, x_mask, y_mask, params):
    B, Lx, H = x.shape
    _, Ly, D2 = y.shape
    H4 = 4 * H

    TQ = _pick_tile(Lx, 256)
    n_q = Lx // TQ

    p1, p2, pf = params["mhatt1"], params["mhatt2"], params["ffn"]
    n1, n2, n3 = params["norm1"], params["norm2"], params["norm3"]

    bf16 = jnp.bfloat16
    # fused K/V projection weights; matmul weights pre-cast to bf16
    wkv1 = jnp.concatenate([p1["wk"], p1["wv"]], axis=1).astype(bf16)   # (H, 2H)
    bkv1 = jnp.concatenate([p1["bk"], p1["bv"]], axis=1)                # (1, 2H) f32
    wkv2 = jnp.concatenate([p2["wk"], p2["wv"]], axis=1).astype(bf16)   # (D2, 2H)
    bkv2 = jnp.concatenate([p2["bk"], p2["bv"]], axis=1)                # (1, 2H) f32

    wargs = (p1["wq"].astype(bf16), p1["bq"], wkv1, bkv1,
             p1["wm"].astype(bf16), p1["bm"], n1["gamma"], n1["beta"],
             p2["wq"].astype(bf16), p2["bq"], wkv2, bkv2,
             p2["wm"].astype(bf16), p2["bm"], n2["gamma"], n2["beta"],
             pf["w1"].astype(bf16), pf["b1"], pf["w2"].astype(bf16), pf["b2"],
             n3["gamma"], n3["beta"])

    # additive mask biases, precomputed and reshaped to (B, 1, L)
    xbias = (x_mask.astype(jnp.float32) * NEG_INF).reshape(B, 1, Lx)
    ybias = (y_mask.astype(jnp.float32) * NEG_INF).reshape(B, 1, Ly)

    def full(a):   # weight resident across the whole grid (constant block idx)
        return pl.BlockSpec(a.shape, lambda b, qi, _nd=a.ndim: (0,) * _nd)

    # ---- VMEM budget: computed from actual needs, not a blanket constant ----
    blk_bytes = (Lx * H * 4 + Ly * D2 * 4 + Lx * 4 + Ly * 4 + TQ * H * 4)
    w_bytes = sum(int(np.prod(w.shape)) * w.dtype.itemsize for w in wargs)
    scratch_bytes = (Lx * 2 * H + Ly * 2 * H + TQ * H) * 2          # bf16 scratch
    est = 2 * (blk_bytes + w_bytes) + scratch_bytes                 # 2x buffering
    vmem_limit = int(min(max(2 * est + (4 << 20), 16 << 20), 48 << 20))

    grid_spec = pltpu.PrefetchScalarGridSpec(
        num_scalar_prefetch=0,
        grid=(B, n_q),
        in_specs=[
            pl.BlockSpec((1, Lx, H), lambda b, qi: (b, 0, 0)),    # full x (q/k/v)
            pl.BlockSpec((1, Ly, D2), lambda b, qi: (b, 0, 0)),   # full y (k/v)
            pl.BlockSpec((1, 1, Lx), lambda b, qi: (b, 0, 0)),    # x mask bias
            pl.BlockSpec((1, 1, Ly), lambda b, qi: (b, 0, 0)),    # y mask bias
        ] + [full(w) for w in wargs],
        out_specs=pl.BlockSpec((1, TQ, H), lambda b, qi: (b, qi, 0)),
        scratch_shapes=[
            pltpu.VMEM((Lx, 2 * H), jnp.bfloat16),   # stage-1 K|V cache
            pltpu.VMEM((Ly, 2 * H), jnp.bfloat16),   # stage-2 K|V cache
            pltpu.VMEM((TQ, H), jnp.bfloat16),       # per-head output slab
        ],
    )
    return pl.pallas_call(
        sga_kernel,
        out_shape=jax.ShapeDtypeStruct((B, Lx, H), jnp.float32),
        grid_spec=grid_spec,
        compiler_params=pltpu.CompilerParams(
            # batch parallel (feeds v7x's 2 TCs); qi arbitrary (KV cache reuse)
            dimension_semantics=("parallel", "arbitrary"),
            vmem_limit_bytes=vmem_limit,
        ),
    )(x, y, xbias, ybias, *wargs)


# ---------------------------------------------------------------------------
# Pure-JAX reference (mirrors the PyTorch forward, eval mode, exact f32 math)
# ---------------------------------------------------------------------------
def _layernorm_ref(z, gamma, beta):
    h = z.shape[-1]
    mean = jnp.mean(z, axis=-1, keepdims=True)
    var = jnp.sum((z - mean) ** 2, axis=-1, keepdims=True) / (h - 1)
    return gamma * (z - mean) / (jnp.sqrt(var) + LN_EPS) + beta


def _mhatt_ref(xq, ykv, mask, p):
    B, Lq, H = xq.shape
    Lkv = ykv.shape[1]
    dh = H // NUM_HEADS
    q = xq @ p["wq"] + p["bq"]
    k = ykv @ p["wk"] + p["bk"]
    v = ykv @ p["wv"] + p["bv"]
    q = q.reshape(B, Lq, NUM_HEADS, dh).transpose(0, 2, 1, 3)
    k = k.reshape(B, Lkv, NUM_HEADS, dh).transpose(0, 2, 1, 3)
    v = v.reshape(B, Lkv, NUM_HEADS, dh).transpose(0, 2, 1, 3)
    s = jnp.einsum("bhqd,bhkd->bhqk", q, k) / math.sqrt(dh)
    s = jnp.where(mask[:, None, None, :] > 0, NEG_INF, s)
    a = jax.nn.softmax(s, axis=-1)
    o = jnp.einsum("bhqk,bhkd->bhqd", a, v).transpose(0, 2, 1, 3).reshape(B, Lq, H)
    return o @ p["wm"] + p["bm"]


def _sga_ref(x, y, x_mask, y_mask, params):
    x = _layernorm_ref(x + _mhatt_ref(x, x, x_mask, params["mhatt1"]),
                       params["norm1"]["gamma"], params["norm1"]["beta"])
    x = _layernorm_ref(x + _mhatt_ref(x, y, y_mask, params["mhatt2"]),
                       params["norm2"]["gamma"], params["norm2"]["beta"])
    f = params["ffn"]
    ff = jnp.maximum(x @ f["w1"] + f["b1"], 0.0) @ f["w2"] + f["b2"]
    x = _layernorm_ref(x + ff, params["norm3"]["gamma"], params["norm3"]["beta"])
    return x


# ---------------------------------------------------------------------------
# Parameter init (deterministic, synthetic)
# ---------------------------------------------------------------------------
def init_params(key, dim1, dim2):
    ks = jax.random.split(key, 12)

    def lin(k, din, dout):
        return (0.05 * jax.random.normal(k, (din, dout), jnp.float32),
                jnp.zeros((1, dout), jnp.float32))

    def mhatt(kq, kk, kv, km, d_in):
        wq, bq = lin(kq, dim1, dim1)
        wk, bk = lin(kk, d_in, dim1)
        wv, bv = lin(kv, d_in, dim1)
        wm, bm = lin(km, dim1, dim1)
        return dict(wq=wq, bq=bq, wk=wk, bk=bk, wv=wv, bv=bv, wm=wm, bm=bm)

    def norm():
        return dict(gamma=jnp.ones((1, dim1), jnp.float32),
                    beta=jnp.zeros((1, dim1), jnp.float32))

    w1, b1 = lin(ks[8], dim1, dim1 * 4)
    w2, b2 = lin(ks[9], dim1 * 4, dim1)
    return dict(
        mhatt1=mhatt(ks[0], ks[1], ks[2], ks[3], dim1),
        mhatt2=mhatt(ks[4], ks[5], ks[6], ks[7], dim2),
        ffn=dict(w1=w1, b1=b1, w2=w2, b2=b2),
        norm1=norm(), norm2=norm(), norm3=norm(),
    )


if __name__ == "__main__":
    B, Lx, Ly = 2, 16, 8
    DIM1, DIM2 = 32, 48   # hidden_size (image) / text feature dim

    key = jax.random.PRNGKey(0)
    k_x, k_y, k_p = jax.random.split(key, 3)

    x = jax.random.normal(k_x, (B, Lx, DIM1), jnp.float32)   # image features
    y = jax.random.normal(k_y, (B, Ly, DIM2), jnp.float32)   # text features

    # masks: 1.0 == masked (padding); deterministic valid lengths per batch.
    x_valid = jnp.array([16, 12])
    y_valid = jnp.array([8, 5])
    x_mask = (jnp.arange(Lx)[None, :] >= x_valid[:, None]).astype(jnp.float32)
    y_mask = (jnp.arange(Ly)[None, :] >= y_valid[:, None]).astype(jnp.float32)

    params = init_params(k_p, DIM1, DIM2)

    out = jax.jit(sga_forward)(x, y, x_mask, y_mask, params)
    out = jax.block_until_ready(out)

    ref = _sga_ref(x, y, x_mask, y_mask, params)
    # tolerance covers bf16 matmul operands + approx softmax reciprocal
    np.testing.assert_allclose(np.asarray(out), np.asarray(ref),
                               rtol=2e-2, atol=2e-2)
    print("KERNEL_OK")
</pallas_src>

<mosaic_0001>
module attributes {stable_mosaic.version = 11 : i64} {
  func.func @sga_kernel(%arg0: i32, %arg1: i32, %arg2: memref<1x16x32xf32, #tpu.memory_space<vmem>>, %arg3: memref<1x8x48xf32, #tpu.memory_space<vmem>>, %arg4: memref<1x1x16xf32, #tpu.memory_space<vmem>>, %arg5: memref<1x1x8xf32, #tpu.memory_space<vmem>>, %arg6: memref<32x32xbf16, #tpu.memory_space<vmem>>, %arg7: memref<1x32xf32, #tpu.memory_space<vmem>>, %arg8: memref<32x64xbf16, #tpu.memory_space<vmem>>, %arg9: memref<1x64xf32, #tpu.memory_space<vmem>>, %arg10: memref<32x32xbf16, #tpu.memory_space<vmem>>, %arg11: memref<1x32xf32, #tpu.memory_space<vmem>>, %arg12: memref<1x32xf32, #tpu.memory_space<vmem>>, %arg13: memref<1x32xf32, #tpu.memory_space<vmem>>, %arg14: memref<32x32xbf16, #tpu.memory_space<vmem>>, %arg15: memref<1x32xf32, #tpu.memory_space<vmem>>, %arg16: memref<48x64xbf16, #tpu.memory_space<vmem>>, %arg17: memref<1x64xf32, #tpu.memory_space<vmem>>, %arg18: memref<32x32xbf16, #tpu.memory_space<vmem>>, %arg19: memref<1x32xf32, #tpu.memory_space<vmem>>, %arg20: memref<1x32xf32, #tpu.memory_space<vmem>>, %arg21: memref<1x32xf32, #tpu.memory_space<vmem>>, %arg22: memref<32x128xbf16, #tpu.memory_space<vmem>>, %arg23: memref<1x128xf32, #tpu.memory_space<vmem>>, %arg24: memref<128x32xbf16, #tpu.memory_space<vmem>>, %arg25: memref<1x32xf32, #tpu.memory_space<vmem>>, %arg26: memref<1x32xf32, #tpu.memory_space<vmem>>, %arg27: memref<1x32xf32, #tpu.memory_space<vmem>>, %arg28: memref<1x16x32xf32, #tpu.memory_space<vmem>>, %arg29: memref<16x64xbf16, #tpu.memory_space<vmem>>, %arg30: memref<8x64xbf16, #tpu.memory_space<vmem>>, %arg31: memref<16x32xbf16, #tpu.memory_space<vmem>>) attributes {dimension_semantics = [#tpu.dimension_semantics<parallel>, #tpu.dimension_semantics<arbitrary>], iteration_bounds = array<i64: 2, 1>, scalar_prefetch = 0 : i64, scratch_operands = 3 : i64, tpu.core_type = #tpu.core_type<tc>, window_params = [{transform_indices = @transform_0, window_bounds = array<i64: 1, 16, 32>}, {transform_indices = @transform_1, window_bounds = array<i64: 1, 8, 48>}, {transform_indices = @transform_2, window_bounds = array<i64: 1, 1, 16>}, {transform_indices = @transform_3, window_bounds = array<i64: 1, 1, 8>}, {pipeline_mode = #tpu.pipeline_mode<synchronous>, transform_indices = @transform_4, window_bounds = array<i64: 32, 32>}, {pipeline_mode = #tpu.pipeline_mode<synchronous>, transform_indices = @transform_5, window_bounds = array<i64: 1, 32>}, {pipeline_mode = #tpu.pipeline_mode<synchronous>, transform_indices = @transform_6, window_bounds = array<i64: 32, 64>}, {pipeline_mode = #tpu.pipeline_mode<synchronous>, transform_indices = @transform_7, window_bounds = array<i64: 1, 64>}, {pipeline_mode = #tpu.pipeline_mode<synchronous>, transform_indices = @transform_8, window_bounds = array<i64: 32, 32>}, {pipeline_mode = #tpu.pipeline_mode<synchronous>, transform_indices = @transform_9, window_bounds = array<i64: 1, 32>}, {pipeline_mode = #tpu.pipeline_mode<synchronous>, transform_indices = @transform_10, window_bounds = array<i64: 1, 32>}, {pipeline_mode = #tpu.pipeline_mode<synchronous>, transform_indices = @transform_11, window_bounds = array<i64: 1, 32>}, {pipeline_mode = #tpu.pipeline_mode<synchronous>, transform_indices = @transform_12, window_bounds = array<i64: 32, 32>}, {pipeline_mode = #tpu.pipeline_mode<synchronous>, transform_indices = @transform_13, window_bounds = array<i64: 1, 32>}, {pipeline_mode = #tpu.pipeline_mode<synchronous>, transform_indices = @transform_14, window_bounds = array<i64: 48, 64>}, {pipeline_mode = #tpu.pipeline_mode<synchronous>, transform_indices = @transform_15, window_bounds = array<i64: 1, 64>}, {pipeline_mode = #tpu.pipeline_mode<synchronous>, transform_indices = @transform_16, window_bounds = array<i64: 32, 32>}, {pipeline_mode = #tpu.pipeline_mode<synchronous>, transform_indices = @transform_17, window_bounds = array<i64: 1, 32>}, {pipeline_mode = #tpu.pipeline_mode<synchronous>, transform_indices = @transform_18, window_bounds = array<i64: 1, 32>}, {pipeline_mode = #tpu.pipeline_mode<synchronous>, transform_indices = @transform_19, window_bounds = array<i64: 1, 32>}, {pipeline_mode = #tpu.pipeline_mode<synchronous>, transform_indices = @transform_20, window_bounds = array<i64: 32, 128>}, {pipeline_mode = #tpu.pipeline_mode<synchronous>, transform_indices = @transform_21, window_bounds = array<i64: 1, 128>}, {pipeline_mode = #tpu.pipeline_mode<synchronous>, transform_indices = @transform_22, window_bounds = array<i64: 128, 32>}, {pipeline_mode = #tpu.pipeline_mode<synchronous>, transform_indices = @transform_23, window_bounds = array<i64: 1, 32>}, {pipeline_mode = #tpu.pipeline_mode<synchronous>, transform_indices = @transform_24, window_bounds = array<i64: 1, 32>}, {pipeline_mode = #tpu.pipeline_mode<synchronous>, transform_indices = @transform_25, window_bounds = array<i64: 1, 32>}, {transform_indices = @transform_26, window_bounds = array<i64: 1, 16, 32>}]} {
    %c0_i32 = arith.constant 0 : i32
    %0 = arith.cmpi eq, %arg1, %c0_i32 : i32
    %1 = arith.extui %0 : i1 to i32
    %c0_i32_0 = arith.constant 0 : i32
    %2 = arith.cmpi ne, %1, %c0_i32_0 : i32
    scf.if %2 {
      %c0_181 = arith.constant 0 : index
      %c0_182 = arith.constant 0 : index
      %c0_183 = arith.constant 0 : index
      %466 = vector.load %arg2[%c0_181, %c0_182, %c0_183] : memref<1x16x32xf32, #tpu.memory_space<vmem>>, vector<1x16x32xf32>
      %467 = vector.shape_cast %466 : vector<1x16x32xf32> to vector<16x32xf32>
      %c0_184 = arith.constant 0 : index
      %c0_185 = arith.constant 0 : index
      %c0_186 = arith.constant 0 : index
      %468 = vector.load %arg3[%c0_184, %c0_185, %c0_186] : memref<1x8x48xf32, #tpu.memory_space<vmem>>, vector<1x8x48xf32>
      %469 = vector.shape_cast %468 : vector<1x8x48xf32> to vector<8x48xf32>
      %470 = arith.truncf %467 : vector<16x32xf32> to vector<16x32xbf16>
      %c0_187 = arith.constant 0 : index
      %c0_188 = arith.constant 0 : index
      %471 = vector.load %arg8[%c0_187, %c0_188] : memref<32x64xbf16, #tpu.memory_space<vmem>>, vector<32x64xbf16>
      %cst_189 = arith.constant dense<0.000000e+00> : vector<16x64xf32>
      %472 = tpu.matmul %470, %471, %cst_189 {dimension_numbers = #tpu.dot_dimension_numbers<[1], [0], [0], [1], [0, 0, 1, 1], [], []>} : vector<16x32xbf16>, vector<32x64xbf16>, vector<16x64xf32> -> vector<16x64xf32>
      %c0_190 = arith.constant 0 : index
      %c0_191 = arith.constant 0 : index
      %473 = vector.load %arg9[%c0_190, %c0_191] : memref<1x64xf32, #tpu.memory_space<vmem>>, vector<1x64xf32>
      %474 = vector.broadcast %473 : vector<1x64xf32> to vector<16x64xf32>
      %475 = arith.addf %472, %474 : vector<16x64xf32>
      %476 = arith.truncf %475 : vector<16x64xf32> to vector<16x64xbf16>
      %c0_192 = arith.constant 0 : index
      %c0_193 = arith.constant 0 : index
      %477 = vector.load %arg29[%c0_192, %c0_193] : memref<16x64xbf16, #tpu.memory_space<vmem>>, vector<16x64xbf16>
      tpu.vector_store %arg29[%c0_192, %c0_193], %476 {strides = array<i32>} : memref<16x64xbf16, #tpu.memory_space<vmem>>, vector<16x64xbf16>,
      %478 = arith.truncf %469 : vector<8x48xf32> to vector<8x48xbf16>
      %c0_194 = arith.constant 0 : index
      %c0_195 = arith.constant 0 : index
      %479 = vector.load %arg16[%c0_194, %c0_195] : memref<48x64xbf16, #tpu.memory_space<vmem>>, vector<48x64xbf16>
      %cst_196 = arith.constant dense<0.000000e+00> : vector<8x64xf32>
      %480 = tpu.matmul %478, %479, %cst_196 {dimension_numbers = #tpu.dot_dimension_numbers<[1], [0], [0], [1], [0, 0, 1, 1], [], []>} : vector<8x48xbf16>, vector<48x64xbf16>, vector<8x64xf32> -> vector<8x64xf32>
      %c0_197 = arith.constant 0 : index
      %c0_198 = arith.constant 0 : index
      %481 = vector.load %arg17[%c0_197, %c0_198] : memref<1x64xf32, #tpu.memory_space<vmem>>, vector<1x64xf32>
      %482 = vector.broadcast %481 : vector<1x64xf32> to vector<8x64xf32>
      %483 = arith.addf %480, %482 : vector<8x64xf32>
      %484 = arith.truncf %483 : vector<8x64xf32> to vector<8x64xbf16>
      %c0_199 = arith.constant 0 : index
      %c0_200 = arith.constant 0 : index
      %485 = vector.load %arg30[%c0_199, %c0_200] : memref<8x64xbf16, #tpu.memory_space<vmem>>, vector<8x64xbf16>
      tpu.vector_store %arg30[%c0_199, %c0_200], %484 {strides = array<i32>} : memref<8x64xbf16, #tpu.memory_space<vmem>>, vector<8x64xbf16>,
    } else {
    }
    %c16_i32 = arith.constant 16 : i32
    %3 = arith.muli %arg1, %c16_i32 : i32
    %4 = tpu.assume_multiple %3, 16 : i32
    %c0 = arith.constant 0 : index
    %5 = arith.index_cast %4 : i32 to index
    %c0_1 = arith.constant 0 : index
    %6 = vector.load %arg2[%c0, %5, %c0_1] : memref<1x16x32xf32, #tpu.memory_space<vmem>>, vector<1x16x32xf32>
    %7 = vector.shape_cast %6 : vector<1x16x32xf32> to vector<16x32xf32>
    %c0_2 = arith.constant 0 : index
    %c0_3 = arith.constant 0 : index
    %c0_4 = arith.constant 0 : index
    %8 = vector.load %arg4[%c0_2, %c0_3, %c0_4] : memref<1x1x16xf32, #tpu.memory_space<vmem>>, vector<1x1x16xf32>
    %9 = vector.shape_cast %8 : vector<1x1x16xf32> to vector<1x16xf32>
    %c0_5 = arith.constant 0 : index
    %c0_6 = arith.constant 0 : index
    %c0_7 = arith.constant 0 : index
    %10 = vector.load %arg5[%c0_5, %c0_6, %c0_7] : memref<1x1x8xf32, #tpu.memory_space<vmem>>, vector<1x1x8xf32>
    %11 = vector.shape_cast %10 : vector<1x1x8xf32> to vector<1x8xf32>
    %12 = arith.truncf %7 : vector<16x32xf32> to vector<16x32xbf16>
    %c0_8 = arith.constant 0 : index
    %c0_9 = arith.constant 0 : index
    %13 = vector.load %arg6[%c0_8, %c0_9] : memref<32x32xbf16, #tpu.memory_space<vmem>>, vector<32x32xbf16>
    %cst = arith.constant dense<0.000000e+00> : vector<16x32xf32>
    %14 = tpu.matmul %12, %13, %cst {dimension_numbers = #tpu.dot_dimension_numbers<[1], [0], [0], [1], [0, 0, 1, 1], [], []>} : vector<16x32xbf16>, vector<32x32xbf16>, vector<16x32xf32> -> vector<16x32xf32>
    %c0_10 = arith.constant 0 : index
    %c0_11 = arith.constant 0 : index
    %15 = vector.load %arg7[%c0_10, %c0_11] : memref<1x32xf32, #tpu.memory_space<vmem>>, vector<1x32xf32>
    %16 = vector.broadcast %15 : vector<1x32xf32> to vector<16x32xf32>
    %17 = arith.addf %14, %16 : vector<16x32xf32>
    %c0_12 = arith.constant 0 : index
    %c0_13 = arith.constant 0 : index
    %18 = vector.load %arg29[%c0_12, %c0_13] : memref<16x64xbf16, #tpu.memory_space<vmem>>, vector<16x64xbf16>
    %19 = arith.truncf %17 : vector<16x32xf32> to vector<16x32xbf16>
    %20 = vector.shape_cast %9 : vector<1x16xf32> to vector<1x16xf32>
    %21 = vector.broadcast %20 : vector<1x16xf32> to vector<16x16xf32>
    %22 = vector.extract_strided_slice %19 {offsets = [0, 0], sizes = [16, 4], strides = [1, 1]} : vector<16x32xbf16> to vector<16x4xbf16>
    %23 = vector.extract_strided_slice %18 {offsets = [0, 0], sizes = [16, 4], strides = [1, 1]} : vector<16x64xbf16> to vector<16x4xbf16>
    %24 = vector.extract_strided_slice %18 {offsets = [0, 32], sizes = [16, 4], strides = [1, 1]} : vector<16x64xbf16> to vector<16x4xbf16>
    %cst_14 = arith.constant dense<0.000000e+00> : vector<16x16xf32>
    %25 = tpu.matmul %22, %23, %cst_14 {dimension_numbers = #tpu.dot_dimension_numbers<[1], [1], [0], [0], [0, 0, 1, 0], [], []>} : vector<16x4xbf16>, vector<16x4xbf16>, vector<16x16xf32> -> vector<16x16xf32>
    %cst_15 = arith.constant 5.000000e-01 : f32
    %26 = vector.broadcast %cst_15 : f32 to vector<16x16xf32>
    %27 = arith.mulf %25, %26 : vector<16x16xf32>
    %28 = arith.addf %27, %21 : vector<16x16xf32>
    %cst_16 = arith.constant dense<0xFF800000> : vector<16xf32>
    %29 = vector.multi_reduction <maximumf>, %28, %cst_16 [1] : vector<16x16xf32> to vector<16xf32>
    %30 = vector.shape_cast %29 : vector<16xf32> to vector<16x1xf32>
    %31 = vector.broadcast %30 : vector<16x1xf32> to vector<16x16xf32>
    %32 = arith.subf %28, %31 : vector<16x16xf32>
    %33 = math.exp %32 : vector<16x16xf32>
    %cst_17 = arith.constant dense<0.000000e+00> : vector<16xf32>
    %34 = vector.multi_reduction <add>, %33, %cst_17 [1] : vector<16x16xf32> to vector<16xf32>
    %35 = vector.shape_cast %34 : vector<16xf32> to vector<16x1xf32>
    %36 = tpu.reciprocal %35 {approx = true} : vector<16x1xf32> -> vector<16x1xf32>
    %37 = vector.broadcast %36 : vector<16x1xf32> to vector<16x16xf32>
    %38 = arith.mulf %33, %37 : vector<16x16xf32>
    %39 = arith.truncf %38 : vector<16x16xf32> to vector<16x16xbf16>
    %cst_18 = arith.constant dense<0.000000e+00> : vector<16x4xf32>
    %40 = tpu.matmul %39, %24, %cst_18 {dimension_numbers = #tpu.dot_dimension_numbers<[1], [0], [0], [1], [0, 0, 1, 1], [], []>} : vector<16x16xbf16>, vector<16x4xbf16>, vector<16x4xf32> -> vector<16x4xf32>
    %41 = arith.truncf %40 : vector<16x4xf32> to vector<16x4xbf16>
    %c0_19 = arith.constant 0 : index
    %c0_20 = arith.constant 0 : index
    %42 = vector.load %arg31[%c0_19, %c0_20] : memref<16x32xbf16, #tpu.memory_space<vmem>>, vector<16x4xbf16>
    tpu.vector_store %arg31[%c0_19, %c0_20], %41 {strides = array<i32>} : memref<16x32xbf16, #tpu.memory_space<vmem>>, vector<16x4xbf16>,
    %43 = vector.extract_strided_slice %19 {offsets = [0, 4], sizes = [16, 4], strides = [1, 1]} : vector<16x32xbf16> to vector<16x4xbf16>
    %44 = vector.extract_strided_slice %18 {offsets = [0, 4], sizes = [16, 4], strides = [1, 1]} : vector<16x64xbf16> to vector<16x4xbf16>
    %45 = vector.extract_strided_slice %18 {offsets = [0, 36], sizes = [16, 4], strides = [1, 1]} : vector<16x64xbf16> to vector<16x4xbf16>
    %cst_21 = arith.constant dense<0.000000e+00> : vector<16x16xf32>
    %46 = tpu.matmul %43, %44, %cst_21 {dimension_numbers = #tpu.dot_dimension_numbers<[1], [1], [0], [0], [0, 0, 1, 0], [], []>} : vector<16x4xbf16>, vector<16x4xbf16>, vector<16x16xf32> -> vector<16x16xf32>
    %cst_22 = arith.constant 5.000000e-01 : f32
    %47 = vector.broadcast %cst_22 : f32 to vector<16x16xf32>
    %48 = arith.mulf %46, %47 : vector<16x16xf32>
    %49 = arith.addf %48, %21 : vector<16x16xf32>
    %cst_23 = arith.constant dense<0xFF800000> : vector<16xf32>
    %50 = vector.multi_reduction <maximumf>, %49, %cst_23 [1] : vector<16x16xf32> to vector<16xf32>
    %51 = vector.shape_cast %50 : vector<16xf32> to vector<16x1xf32>
    %52 = vector.broadcast %51 : vector<16x1xf32> to vector<16x16xf32>
    %53 = arith.subf %49, %52 : vector<16x16xf32>
    %54 = math.exp %53 : vector<16x16xf32>
    %cst_24 = arith.constant dense<0.000000e+00> : vector<16xf32>
    %55 = vector.multi_reduction <add>, %54, %cst_24 [1] : vector<16x16xf32> to vector<16xf32>
    %56 = vector.shape_cast %55 : vector<16xf32> to vector<16x1xf32>
    %57 = tpu.reciprocal %56 {approx = true} : vector<16x1xf32> -> vector<16x1xf32>
    %58 = vector.broadcast %57 : vector<16x1xf32> to vector<16x16xf32>
    %59 = arith.mulf %54, %58 : vector<16x16xf32>
    %60 = arith.truncf %59 : vector<16x16xf32> to vector<16x16xbf16>
    %cst_25 = arith.constant dense<0.000000e+00> : vector<16x4xf32>
    %61 = tpu.matmul %60, %45, %cst_25 {dimension_numbers = #tpu.dot_dimension_numbers<[1], [0], [0], [1], [0, 0, 1, 1], [], []>} : vector<16x16xbf16>, vector<16x4xbf16>, vector<16x4xf32> -> vector<16x4xf32>
    %62 = arith.truncf %61 : vector<16x4xf32> to vector<16x4xbf16>
    %c0_26 = arith.constant 0 : index
    %c4 = arith.constant 4 : index
    %63 = vector.load %arg31[%c0_26, %c4] : memref<16x32xbf16, #tpu.memory_space<vmem>>, vector<16x4xbf16>
    tpu.vector_store %arg31[%c0_26, %c4], %62 {strides = array<i32>} : memref<16x32xbf16, #tpu.memory_space<vmem>>, vector<16x4xbf16>,
    %64 = vector.extract_strided_slice %19 {offsets = [0, 8], sizes = [16, 4], strides = [1, 1]} : vector<16x32xbf16> to vector<16x4xbf16>
    %65 = vector.extract_strided_slice %18 {offsets = [0, 8], sizes = [16, 4], strides = [1, 1]} : vector<16x64xbf16> to vector<16x4xbf16>
    %66 = vector.extract_strided_slice %18 {offsets = [0, 40], sizes = [16, 4], strides = [1, 1]} : vector<16x64xbf16> to vector<16x4xbf16>
    %cst_27 = arith.constant dense<0.000000e+00> : vector<16x16xf32>
    %67 = tpu.matmul %64, %65, %cst_27 {dimension_numbers = #tpu.dot_dimension_numbers<[1], [1], [0], [0], [0, 0, 1, 0], [], []>} : vector<16x4xbf16>, vector<16x4xbf16>, vector<16x16xf32> -> vector<16x16xf32>
    %cst_28 = arith.constant 5.000000e-01 : f32
    %68 = vector.broadcast %cst_28 : f32 to vector<16x16xf32>
    %69 = arith.mulf %67, %68 : vector<16x16xf32>
    %70 = arith.addf %69, %21 : vector<16x16xf32>
    %cst_29 = arith.constant dense<0xFF800000> : vector<16xf32>
    %71 = vector.multi_reduction <maximumf>, %70, %cst_29 [1] : vector<16x16xf32> to vector<16xf32>
    %72 = vector.shape_cast %71 : vector<16xf32> to vector<16x1xf32>
    %73 = vector.broadcast %72 : vector<16x1xf32> to vector<16x16xf32>
    %74 = arith.subf %70, %73 : vector<16x16xf32>
    %75 = math.exp %74 : vector<16x16xf32>
    %cst_30 = arith.constant dense<0.000000e+00> : vector<16xf32>
    %76 = vector.multi_reduction <add>, %75, %cst_30 [1] : vector<16x16xf32> to vector<16xf32>
    %77 = vector.shape_cast %76 : vector<16xf32> to vector<16x1xf32>
    %78 = tpu.reciprocal %77 {approx = true} : vector<16x1xf32> -> vector<16x1xf32>
    %79 = vector.broadcast %78 : vector<16x1xf32> to vector<16x16xf32>
    %80 = arith.mulf %75, %79 : vector<16x16xf32>
    %81 = arith.truncf %80 : vector<16x16xf32> to vector<16x16xbf16>
    %cst_31 = arith.constant dense<0.000000e+00> : vector<16x4xf32>
    %82 = tpu.matmul %81, %66, %cst_31 {dimension_numbers = #tpu.dot_dimension_numbers<[1], [0], [0], [1], [0, 0, 1, 1], [], []>} : vector<16x16xbf16>, vector<16x4xbf16>, vector<16x4xf32> -> vector<16x4xf32>
    %83 = arith.truncf %82 : vector<16x4xf32> to vector<16x4xbf16>
    %c0_32 = arith.constant 0 : index
    %c8 = arith.constant 8 : index
    %84 = vector.load %arg31[%c0_32, %c8] : memref<16x32xbf16, #tpu.memory_space<vmem>>, vector<16x4xbf16>
    tpu.vector_store %arg31[%c0_32, %c8], %83 {strides = array<i32>} : memref<16x32xbf16, #tpu.memory_space<vmem>>, vector<16x4xbf16>,
    %85 = vector.extract_strided_slice %19 {offsets = [0, 12], sizes = [16, 4], strides = [1, 1]} : vector<16x32xbf16> to vector<16x4xbf16>
    %86 = vector.extract_strided_slice %18 {offsets = [0, 12], sizes = [16, 4], strides = [1, 1]} : vector<16x64xbf16> to vector<16x4xbf16>
    %87 = vector.extract_strided_slice %18 {offsets = [0, 44], sizes = [16, 4], strides = [1, 1]} : vector<16x64xbf16> to vector<16x4xbf16>
    %cst_33 = arith.constant dense<0.000000e+00> : vector<16x16xf32>
    %88 = tpu.matmul %85, %86, %cst_33 {dimension_numbers = #tpu.dot_dimension_numbers<[1], [1], [0], [0], [0, 0, 1, 0], [], []>} : vector<16x4xbf16>, vector<16x4xbf16>, vector<16x16xf32> -> vector<16x16xf32>
    %cst_34 = arith.constant 5.000000e-01 : f32
    %89 = vector.broadcast %cst_34 : f32 to vector<16x16xf32>
    %90 = arith.mulf %88, %89 : vector<16x16xf32>
    %91 = arith.addf %90, %21 : vector<16x16xf32>
    %cst_35 = arith.constant dense<0xFF800000> : vector<16xf32>
    %92 = vector.multi_reduction <maximumf>, %91, %cst_35 [1] : vector<16x16xf32> to vector<16xf32>
    %93 = vector.shape_cast %92 : vector<16xf32> to vector<16x1xf32>
    %94 = vector.broadcast %93 : vector<16x1xf32> to vector<16x16xf32>
    %95 = arith.subf %91, %94 : vector<16x16xf32>
    %96 = math.exp %95 : vector<16x16xf32>
    %cst_36 = arith.constant dense<0.000000e+00> : vector<16xf32>
    %97 = vector.multi_reduction <add>, %96, %cst_36 [1] : vector<16x16xf32> to vector<16xf32>
    %98 = vector.shape_cast %97 : vector<16xf32> to vector<16x1xf32>
    %99 = tpu.reciprocal %98 {approx = true} : vector<16x1xf32> -> vector<16x1xf32>
    %100 = vector.broadcast %99 : vector<16x1xf32> to vector<16x16xf32>
    %101 = arith.mulf %96, %100 : vector<16x16xf32>
    %102 = arith.truncf %101 : vector<16x16xf32> to vector<16x16xbf16>
    %cst_37 = arith.constant dense<0.000000e+00> : vector<16x4xf32>
    %103 = tpu.matmul %102, %87, %cst_37 {dimension_numbers = #tpu.dot_dimension_numbers<[1], [0], [0], [1], [0, 0, 1, 1], [], []>} : vector<16x16xbf16>, vector<16x4xbf16>, vector<16x4xf32> -> vector<16x4xf32>
    %104 = arith.truncf %103 : vector<16x4xf32> to vector<16x4xbf16>
    %c0_38 = arith.constant 0 : index
    %c12 = arith.constant 12 : index
    %105 = vector.load %arg31[%c0_38, %c12] : memref<16x32xbf16, #tpu.memory_space<vmem>>, vector<16x4xbf16>
    tpu.vector_store %arg31[%c0_38, %c12], %104 {strides = array<i32>} : memref<16x32xbf16, #tpu.memory_space<vmem>>, vector<16x4xbf16>,
    %106 = vector.extract_strided_slice %19 {offsets = [0, 16], sizes = [16, 4], strides = [1, 1]} : vector<16x32xbf16> to vector<16x4xbf16>
    %107 = vector.extract_strided_slice %18 {offsets = [0, 16], sizes = [16, 4], strides = [1, 1]} : vector<16x64xbf16> to vector<16x4xbf16>
    %108 = vector.extract_strided_slice %18 {offsets = [0, 48], sizes = [16, 4], strides = [1, 1]} : vector<16x64xbf16> to vector<16x4xbf16>
    %cst_39 = arith.constant dense<0.000000e+00> : vector<16x16xf32>
    %109 = tpu.matmul %106, %107, %cst_39 {dimension_numbers = #tpu.dot_dimension_numbers<[1], [1], [0], [0], [0, 0, 1, 0], [], []>} : vector<16x4xbf16>, vector<16x4xbf16>, vector<16x16xf32> -> vector<16x16xf32>
    %cst_40 = arith.constant 5.000000e-01 : f32
    %110 = vector.broadcast %cst_40 : f32 to vector<16x16xf32>
    %111 = arith.mulf %109, %110 : vector<16x16xf32>
    %112 = arith.addf %111, %21 : vector<16x16xf32>
    %cst_41 = arith.constant dense<0xFF800000> : vector<16xf32>
    %113 = vector.multi_reduction <maximumf>, %112, %cst_41 [1] : vector<16x16xf32> to vector<16xf32>
    %114 = vector.shape_cast %113 : vector<16xf32> to vector<16x1xf32>
    %115 = vector.broadcast %114 : vector<16x1xf32> to vector<16x16xf32>
    %116 = arith.subf %112, %115 : vector<16x16xf32>
    %117 = math.exp %116 : vector<16x16xf32>
    %cst_42 = arith.constant dense<0.000000e+00> : vector<16xf32>
    %118 = vector.multi_reduction <add>, %117, %cst_42 [1] : vector<16x16xf32> to vector<16xf32>
    %119 = vector.shape_cast %118 : vector<16xf32> to vector<16x1xf32>
    %120 = tpu.reciprocal %119 {approx = true} : vector<16x1xf32> -> vector<16x1xf32>
    %121 = vector.broadcast %120 : vector<16x1xf32> to vector<16x16xf32>
    %122 = arith.mulf %117, %121 : vector<16x16xf32>
    %123 = arith.truncf %122 : vector<16x16xf32> to vector<16x16xbf16>
    %cst_43 = arith.constant dense<0.000000e+00> : vector<16x4xf32>
    %124 = tpu.matmul %123, %108, %cst_43 {dimension_numbers = #tpu.dot_dimension_numbers<[1], [0], [0], [1], [0, 0, 1, 1], [], []>} : vector<16x16xbf16>, vector<16x4xbf16>, vector<16x4xf32> -> vector<16x4xf32>
    %125 = arith.truncf %124 : vector<16x4xf32> to vector<16x4xbf16>
    %c0_44 = arith.constant 0 : index
    %c16 = arith.constant 16 : index
    %126 = vector.load %arg31[%c0_44, %c16] : memref<16x32xbf16, #tpu.memory_space<vmem>>, vector<16x4xbf16>
    tpu.vector_store %arg31[%c0_44, %c16], %125 {strides = array<i32>} : memref<16x32xbf16, #tpu.memory_space<vmem>>, vector<16x4xbf16>,
    %127 = vector.extract_strided_slice %19 {offsets = [0, 20], sizes = [16, 4], strides = [1, 1]} : vector<16x32xbf16> to vector<16x4xbf16>
    %128 = vector.extract_strided_slice %18 {offsets = [0, 20], sizes = [16, 4], strides = [1, 1]} : vector<16x64xbf16> to vector<16x4xbf16>
    %129 = vector.extract_strided_slice %18 {offsets = [0, 52], sizes = [16, 4], strides = [1, 1]} : vector<16x64xbf16> to vector<16x4xbf16>
    %cst_45 = arith.constant dense<0.000000e+00> : vector<16x16xf32>
    %130 = tpu.matmul %127, %128, %cst_45 {dimension_numbers = #tpu.dot_dimension_numbers<[1], [1], [0], [0], [0, 0, 1, 0], [], []>} : vector<16x4xbf16>, vector<16x4xbf16>, vector<16x16xf32> -> vector<16x16xf32>
    %cst_46 = arith.constant 5.000000e-01 : f32
    %131 = vector.broadcast %cst_46 : f32 to vector<16x16xf32>
    %132 = arith.mulf %130, %131 : vector<16x16xf32>
    %133 = arith.addf %132, %21 : vector<16x16xf32>
    %cst_47 = arith.constant dense<0xFF800000> : vector<16xf32>
    %134 = vector.multi_reduction <maximumf>, %133, %cst_47 [1] : vector<16x16xf32> to vector<16xf32>
    %135 = vector.shape_cast %134 : vector<16xf32> to vector<16x1xf32>
    %136 = vector.broadcast %135 : vector<16x1xf32> to vector<16x16xf32>
    %137 = arith.subf %133, %136 : vector<16x16xf32>
    %138 = math.exp %137 : vector<16x16xf32>
    %cst_48 = arith.constant dense<0.000000e+00> : vector<16xf32>
    %139 = vector.multi_reduction <add>, %138, %cst_48 [1] : vector<16x16xf32> to vector<16xf32>
    %140 = vector.shape_cast %139 : vector<16xf32> to vector<16x1xf32>
    %141 = tpu.reciprocal %140 {approx = true} : vector<16x1xf32> -> vector<16x1xf32>
    %142 = vector.broadcast %141 : vector<16x1xf32> to vector<16x16xf32>
    %143 = arith.mulf %138, %142 : vector<16x16xf32>
    %144 = arith.truncf %143 : vector<16x16xf32> to vector<16x16xbf16>
    %cst_49 = arith.constant dense<0.000000e+00> : vector<16x4xf32>
    %145 = tpu.matmul %144, %129, %cst_49 {dimension_numbers = #tpu.dot_dimension_numbers<[1], [0], [0], [1], [0, 0, 1, 1], [], []>} : vector<16x16xbf16>, vector<16x4xbf16>, vector<16x4xf32> -> vector<16x4xf32>
    %146 = arith.truncf %145 : vector<16x4xf32> to vector<16x4xbf16>
    %c0_50 = arith.constant 0 : index
    %c20 = arith.constant 20 : index
    %147 = vector.load %arg31[%c0_50, %c20] : memref<16x32xbf16, #tpu.memory_space<vmem>>, vector<16x4xbf16>
    tpu.vector_store %arg31[%c0_50, %c20], %146 {strides = array<i32>} : memref<16x32xbf16, #tpu.memory_space<vmem>>, vector<16x4xbf16>,
    %148 = vector.extract_strided_slice %19 {offsets = [0, 24], sizes = [16, 4], strides = [1, 1]} : vector<16x32xbf16> to vector<16x4xbf16>
    %149 = vector.extract_strided_slice %18 {offsets = [0, 24], sizes = [16, 4], strides = [1, 1]} : vector<16x64xbf16> to vector<16x4xbf16>
    %150 = vector.extract_strided_slice %18 {offsets = [0, 56], sizes = [16, 4], strides = [1, 1]} : vector<16x64xbf16> to vector<16x4xbf16>
    %cst_51 = arith.constant dense<0.000000e+00> : vector<16x16xf32>
    %151 = tpu.matmul %148, %149, %cst_51 {dimension_numbers = #tpu.dot_dimension_numbers<[1], [1], [0], [0], [0, 0, 1, 0], [], []>} : vector<16x4xbf16>, vector<16x4xbf16>, vector<16x16xf32> -> vector<16x16xf32>
    %cst_52 = arith.constant 5.000000e-01 : f32
    %152 = vector.broadcast %cst_52 : f32 to vector<16x16xf32>
    %153 = arith.mulf %151, %152 : vector<16x16xf32>
    %154 = arith.addf %153, %21 : vector<16x16xf32>
    %cst_53 = arith.constant dense<0xFF800000> : vector<16xf32>
    %155 = vector.multi_reduction <maximumf>, %154, %cst_53 [1] : vector<16x16xf32> to vector<16xf32>
    %156 = vector.shape_cast %155 : vector<16xf32> to vector<16x1xf32>
    %157 = vector.broadcast %156 : vector<16x1xf32> to vector<16x16xf32>
    %158 = arith.subf %154, %157 : vector<16x16xf32>
    %159 = math.exp %158 : vector<16x16xf32>
    %cst_54 = arith.constant dense<0.000000e+00> : vector<16xf32>
    %160 = vector.multi_reduction <add>, %159, %cst_54 [1] : vector<16x16xf32> to vector<16xf32>
    %161 = vector.shape_cast %160 : vector<16xf32> to vector<16x1xf32>
    %162 = tpu.reciprocal %161 {approx = true} : vector<16x1xf32> -> vector<16x1xf32>
    %163 = vector.broadcast %162 : vector<16x1xf32> to vector<16x16xf32>
    %164 = arith.mulf %159, %163 : vector<16x16xf32>
    %165 = arith.truncf %164 : vector<16x16xf32> to vector<16x16xbf16>
    %cst_55 = arith.constant dense<0.000000e+00> : vector<16x4xf32>
    %166 = tpu.matmul %165, %150, %cst_55 {dimension_numbers = #tpu.dot_dimension_numbers<[1], [0], [0], [1], [0, 0, 1, 1], [], []>} : vector<16x16xbf16>, vector<16x4xbf16>, vector<16x4xf32> -> vector<16x4xf32>
    %167 = arith.truncf %166 : vector<16x4xf32> to vector<16x4xbf16>
    %c0_56 = arith.constant 0 : index
    %c24 = arith.constant 24 : index
    %168 = vector.load %arg31[%c0_56, %c24] : memref<16x32xbf16, #tpu.memory_space<vmem>>, vector<16x4xbf16>
    tpu.vector_store %arg31[%c0_56, %c24], %167 {strides = array<i32>} : memref<16x32xbf16, #tpu.memory_space<vmem>>, vector<16x4xbf16>,
    %169 = vector.extract_strided_slice %19 {offsets = [0, 28], sizes = [16, 4], strides = [1, 1]} : vector<16x32xbf16> to vector<16x4xbf16>
    %170 = vector.extract_strided_slice %18 {offsets = [0, 28], sizes = [16, 4], strides = [1, 1]} : vector<16x64xbf16> to vector<16x4xbf16>
    %171 = vector.extract_strided_slice %18 {offsets = [0, 60], sizes = [16, 4], strides = [1, 1]} : vector<16x64xbf16> to vector<16x4xbf16>
    %cst_57 = arith.constant dense<0.000000e+00> : vector<16x16xf32>
    %172 = tpu.matmul %169, %170, %cst_57 {dimension_numbers = #tpu.dot_dimension_numbers<[1], [1], [0], [0], [0, 0, 1, 0], [], []>} : vector<16x4xbf16>, vector<16x4xbf16>, vector<16x16xf32> -> vector<16x16xf32>
    %cst_58 = arith.constant 5.000000e-01 : f32
    %173 = vector.broadcast %cst_58 : f32 to vector<16x16xf32>
    %174 = arith.mulf %172, %173 : vector<16x16xf32>
    %175 = arith.addf %174, %21 : vector<16x16xf32>
    %cst_59 = arith.constant dense<0xFF800000> : vector<16xf32>
    %176 = vector.multi_reduction <maximumf>, %175, %cst_59 [1] : vector<16x16xf32> to vector<16xf32>
    %177 = vector.shape_cast %176 : vector<16xf32> to vector<16x1xf32>
    %178 = vector.broadcast %177 : vector<16x1xf32> to vector<16x16xf32>
    %179 = arith.subf %175, %178 : vector<16x16xf32>
    %180 = math.exp %179 : vector<16x16xf32>
    %cst_60 = arith.constant dense<0.000000e+00> : vector<16xf32>
    %181 = vector.multi_reduction <add>, %180, %cst_60 [1] : vector<16x16xf32> to vector<16xf32>
    %182 = vector.shape_cast %181 : vector<16xf32> to vector<16x1xf32>
    %183 = tpu.reciprocal %182 {approx = true} : vector<16x1xf32> -> vector<16x1xf32>
    %184 = vector.broadcast %183 : vector<16x1xf32> to vector<16x16xf32>
    %185 = arith.mulf %180, %184 : vector<16x16xf32>
    %186 = arith.truncf %185 : vector<16x16xf32> to vector<16x16xbf16>
    %cst_61 = arith.constant dense<0.000000e+00> : vector<16x4xf32>
    %187 = tpu.matmul %186, %171, %cst_61 {dimension_numbers = #tpu.dot_dimension_numbers<[1], [0], [0], [1], [0, 0, 1, 1], [], []>} : vector<16x16xbf16>, vector<16x4xbf16>, vector<16x4xf32> -> vector<16x4xf32>
    %188 = arith.truncf %187 : vector<16x4xf32> to vector<16x4xbf16>
    %c0_62 = arith.constant 0 : index
    %c28 = arith.constant 28 : index
    %189 = vector.load %arg31[%c0_62, %c28] : memref<16x32xbf16, #tpu.memory_space<vmem>>, vector<16x4xbf16>
    tpu.vector_store %arg31[%c0_62, %c28], %188 {strides = array<i32>} : memref<16x32xbf16, #tpu.memory_space<vmem>>, vector<16x4xbf16>,
    %c0_63 = arith.constant 0 : index
    %c0_64 = arith.constant 0 : index
    %190 = vector.load %arg31[%c0_63, %c0_64] : memref<16x32xbf16, #tpu.memory_space<vmem>>, vector<16x32xbf16>
    %c0_65 = arith.constant 0 : index
    %c0_66 = arith.constant 0 : index
    %191 = vector.load %arg10[%c0_65, %c0_66] : memref<32x32xbf16, #tpu.memory_space<vmem>>, vector<32x32xbf16>
    %cst_67 = arith.constant dense<0.000000e+00> : vector<16x32xf32>
    %192 = tpu.matmul %190, %191, %cst_67 {dimension_numbers = #tpu.dot_dimension_numbers<[1], [0], [0], [1], [0, 0, 1, 1], [], []>} : vector<16x32xbf16>, vector<32x32xbf16>, vector<16x32xf32> -> vector<16x32xf32>
    %c0_68 = arith.constant 0 : index
    %c0_69 = arith.constant 0 : index
    %193 = vector.load %arg11[%c0_68, %c0_69] : memref<1x32xf32, #tpu.memory_space<vmem>>, vector<1x32xf32>
    %194 = vector.broadcast %193 : vector<1x32xf32> to vector<16x32xf32>
    %195 = arith.addf %192, %194 : vector<16x32xf32>
    %196 = arith.addf %7, %195 : vector<16x32xf32>
    %c0_70 = arith.constant 0 : index
    %c0_71 = arith.constant 0 : index
    %197 = vector.load %arg12[%c0_70, %c0_71] : memref<1x32xf32, #tpu.memory_space<vmem>>, vector<1x32xf32>
    %c0_72 = arith.constant 0 : index
    %c0_73 = arith.constant 0 : index
    %198 = vector.load %arg13[%c0_72, %c0_73] : memref<1x32xf32, #tpu.memory_space<vmem>>, vector<1x32xf32>
    %cst_74 = arith.constant dense<0.000000e+00> : vector<16xf32>
    %199 = vector.multi_reduction <add>, %196, %cst_74 [1] : vector<16x32xf32> to vector<16xf32>
    %200 = vector.shape_cast %199 : vector<16xf32> to vector<16x1xf32>
    %cst_75 = arith.constant 3.200000e+01 : f32
    %201 = vector.broadcast %cst_75 : f32 to vector<16x1xf32>
    %202 = arith.divf %200, %201 : vector<16x1xf32>
    %203 = vector.broadcast %202 : vector<16x1xf32> to vector<16x32xf32>
    %204 = arith.subf %196, %203 : vector<16x32xf32>
    %205 = arith.mulf %204, %204 : vector<16x32xf32>
    %cst_76 = arith.constant dense<0.000000e+00> : vector<16xf32>
    %206 = vector.multi_reduction <add>, %205, %cst_76 [1] : vector<16x32xf32> to vector<16xf32>
    %207 = vector.shape_cast %206 : vector<16xf32> to vector<16x1xf32>
    %cst_77 = arith.constant 0.0322580636 : f32
    %208 = vector.broadcast %cst_77 : f32 to vector<16x1xf32>
    %209 = arith.mulf %207, %208 : vector<16x1xf32>
    %210 = math.sqrt %209 : vector<16x1xf32>
    %cst_78 = arith.constant 9.99999997E-7 : f32
    %211 = vector.broadcast %cst_78 : f32 to vector<16x1xf32>
    %212 = arith.addf %210, %211 : vector<16x1xf32>
    %213 = vector.broadcast %212 : vector<16x1xf32> to vector<16x32xf32>
    %214 = arith.divf %204, %213 : vector<16x32xf32>
    %215 = vector.broadcast %197 : vector<1x32xf32> to vector<16x32xf32>
    %216 = arith.mulf %215, %214 : vector<16x32xf32>
    %217 = vector.broadcast %198 : vector<1x32xf32> to vector<16x32xf32>
    %218 = arith.addf %216, %217 : vector<16x32xf32>
    %219 = arith.truncf %218 : vector<16x32xf32> to vector<16x32xbf16>
    %c0_79 = arith.constant 0 : index
    %c0_80 = arith.constant 0 : index
    %220 = vector.load %arg14[%c0_79, %c0_80] : memref<32x32xbf16, #tpu.memory_space<vmem>>, vector<32x32xbf16>
    %cst_81 = arith.constant dense<0.000000e+00> : vector<16x32xf32>
    %221 = tpu.matmul %219, %220, %cst_81 {dimension_numbers = #tpu.dot_dimension_numbers<[1], [0], [0], [1], [0, 0, 1, 1], [], []>} : vector<16x32xbf16>, vector<32x32xbf16>, vector<16x32xf32> -> vector<16x32xf32>
    %c0_82 = arith.constant 0 : index
    %c0_83 = arith.constant 0 : index
    %222 = vector.load %arg15[%c0_82, %c0_83] : memref<1x32xf32, #tpu.memory_space<vmem>>, vector<1x32xf32>
    %223 = vector.broadcast %222 : vector<1x32xf32> to vector<16x32xf32>
    %224 = arith.addf %221, %223 : vector<16x32xf32>
    %c0_84 = arith.constant 0 : index
    %c0_85 = arith.constant 0 : index
    %225 = vector.load %arg30[%c0_84, %c0_85] : memref<8x64xbf16, #tpu.memory_space<vmem>>, vector<8x64xbf16>
    %226 = arith.truncf %224 : vector<16x32xf32> to vector<16x32xbf16>
    %227 = vector.shape_cast %11 : vector<1x8xf32> to vector<1x8xf32>
    %228 = vector.broadcast %227 : vector<1x8xf32> to vector<16x8xf32>
    %229 = vector.extract_strided_slice %226 {offsets = [0, 0], sizes = [16, 4], strides = [1, 1]} : vector<16x32xbf16> to vector<16x4xbf16>
    %230 = vector.extract_strided_slice %225 {offsets = [0, 0], sizes = [8, 4], strides = [1, 1]} : vector<8x64xbf16> to vector<8x4xbf16>
    %231 = vector.extract_strided_slice %225 {offsets = [0, 32], sizes = [8, 4], strides = [1, 1]} : vector<8x64xbf16> to vector<8x4xbf16>
    %cst_86 = arith.constant dense<0.000000e+00> : vector<16x8xf32>
    %232 = tpu.matmul %229, %230, %cst_86 {dimension_numbers = #tpu.dot_dimension_numbers<[1], [1], [0], [0], [0, 0, 1, 0], [], []>} : vector<16x4xbf16>, vector<8x4xbf16>, vector<16x8xf32> -> vector<16x8xf32>
    %cst_87 = arith.constant 5.000000e-01 : f32
    %233 = vector.broadcast %cst_87 : f32 to vector<16x8xf32>
    %234 = arith.mulf %232, %233 : vector<16x8xf32>
    %235 = arith.addf %234, %228 : vector<16x8xf32>
    %cst_88 = arith.constant dense<0xFF800000> : vector<16xf32>
    %236 = vector.multi_reduction <maximumf>, %235, %cst_88 [1] : vector<16x8xf32> to vector<16xf32>
    %237 = vector.shape_cast %236 : vector<16xf32> to vector<16x1xf32>
    %238 = vector.broadcast %237 : vector<16x1xf32> to vector<16x8xf32>
    %239 = arith.subf %235, %238 : vector<16x8xf32>
    %240 = math.exp %239 : vector<16x8xf32>
    %cst_89 = arith.constant dense<0.000000e+00> : vector<16xf32>
    %241 = vector.multi_reduction <add>, %240, %cst_89 [1] : vector<16x8xf32> to vector<16xf32>
    %242 = vector.shape_cast %241 : vector<16xf32> to vector<16x1xf32>
    %243 = tpu.reciprocal %242 {approx = true} : vector<16x1xf32> -> vector<16x1xf32>
    %244 = vector.broadcast %243 : vector<16x1xf32> to vector<16x8xf32>
    %245 = arith.mulf %240, %244 : vector<16x8xf32>
    %246 = arith.truncf %245 : vector<16x8xf32> to vector<16x8xbf16>
    %cst_90 = arith.constant dense<0.000000e+00> : vector<16x4xf32>
    %247 = tpu.matmul %246, %231, %cst_90 {dimension_numbers = #tpu.dot_dimension_numbers<[1], [0], [0], [1], [0, 0, 1, 1], [], []>} : vector<16x8xbf16>, vector<8x4xbf16>, vector<16x4xf32> -> vector<16x4xf32>
    %248 = arith.truncf %247 : vector<16x4xf32> to vector<16x4xbf16>
    %c0_91 = arith.constant 0 : index
    %c0_92 = arith.constant 0 : index
    %249 = vector.load %arg31[%c0_91, %c0_92] : memref<16x32xbf16, #tpu.memory_space<vmem>>, vector<16x4xbf16>
    tpu.vector_store %arg31[%c0_91, %c0_92], %248 {strides = array<i32>} : memref<16x32xbf16, #tpu.memory_space<vmem>>, vector<16x4xbf16>,
    %250 = vector.extract_strided_slice %226 {offsets = [0, 4], sizes = [16, 4], strides = [1, 1]} : vector<16x32xbf16> to vector<16x4xbf16>
    %251 = vector.extract_strided_slice %225 {offsets = [0, 4], sizes = [8, 4], strides = [1, 1]} : vector<8x64xbf16> to vector<8x4xbf16>
    %252 = vector.extract_strided_slice %225 {offsets = [0, 36], sizes = [8, 4], strides = [1, 1]} : vector<8x64xbf16> to vector<8x4xbf16>
    %cst_93 = arith.constant dense<0.000000e+00> : vector<16x8xf32>
    %253 = tpu.matmul %250, %251, %cst_93 {dimension_numbers = #tpu.dot_dimension_numbers<[1], [1], [0], [0], [0, 0, 1, 0], [], []>} : vector<16x4xbf16>, vector<8x4xbf16>, vector<16x8xf32> -> vector<16x8xf32>
    %cst_94 = arith.constant 5.000000e-01 : f32
    %254 = vector.broadcast %cst_94 : f32 to vector<16x8xf32>
    %255 = arith.mulf %253, %254 : vector<16x8xf32>
    %256 = arith.addf %255, %228 : vector<16x8xf32>
    %cst_95 = arith.constant dense<0xFF800000> : vector<16xf32>
    %257 = vector.multi_reduction <maximumf>, %256, %cst_95 [1] : vector<16x8xf32> to vector<16xf32>
    %258 = vector.shape_cast %257 : vector<16xf32> to vector<16x1xf32>
    %259 = vector.broadcast %258 : vector<16x1xf32> to vector<16x8xf32>
    %260 = arith.subf %256, %259 : vector<16x8xf32>
    %261 = math.exp %260 : vector<16x8xf32>
    %cst_96 = arith.constant dense<0.000000e+00> : vector<16xf32>
    %262 = vector.multi_reduction <add>, %261, %cst_96 [1] : vector<16x8xf32> to vector<16xf32>
    %263 = vector.shape_cast %262 : vector<16xf32> to vector<16x1xf32>
    %264 = tpu.reciprocal %263 {approx = true} : vector<16x1xf32> -> vector<16x1xf32>
    %265 = vector.broadcast %264 : vector<16x1xf32> to vector<16x8xf32>
    %266 = arith.mulf %261, %265 : vector<16x8xf32>
    %267 = arith.truncf %266 : vector<16x8xf32> to vector<16x8xbf16>
    %cst_97 = arith.constant dense<0.000000e+00> : vector<16x4xf32>
    %268 = tpu.matmul %267, %252, %cst_97 {dimension_numbers = #tpu.dot_dimension_numbers<[1], [0], [0], [1], [0, 0, 1, 1], [], []>} : vector<16x8xbf16>, vector<8x4xbf16>, vector<16x4xf32> -> vector<16x4xf32>
    %269 = arith.truncf %268 : vector<16x4xf32> to vector<16x4xbf16>
    %c0_98 = arith.constant 0 : index
    %c4_99 = arith.constant 4 : index
    %270 = vector.load %arg31[%c0_98, %c4_99] : memref<16x32xbf16, #tpu.memory_space<vmem>>, vector<16x4xbf16>
    tpu.vector_store %arg31[%c0_98, %c4_99], %269 {strides = array<i32>} : memref<16x32xbf16, #tpu.memory_space<vmem>>, vector<16x4xbf16>,
    %271 = vector.extract_strided_slice %226 {offsets = [0, 8], sizes = [16, 4], strides = [1, 1]} : vector<16x32xbf16> to vector<16x4xbf16>
    %272 = vector.extract_strided_slice %225 {offsets = [0, 8], sizes = [8, 4], strides = [1, 1]} : vector<8x64xbf16> to vector<8x4xbf16>
    %273 = vector.extract_strided_slice %225 {offsets = [0, 40], sizes = [8, 4], strides = [1, 1]} : vector<8x64xbf16> to vector<8x4xbf16>
    %cst_100 = arith.constant dense<0.000000e+00> : vector<16x8xf32>
    %274 = tpu.matmul %271, %272, %cst_100 {dimension_numbers = #tpu.dot_dimension_numbers<[1], [1], [0], [0], [0, 0, 1, 0], [], []>} : vector<16x4xbf16>, vector<8x4xbf16>, vector<16x8xf32> -> vector<16x8xf32>
    %cst_101 = arith.constant 5.000000e-01 : f32
    %275 = vector.broadcast %cst_101 : f32 to vector<16x8xf32>
    %276 = arith.mulf %274, %275 : vector<16x8xf32>
    %277 = arith.addf %276, %228 : vector<16x8xf32>
    %cst_102 = arith.constant dense<0xFF800000> : vector<16xf32>
    %278 = vector.multi_reduction <maximumf>, %277, %cst_102 [1] : vector<16x8xf32> to vector<16xf32>
    %279 = vector.shape_cast %278 : vector<16xf32> to vector<16x1xf32>
    %280 = vector.broadcast %279 : vector<16x1xf32> to vector<16x8xf32>
    %281 = arith.subf %277, %280 : vector<16x8xf32>
    %282 = math.exp %281 : vector<16x8xf32>
    %cst_103 = arith.constant dense<0.000000e+00> : vector<16xf32>
    %283 = vector.multi_reduction <add>, %282, %cst_103 [1] : vector<16x8xf32> to vector<16xf32>
    %284 = vector.shape_cast %283 : vector<16xf32> to vector<16x1xf32>
    %285 = tpu.reciprocal %284 {approx = true} : vector<16x1xf32> -> vector<16x1xf32>
    %286 = vector.broadcast %285 : vector<16x1xf32> to vector<16x8xf32>
    %287 = arith.mulf %282, %286 : vector<16x8xf32>
    %288 = arith.truncf %287 : vector<16x8xf32> to vector<16x8xbf16>
    %cst_104 = arith.constant dense<0.000000e+00> : vector<16x4xf32>
    %289 = tpu.matmul %288, %273, %cst_104 {dimension_numbers = #tpu.dot_dimension_numbers<[1], [0], [0], [1], [0, 0, 1, 1], [], []>} : vector<16x8xbf16>, vector<8x4xbf16>, vector<16x4xf32> -> vector<16x4xf32>
    %290 = arith.truncf %289 : vector<16x4xf32> to vector<16x4xbf16>
    %c0_105 = arith.constant 0 : index
    %c8_106 = arith.constant 8 : index
    %291 = vector.load %arg31[%c0_105, %c8_106] : memref<16x32xbf16, #tpu.memory_space<vmem>>, vector<16x4xbf16>
    tpu.vector_store %arg31[%c0_105, %c8_106], %290 {strides = array<i32>} : memref<16x32xbf16, #tpu.memory_space<vmem>>, vector<16x4xbf16>,
    %292 = vector.extract_strided_slice %226 {offsets = [0, 12], sizes = [16, 4], strides = [1, 1]} : vector<16x32xbf16> to vector<16x4xbf16>
    %293 = vector.extract_strided_slice %225 {offsets = [0, 12], sizes = [8, 4], strides = [1, 1]} : vector<8x64xbf16> to vector<8x4xbf16>
    %294 = vector.extract_strided_slice %225 {offsets = [0, 44], sizes = [8, 4], strides = [1, 1]} : vector<8x64xbf16> to vector<8x4xbf16>
    %cst_107 = arith.constant dense<0.000000e+00> : vector<16x8xf32>
    %295 = tpu.matmul %292, %293, %cst_107 {dimension_numbers = #tpu.dot_dimension_numbers<[1], [1], [0], [0], [0, 0, 1, 0], [], []>} : vector<16x4xbf16>, vector<8x4xbf16>, vector<16x8xf32> -> vector<16x8xf32>
    %cst_108 = arith.constant 5.000000e-01 : f32
    %296 = vector.broadcast %cst_108 : f32 to vector<16x8xf32>
    %297 = arith.mulf %295, %296 : vector<16x8xf32>
    %298 = arith.addf %297, %228 : vector<16x8xf32>
    %cst_109 = arith.constant dense<0xFF800000> : vector<16xf32>
    %299 = vector.multi_reduction <maximumf>, %298, %cst_109 [1] : vector<16x8xf32> to vector<16xf32>
    %300 = vector.shape_cast %299 : vector<16xf32> to vector<16x1xf32>
    %301 = vector.broadcast %300 : vector<16x1xf32> to vector<16x8xf32>
    %302 = arith.subf %298, %301 : vector<16x8xf32>
    %303 = math.exp %302 : vector<16x8xf32>
    %cst_110 = arith.constant dense<0.000000e+00> : vector<16xf32>
    %304 = vector.multi_reduction <add>, %303, %cst_110 [1] : vector<16x8xf32> to vector<16xf32>
    %305 = vector.shape_cast %304 : vector<16xf32> to vector<16x1xf32>
    %306 = tpu.reciprocal %305 {approx = true} : vector<16x1xf32> -> vector<16x1xf32>
    %307 = vector.broadcast %306 : vector<16x1xf32> to vector<16x8xf32>
    %308 = arith.mulf %303, %307 : vector<16x8xf32>
    %309 = arith.truncf %308 : vector<16x8xf32> to vector<16x8xbf16>
    %cst_111 = arith.constant dense<0.000000e+00> : vector<16x4xf32>
    %310 = tpu.matmul %309, %294, %cst_111 {dimension_numbers = #tpu.dot_dimension_numbers<[1], [0], [0], [1], [0, 0, 1, 1], [], []>} : vector<16x8xbf16>, vector<8x4xbf16>, vector<16x4xf32> -> vector<16x4xf32>
    %311 = arith.truncf %310 : vector<16x4xf32> to vector<16x4xbf16>
    %c0_112 = arith.constant 0 : index
    %c12_113 = arith.constant 12 : index
    %312 = vector.load %arg31[%c0_112, %c12_113] : memref<16x32xbf16, #tpu.memory_space<vmem>>, vector<16x4xbf16>
    tpu.vector_store %arg31[%c0_112, %c12_113], %311 {strides = array<i32>} : memref<16x32xbf16, #tpu.memory_space<vmem>>, vector<16x4xbf16>,
    %313 = vector.extract_strided_slice %226 {offsets = [0, 16], sizes = [16, 4], strides = [1, 1]} : vector<16x32xbf16> to vector<16x4xbf16>
    %314 = vector.extract_strided_slice %225 {offsets = [0, 16], sizes = [8, 4], strides = [1, 1]} : vector<8x64xbf16> to vector<8x4xbf16>
    %315 = vector.extract_strided_slice %225 {offsets = [0, 48], sizes = [8, 4], strides = [1, 1]} : vector<8x64xbf16> to vector<8x4xbf16>
    %cst_114 = arith.constant dense<0.000000e+00> : vector<16x8xf32>
    %316 = tpu.matmul %313, %314, %cst_114 {dimension_numbers = #tpu.dot_dimension_numbers<[1], [1], [0], [0], [0, 0, 1, 0], [], []>} : vector<16x4xbf16>, vector<8x4xbf16>, vector<16x8xf32> -> vector<16x8xf32>
    %cst_115 = arith.constant 5.000000e-01 : f32
    %317 = vector.broadcast %cst_115 : f32 to vector<16x8xf32>
    %318 = arith.mulf %316, %317 : vector<16x8xf32>
    %319 = arith.addf %318, %228 : vector<16x8xf32>
    %cst_116 = arith.constant dense<0xFF800000> : vector<16xf32>
    %320 = vector.multi_reduction <maximumf>, %319, %cst_116 [1] : vector<16x8xf32> to vector<16xf32>
    %321 = vector.shape_cast %320 : vector<16xf32> to vector<16x1xf32>
    %322 = vector.broadcast %321 : vector<16x1xf32> to vector<16x8xf32>
    %323 = arith.subf %319, %322 : vector<16x8xf32>
    %324 = math.exp %323 : vector<16x8xf32>
    %cst_117 = arith.constant dense<0.000000e+00> : vector<16xf32>
    %325 = vector.multi_reduction <add>, %324, %cst_117 [1] : vector<16x8xf32> to vector<16xf32>
    %326 = vector.shape_cast %325 : vector<16xf32> to vector<16x1xf32>
    %327 = tpu.reciprocal %326 {approx = true} : vector<16x1xf32> -> vector<16x1xf32>
    %328 = vector.broadcast %327 : vector<16x1xf32> to vector<16x8xf32>
    %329 = arith.mulf %324, %328 : vector<16x8xf32>
    %330 = arith.truncf %329 : vector<16x8xf32> to vector<16x8xbf16>
    %cst_118 = arith.constant dense<0.000000e+00> : vector<16x4xf32>
    %331 = tpu.matmul %330, %315, %cst_118 {dimension_numbers = #tpu.dot_dimension_numbers<[1], [0], [0], [1], [0, 0, 1, 1], [], []>} : vector<16x8xbf16>, vector<8x4xbf16>, vector<16x4xf32> -> vector<16x4xf32>
    %332 = arith.truncf %331 : vector<16x4xf32> to vector<16x4xbf16>
    %c0_119 = arith.constant 0 : index
    %c16_120 = arith.constant 16 : index
    %333 = vector.load %arg31[%c0_119, %c16_120] : memref<16x32xbf16, #tpu.memory_space<vmem>>, vector<16x4xbf16>
    tpu.vector_store %arg31[%c0_119, %c16_120], %332 {strides = array<i32>} : memref<16x32xbf16, #tpu.memory_space<vmem>>, vector<16x4xbf16>,
    %334 = vector.extract_strided_slice %226 {offsets = [0, 20], sizes = [16, 4], strides = [1, 1]} : vector<16x32xbf16> to vector<16x4xbf16>
    %335 = vector.extract_strided_slice %225 {offsets = [0, 20], sizes = [8, 4], strides = [1, 1]} : vector<8x64xbf16> to vector<8x4xbf16>
    %336 = vector.extract_strided_slice %225 {offsets = [0, 52], sizes = [8, 4], strides = [1, 1]} : vector<8x64xbf16> to vector<8x4xbf16>
    %cst_121 = arith.constant dense<0.000000e+00> : vector<16x8xf32>
    %337 = tpu.matmul %334, %335, %cst_121 {dimension_numbers = #tpu.dot_dimension_numbers<[1], [1], [0], [0], [0, 0, 1, 0], [], []>} : vector<16x4xbf16>, vector<8x4xbf16>, vector<16x8xf32> -> vector<16x8xf32>
    %cst_122 = arith.constant 5.000000e-01 : f32
    %338 = vector.broadcast %cst_122 : f32 to vector<16x8xf32>
    %339 = arith.mulf %337, %338 : vector<16x8xf32>
    %340 = arith.addf %339, %228 : vector<16x8xf32>
    %cst_123 = arith.constant dense<0xFF800000> : vector<16xf32>
    %341 = vector.multi_reduction <maximumf>, %340, %cst_123 [1] : vector<16x8xf32> to vector<16xf32>
    %342 = vector.shape_cast %341 : vector<16xf32> to vector<16x1xf32>
    %343 = vector.broadcast %342 : vector<16x1xf32> to vector<16x8xf32>
    %344 = arith.subf %340, %343 : vector<16x8xf32>
    %345 = math.exp %344 : vector<16x8xf32>
    %cst_124 = arith.constant dense<0.000000e+00> : vector<16xf32>
    %346 = vector.multi_reduction <add>, %345, %cst_124 [1] : vector<16x8xf32> to vector<16xf32>
    %347 = vector.shape_cast %346 : vector<16xf32> to vector<16x1xf32>
    %348 = tpu.reciprocal %347 {approx = true} : vector<16x1xf32> -> vector<16x1xf32>
    %349 = vector.broadcast %348 : vector<16x1xf32> to vector<16x8xf32>
    %350 = arith.mulf %345, %349 : vector<16x8xf32>
    %351 = arith.truncf %350 : vector<16x8xf32> to vector<16x8xbf16>
    %cst_125 = arith.constant dense<0.000000e+00> : vector<16x4xf32>
    %352 = tpu.matmul %351, %336, %cst_125 {dimension_numbers = #tpu.dot_dimension_numbers<[1], [0], [0], [1], [0, 0, 1, 1], [], []>} : vector<16x8xbf16>, vector<8x4xbf16>, vector<16x4xf32> -> vector<16x4xf32>
    %353 = arith.truncf %352 : vector<16x4xf32> to vector<16x4xbf16>
    %c0_126 = arith.constant 0 : index
    %c20_127 = arith.constant 20 : index
    %354 = vector.load %arg31[%c0_126, %c20_127] : memref<16x32xbf16, #tpu.memory_space<vmem>>, vector<16x4xbf16>
    tpu.vector_store %arg31[%c0_126, %c20_127], %353 {strides = array<i32>} : memref<16x32xbf16, #tpu.memory_space<vmem>>, vector<16x4xbf16>,
    %355 = vector.extract_strided_slice %226 {offsets = [0, 24], sizes = [16, 4], strides = [1, 1]} : vector<16x32xbf16> to vector<16x4xbf16>
    %356 = vector.extract_strided_slice %225 {offsets = [0, 24], sizes = [8, 4], strides = [1, 1]} : vector<8x64xbf16> to vector<8x4xbf16>
    %357 = vector.extract_strided_slice %225 {offsets = [0, 56], sizes = [8, 4], strides = [1, 1]} : vector<8x64xbf16> to vector<8x4xbf16>
    %cst_128 = arith.constant dense<0.000000e+00> : vector<16x8xf32>
    %358 = tpu.matmul %355, %356, %cst_128 {dimension_numbers = #tpu.dot_dimension_numbers<[1], [1], [0], [0], [0, 0, 1, 0], [], []>} : vector<16x4xbf16>, vector<8x4xbf16>, vector<16x8xf32> -> vector<16x8xf32>
    %cst_129 = arith.constant 5.000000e-01 : f32
    %359 = vector.broadcast %cst_129 : f32 to vector<16x8xf32>
    %360 = arith.mulf %358, %359 : vector<16x8xf32>
    %361 = arith.addf %360, %228 : vector<16x8xf32>
    %cst_130 = arith.constant dense<0xFF800000> : vector<16xf32>
    %362 = vector.multi_reduction <maximumf>, %361, %cst_130 [1] : vector<16x8xf32> to vector<16xf32>
    %363 = vector.shape_cast %362 : vector<16xf32> to vector<16x1xf32>
    %364 = vector.broadcast %363 : vector<16x1xf32> to vector<16x8xf32>
    %365 = arith.subf %361, %364 : vector<16x8xf32>
    %366 = math.exp %365 : vector<16x8xf32>
    %cst_131 = arith.constant dense<0.000000e+00> : vector<16xf32>
    %367 = vector.multi_reduction <add>, %366, %cst_131 [1] : vector<16x8xf32> to vector<16xf32>
    %368 = vector.shape_cast %367 : vector<16xf32> to vector<16x1xf32>
    %369 = tpu.reciprocal %368 {approx = true} : vector<16x1xf32> -> vector<16x1xf32>
    %370 = vector.broadcast %369 : vector<16x1xf32> to vector<16x8xf32>
    %371 = arith.mulf %366, %370 : vector<16x8xf32>
    %372 = arith.truncf %371 : vector<16x8xf32> to vector<16x8xbf16>
    %cst_132 = arith.constant dense<0.000000e+00> : vector<16x4xf32>
    %373 = tpu.matmul %372, %357, %cst_132 {dimension_numbers = #tpu.dot_dimension_numbers<[1], [0], [0], [1], [0, 0, 1, 1], [], []>} : vector<16x8xbf16>, vector<8x4xbf16>, vector<16x4xf32> -> vector<16x4xf32>
    %374 = arith.truncf %373 : vector<16x4xf32> to vector<16x4xbf16>
    %c0_133 = arith.constant 0 : index
    %c24_134 = arith.constant 24 : index
    %375 = vector.load %arg31[%c0_133, %c24_134] : memref<16x32xbf16, #tpu.memory_space<vmem>>, vector<16x4xbf16>
    tpu.vector_store %arg31[%c0_133, %c24_134], %374 {strides = array<i32>} : memref<16x32xbf16, #tpu.memory_space<vmem>>, vector<16x4xbf16>,
    %376 = vector.extract_strided_slice %226 {offsets = [0, 28], sizes = [16, 4], strides = [1, 1]} : vector<16x32xbf16> to vector<16x4xbf16>
    %377 = vector.extract_strided_slice %225 {offsets = [0, 28], sizes = [8, 4], strides = [1, 1]} : vector<8x64xbf16> to vector<8x4xbf16>
    %378 = vector.extract_strided_slice %225 {offsets = [0, 60], sizes = [8, 4], strides = [1, 1]} : vector<8x64xbf16> to vector<8x4xbf16>
    %cst_135 = arith.constant dense<0.000000e+00> : vector<16x8xf32>
    %379 = tpu.matmul %376, %377, %cst_135 {dimension_numbers = #tpu.dot_dimension_numbers<[1], [1], [0], [0], [0, 0, 1, 0], [], []>} : vector<16x4xbf16>, vector<8x4xbf16>, vector<16x8xf32> -> vector<16x8xf32>
    %cst_136 = arith.constant 5.000000e-01 : f32
    %380 = vector.broadcast %cst_136 : f32 to vector<16x8xf32>
    %381 = arith.mulf %379, %380 : vector<16x8xf32>
    %382 = arith.addf %381, %228 : vector<16x8xf32>
    %cst_137 = arith.constant dense<0xFF800000> : vector<16xf32>
    %383 = vector.multi_reduction <maximumf>, %382, %cst_137 [1] : vector<16x8xf32> to vector<16xf32>
    %384 = vector.shape_cast %383 : vector<16xf32> to vector<16x1xf32>
    %385 = vector.broadcast %384 : vector<16x1xf32> to vector<16x8xf32>
    %386 = arith.subf %382, %385 : vector<16x8xf32>
    %387 = math.exp %386 : vector<16x8xf32>
    %cst_138 = arith.constant dense<0.000000e+00> : vector<16xf32>
    %388 = vector.multi_reduction <add>, %387, %cst_138 [1] : vector<16x8xf32> to vector<16xf32>
    %389 = vector.shape_cast %388 : vector<16xf32> to vector<16x1xf32>
    %390 = tpu.reciprocal %389 {approx = true} : vector<16x1xf32> -> vector<16x1xf32>
    %391 = vector.broadcast %390 : vector<16x1xf32> to vector<16x8xf32>
    %392 = arith.mulf %387, %391 : vector<16x8xf32>
    %393 = arith.truncf %392 : vector<16x8xf32> to vector<16x8xbf16>
    %cst_139 = arith.constant dense<0.000000e+00> : vector<16x4xf32>
    %394 = tpu.matmul %393, %378, %cst_139 {dimension_numbers = #tpu.dot_dimension_numbers<[1], [0], [0], [1], [0, 0, 1, 1], [], []>} : vector<16x8xbf16>, vector<8x4xbf16>, vector<16x4xf32> -> vector<16x4xf32>
    %395 = arith.truncf %394 : vector<16x4xf32> to vector<16x4xbf16>
    %c0_140 = arith.constant 0 : index
    %c28_141 = arith.constant 28 : index
    %396 = vector.load %arg31[%c0_140, %c28_141] : memref<16x32xbf16, #tpu.memory_space<vmem>>, vector<16x4xbf16>
    tpu.vector_store %arg31[%c0_140, %c28_141], %395 {strides = array<i32>} : memref<16x32xbf16, #tpu.memory_space<vmem>>, vector<16x4xbf16>,
    %c0_142 = arith.constant 0 : index
    %c0_143 = arith.constant 0 : index
    %397 = vector.load %arg31[%c0_142, %c0_143] : memref<16x32xbf16, #tpu.memory_space<vmem>>, vector<16x32xbf16>
    %c0_144 = arith.constant 0 : index
    %c0_145 = arith.constant 0 : index
    %398 = vector.load %arg18[%c0_144, %c0_145] : memref<32x32xbf16, #tpu.memory_space<vmem>>, vector<32x32xbf16>
    %cst_146 = arith.constant dense<0.000000e+00> : vector<16x32xf32>
    %399 = tpu.matmul %397, %398, %cst_146 {dimension_numbers = #tpu.dot_dimension_numbers<[1], [0], [0], [1], [0, 0, 1, 1], [], []>} : vector<16x32xbf16>, vector<32x32xbf16>, vector<16x32xf32> -> vector<16x32xf32>
    %c0_147 = arith.constant 0 : index
    %c0_148 = arith.constant 0 : index
    %400 = vector.load %arg19[%c0_147, %c0_148] : memref<1x32xf32, #tpu.memory_space<vmem>>, vector<1x32xf32>
    %401 = vector.broadcast %400 : vector<1x32xf32> to vector<16x32xf32>
    %402 = arith.addf %399, %401 : vector<16x32xf32>
    %403 = arith.addf %218, %402 : vector<16x32xf32>
    %c0_149 = arith.constant 0 : index
    %c0_150 = arith.constant 0 : index
    %404 = vector.load %arg20[%c0_149, %c0_150] : memref<1x32xf32, #tpu.memory_space<vmem>>, vector<1x32xf32>
    %c0_151 = arith.constant 0 : index
    %c0_152 = arith.constant 0 : index
    %405 = vector.load %arg21[%c0_151, %c0_152] : memref<1x32xf32, #tpu.memory_space<vmem>>, vector<1x32xf32>
    %cst_153 = arith.constant dense<0.000000e+00> : vector<16xf32>
    %406 = vector.multi_reduction <add>, %403, %cst_153 [1] : vector<16x32xf32> to vector<16xf32>
    %407 = vector.shape_cast %406 : vector<16xf32> to vector<16x1xf32>
    %cst_154 = arith.constant 3.200000e+01 : f32
    %408 = vector.broadcast %cst_154 : f32 to vector<16x1xf32>
    %409 = arith.divf %407, %408 : vector<16x1xf32>
    %410 = vector.broadcast %409 : vector<16x1xf32> to vector<16x32xf32>
    %411 = arith.subf %403, %410 : vector<16x32xf32>
    %412 = arith.mulf %411, %411 : vector<16x32xf32>
    %cst_155 = arith.constant dense<0.000000e+00> : vector<16xf32>
    %413 = vector.multi_reduction <add>, %412, %cst_155 [1] : vector<16x32xf32> to vector<16xf32>
    %414 = vector.shape_cast %413 : vector<16xf32> to vector<16x1xf32>
    %cst_156 = arith.constant 0.0322580636 : f32
    %415 = vector.broadcast %cst_156 : f32 to vector<16x1xf32>
    %416 = arith.mulf %414, %415 : vector<16x1xf32>
    %417 = math.sqrt %416 : vector<16x1xf32>
    %cst_157 = arith.constant 9.99999997E-7 : f32
    %418 = vector.broadcast %cst_157 : f32 to vector<16x1xf32>
    %419 = arith.addf %417, %418 : vector<16x1xf32>
    %420 = vector.broadcast %419 : vector<16x1xf32> to vector<16x32xf32>
    %421 = arith.divf %411, %420 : vector<16x32xf32>
    %422 = vector.broadcast %404 : vector<1x32xf32> to vector<16x32xf32>
    %423 = arith.mulf %422, %421 : vector<16x32xf32>
    %424 = vector.broadcast %405 : vector<1x32xf32> to vector<16x32xf32>
    %425 = arith.addf %423, %424 : vector<16x32xf32>
    %426 = arith.truncf %425 : vector<16x32xf32> to vector<16x32xbf16>
    %c0_158 = arith.constant 0 : index
    %c0_159 = arith.constant 0 : index
    %427 = vector.load %arg22[%c0_158, %c0_159] : memref<32x128xbf16, #tpu.memory_space<vmem>>, vector<32x128xbf16>
    %cst_160 = arith.constant dense<0.000000e+00> : vector<16x128xf32>
    %428 = tpu.matmul %426, %427, %cst_160 {dimension_numbers = #tpu.dot_dimension_numbers<[1], [0], [0], [1], [0, 0, 1, 1], [], []>} : vector<16x32xbf16>, vector<32x128xbf16>, vector<16x128xf32> -> vector<16x128xf32>
    %c0_161 = arith.constant 0 : index
    %c0_162 = arith.constant 0 : index
    %429 = vector.load %arg23[%c0_161, %c0_162] : memref<1x128xf32, #tpu.memory_space<vmem>>, vector<1x128xf32>
    %430 = vector.broadcast %429 : vector<1x128xf32> to vector<16x128xf32>
    %431 = arith.addf %428, %430 : vector<16x128xf32>
    %cst_163 = arith.constant 0.000000e+00 : f32
    %432 = vector.broadcast %cst_163 : f32 to vector<16x128xf32>
    %433 = arith.maximumf %431, %432 : vector<16x128xf32>
    %434 = arith.truncf %433 : vector<16x128xf32> to vector<16x128xbf16>
    %c0_164 = arith.constant 0 : index
    %c0_165 = arith.constant 0 : index
    %435 = vector.load %arg24[%c0_164, %c0_165] : memref<128x32xbf16, #tpu.memory_space<vmem>>, vector<128x32xbf16>
    %cst_166 = arith.constant dense<0.000000e+00> : vector<16x32xf32>
    %436 = tpu.matmul %434, %435, %cst_166 {dimension_numbers = #tpu.dot_dimension_numbers<[1], [0], [0], [1], [0, 0, 1, 1], [], []>} : vector<16x128xbf16>, vector<128x32xbf16>, vector<16x32xf32> -> vector<16x32xf32>
    %c0_167 = arith.constant 0 : index
    %c0_168 = arith.constant 0 : index
    %437 = vector.load %arg25[%c0_167, %c0_168] : memref<1x32xf32, #tpu.memory_space<vmem>>, vector<1x32xf32>
    %438 = vector.broadcast %437 : vector<1x32xf32> to vector<16x32xf32>
    %439 = arith.addf %436, %438 : vector<16x32xf32>
    %440 = arith.addf %425, %439 : vector<16x32xf32>
    %c0_169 = arith.constant 0 : index
    %c0_170 = arith.constant 0 : index
    %441 = vector.load %arg26[%c0_169, %c0_170] : memref<1x32xf32, #tpu.memory_space<vmem>>, vector<1x32xf32>
    %c0_171 = arith.constant 0 : index
    %c0_172 = arith.constant 0 : index
    %442 = vector.load %arg27[%c0_171, %c0_172] : memref<1x32xf32, #tpu.memory_space<vmem>>, vector<1x32xf32>
    %cst_173 = arith.constant dense<0.000000e+00> : vector<16xf32>
    %443 = vector.multi_reduction <add>, %440, %cst_173 [1] : vector<16x32xf32> to vector<16xf32>
    %444 = vector.shape_cast %443 : vector<16xf32> to vector<16x1xf32>
    %cst_174 = arith.constant 3.200000e+01 : f32
    %445 = vector.broadcast %cst_174 : f32 to vector<16x1xf32>
    %446 = arith.divf %444, %445 : vector<16x1xf32>
    %447 = vector.broadcast %446 : vector<16x1xf32> to vector<16x32xf32>
    %448 = arith.subf %440, %447 : vector<16x32xf32>
    %449 = arith.mulf %448, %448 : vector<16x32xf32>
    %cst_175 = arith.constant dense<0.000000e+00> : vector<16xf32>
    %450 = vector.multi_reduction <add>, %449, %cst_175 [1] : vector<16x32xf32> to vector<16xf32>
    %451 = vector.shape_cast %450 : vector<16xf32> to vector<16x1xf32>
    %cst_176 = arith.constant 0.0322580636 : f32
    %452 = vector.broadcast %cst_176 : f32 to vector<16x1xf32>
    %453 = arith.mulf %451, %452 : vector<16x1xf32>
    %454 = math.sqrt %453 : vector<16x1xf32>
    %cst_177 = arith.constant 9.99999997E-7 : f32
    %455 = vector.broadcast %cst_177 : f32 to vector<16x1xf32>
    %456 = arith.addf %454, %455 : vector<16x1xf32>
    %457 = vector.broadcast %456 : vector<16x1xf32> to vector<16x32xf32>
    %458 = arith.divf %448, %457 : vector<16x32xf32>
    %459 = vector.broadcast %441 : vector<1x32xf32> to vector<16x32xf32>
    %460 = arith.mulf %459, %458 : vector<16x32xf32>
    %461 = vector.broadcast %442 : vector<1x32xf32> to vector<16x32xf32>
    %462 = arith.addf %460, %461 : vector<16x32xf32>
    %c0_178 = arith.constant 0 : index
    %c0_179 = arith.constant 0 : index
    %c0_180 = arith.constant 0 : index
    %463 = vector.load %arg28[%c0_178, %c0_179, %c0_180] : memref<1x16x32xf32, #tpu.memory_space<vmem>>, vector<1x16x32xf32>
    %464 = vector.shape_cast %463 : vector<1x16x32xf32> to vector<16x32xf32>
    %465 = vector.shape_cast %462 : vector<16x32xf32> to vector<1x16x32xf32>
    tpu.vector_store %arg28[%c0_178, %c0_179, %c0_180], %465 {strides = array<i32>} : memref<1x16x32xf32, #tpu.memory_space<vmem>>, vector<1x16x32xf32>,
    return
  }
  func.func @transform_0(%arg0: i32, %arg1: i32) -> (i32, i32, i32) {
    %c0_i32 = arith.constant 0 : i32
    %c0_i32_0 = arith.constant 0 : i32
    %c0_i32_1 = arith.constant 0 : i32
    return %arg0, %c0_i32, %c0_i32_0 : i32, i32, i32
  }
  func.func @transform_1(%arg0: i32, %arg1: i32) -> (i32, i32, i32) {
    %c0_i32 = arith.constant 0 : i32
    %c0_i32_0 = arith.constant 0 : i32
    %c0_i32_1 = arith.constant 0 : i32
    return %arg0, %c0_i32, %c0_i32_0 : i32, i32, i32
  }
  func.func @transform_2(%arg0: i32, %arg1: i32) -> (i32, i32, i32) {
    %c0_i32 = arith.constant 0 : i32
    %c0_i32_0 = arith.constant 0 : i32
    %c0_i32_1 = arith.constant 0 : i32
    return %arg0, %c0_i32, %c0_i32_0 : i32, i32, i32
  }
  func.func @transform_3(%arg0: i32, %arg1: i32) -> (i32, i32, i32) {
    %c0_i32 = arith.constant 0 : i32
    %c0_i32_0 = arith.constant 0 : i32
    %c0_i32_1 = arith.constant 0 : i32
    return %arg0, %c0_i32, %c0_i32_0 : i32, i32, i32
  }
  func.func @transform_4(%arg0: i32, %arg1: i32) -> (i32, i32) {
    %c0_i32 = arith.constant 0 : i32
    %c0_i32_0 = arith.constant 0 : i32
    %c0_i32_1 = arith.constant 0 : i32
    return %c0_i32, %c0_i32_0 : i32, i32
  }
  func.func @transform_5(%arg0: i32, %arg1: i32) -> (i32, i32) {
    %c0_i32 = arith.constant 0 : i32
    %c0_i32_0 = arith.constant 0 : i32
    %c0_i32_1 = arith.constant 0 : i32
    return %c0_i32, %c0_i32_0 : i32, i32
  }
  func.func @transform_6(%arg0: i32, %arg1: i32) -> (i32, i32) {
    %c0_i32 = arith.constant 0 : i32
    %c0_i32_0 = arith.constant 0 : i32
    %c0_i32_1 = arith.constant 0 : i32
    return %c0_i32, %c0_i32_0 : i32, i32
  }
  func.func @transform_7(%arg0: i32, %arg1: i32) -> (i32, i32) {
    %c0_i32 = arith.constant 0 : i32
    %c0_i32_0 = arith.constant 0 : i32
    %c0_i32_1 = arith.constant 0 : i32
    return %c0_i32, %c0_i32_0 : i32, i32
  }
  func.func @transform_8(%arg0: i32, %arg1: i32) -> (i32, i32) {
    %c0_i32 = arith.constant 0 : i32
    %c0_i32_0 = arith.constant 0 : i32
    %c0_i32_1 = arith.constant 0 : i32
    return %c0_i32, %c0_i32_0 : i32, i32
  }
  func.func @transform_9(%arg0: i32, %arg1: i32) -> (i32, i32) {
    %c0_i32 = arith.constant 0 : i32
    %c0_i32_0 = arith.constant 0 : i32
    %c0_i32_1 = arith.constant 0 : i32
    return %c0_i32, %c0_i32_0 : i32, i32
  }
  func.func @transform_10(%arg0: i32, %arg1: i32) -> (i32, i32) {
    %c0_i32 = arith.constant 0 : i32
    %c0_i32_0 = arith.constant 0 : i32
    %c0_i32_1 = arith.constant 0 : i32
    return %c0_i32, %c0_i32_0 : i32, i32
  }
  func.func @transform_11(%arg0: i32, %arg1: i32) -> (i32, i32) {
    %c0_i32 = arith.constant 0 : i32
    %c0_i32_0 = arith.constant 0 : i32
    %c0_i32_1 = arith.constant 0 : i32
    return %c0_i32, %c0_i32_0 : i32, i32
  }
  func.func @transform_12(%arg0: i32, %arg1: i32) -> (i32, i32) {
    %c0_i32 = arith.constant 0 : i32
    %c0_i32_0 = arith.constant 0 : i32
    %c0_i32_1 = arith.constant 0 : i32
    return %c0_i32, %c0_i32_0 : i32, i32
  }
  func.func @transform_13(%arg0: i32, %arg1: i32) -> (i32, i32) {
    %c0_i32 = arith.constant 0 : i32
    %c0_i32_0 = arith.constant 0 : i32
    %c0_i32_1 = arith.constant 0 : i32
    return %c0_i32, %c0_i32_0 : i32, i32
  }
  func.func @transform_14(%arg0: i32, %arg1: i32) -> (i32, i32) {
    %c0_i32 = arith.constant 0 : i32
    %c0_i32_0 = arith.constant 0 : i32
    %c0_i32_1 = arith.constant 0 : i32
    return %c0_i32, %c0_i32_0 : i32, i32
  }
  func.func @transform_15(%arg0: i32, %arg1: i32) -> (i32, i32) {
    %c0_i32 = arith.constant 0 : i32
    %c0_i32_0 = arith.constant 0 : i32
    %c0_i32_1 = arith.constant 0 : i32
    return %c0_i32, %c0_i32_0 : i32, i32
  }
  func.func @transform_16(%arg0: i32, %arg1: i32) -> (i32, i32) {
    %c0_i32 = arith.constant 0 : i32
    %c0_i32_0 = arith.constant 0 : i32
    %c0_i32_1 = arith.constant 0 : i32
    return %c0_i32, %c0_i32_0 : i32, i32
  }
  func.func @transform_17(%arg0: i32, %arg1: i32) -> (i32, i32) {
    %c0_i32 = arith.constant 0 : i32
    %c0_i32_0 = arith.constant 0 : i32
    %c0_i32_1 = arith.constant 0 : i32
    return %c0_i32, %c0_i32_0 : i32, i32
  }
  func.func @transform_18(%arg0: i32, %arg1: i32) -> (i32, i32) {
    %c0_i32 = arith.constant 0 : i32
    %c0_i32_0 = arith.constant 0 : i32
    %c0_i32_1 = arith.constant 0 : i32
    return %c0_i32, %c0_i32_0 : i32, i32
  }
  func.func @transform_19(%arg0: i32, %arg1: i32) -> (i32, i32) {
    %c0_i32 = arith.constant 0 : i32
    %c0_i32_0 = arith.constant 0 : i32
    %c0_i32_1 = arith.constant 0 : i32
    return %c0_i32, %c0_i32_0 : i32, i32
  }
  func.func @transform_20(%arg0: i32, %arg1: i32) -> (i32, i32) {
    %c0_i32 = arith.constant 0 : i32
    %c0_i32_0 = arith.constant 0 : i32
    %c0_i32_1 = arith.constant 0 : i32
    return %c0_i32, %c0_i32_0 : i32, i32
  }
  func.func @transform_21(%arg0: i32, %arg1: i32) -> (i32, i32) {
    %c0_i32 = arith.constant 0 : i32
    %c0_i32_0 = arith.constant 0 : i32
    %c0_i32_1 = arith.constant 0 : i32
    return %c0_i32, %c0_i32_0 : i32, i32
  }
  func.func @transform_22(%arg0: i32, %arg1: i32) -> (i32, i32) {
    %c0_i32 = arith.constant 0 : i32
    %c0_i32_0 = arith.constant 0 : i32
    %c0_i32_1 = arith.constant 0 : i32
    return %c0_i32, %c0_i32_0 : i32, i32
  }
  func.func @transform_23(%arg0: i32, %arg1: i32) -> (i32, i32) {
    %c0_i32 = arith.constant 0 : i32
    %c0_i32_0 = arith.constant 0 : i32
    %c0_i32_1 = arith.constant 0 : i32
    return %c0_i32, %c0_i32_0 : i32, i32
  }
  func.func @transform_24(%arg0: i32, %arg1: i32) -> (i32, i32) {
    %c0_i32 = arith.constant 0 : i32
    %c0_i32_0 = arith.constant 0 : i32
    %c0_i32_1 = arith.constant 0 : i32
    return %c0_i32, %c0_i32_0 : i32, i32
  }
  func.func @transform_25(%arg0: i32, %arg1: i32) -> (i32, i32) {
    %c0_i32 = arith.constant 0 : i32
    %c0_i32_0 = arith.constant 0 : i32
    %c0_i32_1 = arith.constant 0 : i32
    return %c0_i32, %c0_i32_0 : i32, i32
  }
  func.func @transform_26(%arg0: i32, %arg1: i32) -> (i32, i32, i32) {
    %c0_i32 = arith.constant 0 : i32
    %c0_i32_0 = arith.constant 0 : i32
    return %arg0, %arg1, %c0_i32 : i32, i32, i32
  }
}

</mosaic_0001>

<llo_original>
// kernel: sga_forward.1
$region0: #{sga_forward.1}
  #allocation0 [shape = 'u32[]', space=smem, size = 0x4, offset = 0x4, fixed_abs, tag = 'smem constant byte address 0x4 - core index']
  #allocation1 [shape = 'u32[144,128]{1,0:T(1,128)}', space=vmem, size = 0x12000, scoped, tag = 'internal scratch']
  #allocation2 [shape = 'bf16[16,64]{1,0:T(16,128)(2,1)}', space=vmem, size = 0x1000, scoped, tag = 'scratch operand']
  #allocation3 [shape = 'bf16[8,64]{1,0:T(8,128)(2,1)}', space=vmem, size = 0x800, scoped, tag = 'scratch operand']
  #allocation4 [shape = 'bf16[16,32]{1,0:T(16,128)(2,1)}', space=vmem, size = 0x1000, scoped, tag = 'scratch operand']
  %s0 = inlined_call_operand.vmem [shape: f32[2,16,32], index: 0, kind: input, shape index: {}]
  %s1 = inlined_call_operand.vmem [shape: f32[2,8,48], index: 1, kind: input, shape index: {}]
  %s2 = inlined_call_operand.vmem [shape: f32[2,1,16], index: 2, kind: input, shape index: {}]
  %s3 = inlined_call_operand.vmem [shape: f32[2,1,8], index: 3, kind: input, shape index: {}]
  %s4 = inlined_call_operand.vmem [shape: bf16[32,32], index: 4, kind: input, shape index: {}]
  %s5 = inlined_call_operand.vmem [shape: f32[1,32], index: 5, kind: input, shape index: {}]
  %s6 = inlined_call_operand.vmem [shape: bf16[32,64], index: 6, kind: input, shape index: {}]
  %s7 = inlined_call_operand.vmem [shape: f32[1,64], index: 7, kind: input, shape index: {}]
  %s8 = inlined_call_operand.vmem [shape: bf16[32,32], index: 8, kind: input, shape index: {}]
  %s9 = inlined_call_operand.vmem [shape: f32[1,32], index: 9, kind: input, shape index: {}]
  %s10 = inlined_call_operand.vmem [shape: f32[1,32], index: 10, kind: input, shape index: {}]
  %s11 = inlined_call_operand.vmem [shape: f32[1,32], index: 11, kind: input, shape index: {}]
  %s12 = inlined_call_operand.vmem [shape: bf16[32,32], index: 12, kind: input, shape index: {}]
  %s13 = inlined_call_operand.vmem [shape: f32[1,32], index: 13, kind: input, shape index: {}]
  %s14 = inlined_call_operand.vmem [shape: bf16[48,64], index: 14, kind: input, shape index: {}]
  %s15 = inlined_call_operand.vmem [shape: f32[1,64], index: 15, kind: input, shape index: {}]
  %s16 = inlined_call_operand.vmem [shape: bf16[32,32], index: 16, kind: input, shape index: {}]
  %s17 = inlined_call_operand.vmem [shape: f32[1,32], index: 17, kind: input, shape index: {}]
  %s18 = inlined_call_operand.vmem [shape: f32[1,32], index: 18, kind: input, shape index: {}]
  %s19 = inlined_call_operand.vmem [shape: f32[1,32], index: 19, kind: input, shape index: {}]
  %s20 = inlined_call_operand.vmem [shape: bf16[32,128], index: 20, kind: input, shape index: {}]
  %s21 = inlined_call_operand.vmem [shape: f32[1,128], index: 21, kind: input, shape index: {}]
  %s22 = inlined_call_operand.vmem [shape: bf16[128,32], index: 22, kind: input, shape index: {}]
  %s23 = inlined_call_operand.vmem [shape: f32[1,32], index: 23, kind: input, shape index: {}]
  %s24 = inlined_call_operand.vmem [shape: f32[1,32], index: 24, kind: input, shape index: {}]
  %s25 = inlined_call_operand.vmem [shape: f32[1,32], index: 25, kind: input, shape index: {}]
  %s26 = inlined_call_operand.hbm [shape: f32[2,16,32], index: 26, kind: output, shape index: {}]
  %s27 = sld [smem:[#allocation0]]
  $region141: #{sga_forward.1} parent=0
    _
  %s29 = ssub.s32 1, %s27
  %s30 = scalar_select 0, %s29, %s27
  $region1: #{sga_forward.1} parent=0
    #allocation5 [shape = 'u8[16384]{0}', space=vmem, size = 0x4000, scoped, tag = 'output window, operand 0']
    #allocation6 [shape = 's32[2]{0}', space=sflag, size = 0x8, scoped, tag = 'scoped memory for sga_forward.1']
    %31 = vsyncpa [#allocation6], 0
    %s32 = scalar_lea.sflag [#allocation6], 1
    %33 = vsyncpa %s32, 0
    loop: start=0, step=1, limit=4
    $region2: #{sga_forward.1} parent=1 // loop_pre_header
      _
    $region3: #{sga_forward.1} parent=1 // loop_header
      %s35 = sphi 0, %s39
      %p36 = scmp.ge.s32.totalorder %s35, 4
      %s42 = sphi 0, %s54
      %s43 = sphi 0, %s50
      %s44 = sphi 0, %s42
      %s45 = sphi 0, %s43
      %s46 = sphi 0, %s44
      %s47 = sphi 0, %s45
      %s57 = sphi 0, %s59
      %s60 = sphi 0, %s57
      %s61 = sphi 0, %s60
      %s77 = sphi 0, %s61
      %s83 = sphi 0, %s85
      %s86 = sphi 0, %s83
      %s87 = sphi 0, %s86
      %s103 = sphi 0, %s87
      %s109 = sphi 0, %s111
      %s112 = sphi 0, %s109
      %s113 = sphi 0, %s112
      %s129 = sphi 0, %s113
      %s135 = sphi 0, %s137
      %s138 = sphi 0, %s135
      %s139 = sphi 0, %s138
      %s155 = sphi 0, %s139
      %s159 = sphi 0, %s159
      %s161 = sphi 0, %s159
      %s162 = sphi 0, %s161
      %s176 = sphi 0, %s162
      %s180 = sphi 0, %s180
      %s182 = sphi 0, %s180
      %s183 = sphi 0, %s182
      %s197 = sphi 0, %s183
      %s201 = sphi 0, %s201
      %s203 = sphi 0, %s201
      %s204 = sphi 0, %s203
      %s218 = sphi 0, %s204
      %s222 = sphi 0, %s222
      %s224 = sphi 0, %s222
      %s225 = sphi 0, %s224
      %s239 = sphi 0, %s225
      %s243 = sphi 0, %s243
      %s245 = sphi 0, %s243
      %s246 = sphi 0, %s245
      %s260 = sphi 0, %s246
      %s264 = sphi 0, %s264
      %s266 = sphi 0, %s264
      %s267 = sphi 0, %s266
      %s281 = sphi 0, %s267
      %s285 = sphi 0, %s285
      %s287 = sphi 0, %s285
      %s288 = sphi 0, %s287
      %s302 = sphi 0, %s288
      %s306 = sphi 0, %s306
      %s308 = sphi 0, %s306
      %s309 = sphi 0, %s308
      %s323 = sphi 0, %s309
      %s327 = sphi 0, %s327
      %s329 = sphi 0, %s327
      %s330 = sphi 0, %s329
      %s344 = sphi 0, %s330
      %s348 = sphi 0, %s348
      %s350 = sphi 0, %s348
      %s351 = sphi 0, %s350
      %s365 = sphi 0, %s351
      %s369 = sphi 0, %s369
      %s371 = sphi 0, %s369
      %s372 = sphi 0, %s371
      %s386 = sphi 0, %s372
      %s390 = sphi 0, %s390
      %s392 = sphi 0, %s390
      %s393 = sphi 0, %s392
      %s407 = sphi 0, %s393
      %s411 = sphi 0, %s411
      %s413 = sphi 0, %s411
      %s414 = sphi 0, %s413
      %s428 = sphi 0, %s414
      %s432 = sphi 0, %s432
      %s434 = sphi 0, %s432
      %s435 = sphi 0, %s434
      %s449 = sphi 0, %s435
      %s453 = sphi 0, %s453
      %s455 = sphi 0, %s453
      %s456 = sphi 0, %s455
      %s470 = sphi 0, %s456
      %s474 = sphi 0, %s474
      %s476 = sphi 0, %s474
      %s477 = sphi 0, %s476
      %s491 = sphi 0, %s477
      %s495 = sphi 0, %s495
      %s497 = sphi 0, %s495
      %s498 = sphi 0, %s497
      %s512 = sphi 0, %s498
      %s516 = sphi 0, %s516
      %s518 = sphi 0, %s516
      %s519 = sphi 0, %s518
      %s533 = sphi 0, %s519
      %s537 = sphi 0, %s537
      %s539 = sphi 0, %s537
      %s540 = sphi 0, %s539
      %s554 = sphi 0, %s540
      %s558 = sphi 0, %s558
      %s560 = sphi 0, %s558
      %s561 = sphi 0, %s560
      %s575 = sphi 0, %s561
      %s579 = sphi 0, %s579
      %s581 = sphi 0, %s579
      %s582 = sphi 0, %s581
      %s596 = sphi 0, %s582
      %s600 = sphi 0, %s600
      %s602 = sphi 0, %s600
      %s603 = sphi 0, %s602
      %s617 = sphi 0, %s603
      %s625 = sphi 0, %s627
      %s628 = sphi 0, %s625
      %s629 = sphi 0, %s628
      %s645 = sphi 0, %s629
    $region4: #{sga_forward.1} parent=1 // loop_header_branch
      %38 = sbr.rel (%p36) target = $region8
    $region5: #{sga_forward.1} parent=1 // loop_body
      %s40 = ssub.s32 %s35, 1
      %s41 = ssub.s32 %s35, 2
      %s48 = sadd.s32 1, %s43
      %p49 = scmp.ge.s32.totalorder %s48, 1
      %s50 = scalar_select %p49, 0, %s48
      %s51 = sadd.s32 1, %s42
      %s52 = scalar_select %p49, %s51, %s42
      %p53 = scmp.ge.s32.totalorder %s52, 2
      %s54 = scalar_select %p53, 0, %s52
      %s55 = ssub.s32 %s42, %s54
      %p56 = scmp.eq.s32.totalorder %s55, 0
      %s58 = sadd.s32 %s57, 1
      %s59 = scalar_select %p56, %s57, %s58
      %p62 = pneg %p56
      %p63 = scmp.eq.s32.totalorder %s35, 1
      %p64 = por %p62, %p63
      %p65 = scmp.ne.s32.totalorder %s57, %s60
      %p66 = scmp.eq.s32.totalorder %s35, 0
      %p67 = por %p65, %p66
      %p68 = scmp.ne.s32.totalorder %s57, %s60
      %p69 = scmp.eq.s32.totalorder %s40, 1
      %p70 = por %p68, %p69
      %p71 = scmp.ne.s32.totalorder %s60, %s61
      %p72 = scmp.eq.s32.totalorder %s40, 0
      %p73 = por %p71, %p72
      %p74 = scmp.ne.s32.totalorder %s60, %s61
      %p75 = scmp.eq.s32.totalorder %s41, 1
      %p76 = por %p74, %p75
      %p78 = scmp.ne.s32.totalorder %s61, %s77
      %p79 = scmp.eq.s32.totalorder %s41, 0
      %p80 = por %p78, %p79
      %s81 = ssub.s32 %s42, %s54
      %p82 = scmp.eq.s32.totalorder %s81, 0
      %s84 = sadd.s32 %s83, 1
      %s85 = scalar_select %p82, %s83, %s84
      %p88 = pneg %p82
      %p89 = scmp.eq.s32.totalorder %s35, 1
      %p90 = por %p88, %p89
      %p91 = scmp.ne.s32.totalorder %s83, %s86
      %p92 = scmp.eq.s32.totalorder %s35, 0
      %p93 = por %p91, %p92
      %p94 = scmp.ne.s32.totalorder %s83, %s86
      %p95 = scmp.eq.s32.totalorder %s40, 1
      %p96 = por %p94, %p95
      %p97 = scmp.ne.s32.totalorder %s86, %s87
      %p98 = scmp.eq.s32.totalorder %s40, 0
      %p99 = por %p97, %p98
      %p100 = scmp.ne.s32.totalorder %s86, %s87
      %p101 = scmp.eq.s32.totalorder %s41, 1
      %p102 = por %p100, %p101
      %p104 = scmp.ne.s32.totalorder %s87, %s103
      %p105 = scmp.eq.s32.totalorder %s41, 0
      %p106 = por %p104, %p105
      %s107 = ssub.s32 %s42, %s54
      %p108 = scmp.eq.s32.totalorder %s107, 0
      %s110 = sadd.s32 %s109, 1
      %s111 = scalar_select %p108, %s109, %s110
      %p114 = pneg %p108
      %p115 = scmp.eq.s32.totalorder %s35, 1
      %p116 = por %p114, %p115
      %p117 = scmp.ne.s32.totalorder %s109, %s112
      %p118 = scmp.eq.s32.totalorder %s35, 0
      %p119 = por %p117, %p118
      %p120 = scmp.ne.s32.totalorder %s109, %s112
      %p121 = scmp.eq.s32.totalorder %s40, 1
      %p122 = por %p120, %p121
      %p123 = scmp.ne.s32.totalorder %s112, %s113
      %p124 = scmp.eq.s32.totalorder %s40, 0
      %p125 = por %p123, %p124
      %p126 = scmp.ne.s32.totalorder %s112, %s113
      %p127 = scmp.eq.s32.totalorder %s41, 1
      %p128 = por %p126, %p127
      %p130 = scmp.ne.s32.totalorder %s113, %s129
      %p131 = scmp.eq.s32.totalorder %s41, 0
      %p132 = por %p130, %p131
      %s133 = ssub.s32 %s42, %s54
      %p134 = scmp.eq.s32.totalorder %s133, 0
      %s136 = sadd.s32 %s135, 1
      %s137 = scalar_select %p134, %s135, %s136
      %p140 = pneg %p134
      %p141 = scmp.eq.s32.totalorder %s35, 1
      %p142 = por %p140, %p141
      %p143 = scmp.ne.s32.totalorder %s135, %s138
      %p144 = scmp.eq.s32.totalorder %s35, 0
      %p145 = por %p143, %p144
      %p146 = scmp.ne.s32.totalorder %s135, %s138
      %p147 = scmp.eq.s32.totalorder %s40, 1
      %p148 = por %p146, %p147
      %p149 = scmp.ne.s32.totalorder %s138, %s139
      %p150 = scmp.eq.s32.totalorder %s40, 0
      %p151 = por %p149, %p150
      %p152 = scmp.ne.s32.totalorder %s138, %s139
      %p153 = scmp.eq.s32.totalorder %s41, 1
      %p154 = por %p152, %p153
      %p156 = scmp.ne.s32.totalorder %s139, %s155
      %p157 = scmp.eq.s32.totalorder %s41, 0
      %p158 = por %p156, %p157
      %s160 = sadd.s32 %s159, 1
      %p163 = scmp.eq.s32.totalorder %s35, 1
      %p164 = scmp.ne.s32.totalorder %s159, %s161
      %p165 = scmp.eq.s32.totalorder %s35, 0
      %p166 = por %p164, %p165
      %p167 = scmp.ne.s32.totalorder %s159, %s161
      %p168 = scmp.eq.s32.totalorder %s40, 1
      %p169 = por %p167, %p168
      %p170 = scmp.ne.s32.totalorder %s161, %s162
      %p171 = scmp.eq.s32.totalorder %s40, 0
      %p172 = por %p170, %p171
      %p173 = scmp.ne.s32.totalorder %s161, %s162
      %p174 = scmp.eq.s32.totalorder %s41, 1
      %p175 = por %p173, %p174
      %p177 = scmp.ne.s32.totalorder %s162, %s176
      %p178 = scmp.eq.s32.totalorder %s41, 0
      %p179 = por %p177, %p178
      %s181 = sadd.s32 %s180, 1
      %p184 = scmp.eq.s32.totalorder %s35, 1
      %p185 = scmp.ne.s32.totalorder %s180, %s182
      %p186 = scmp.eq.s32.totalorder %s35, 0
      %p187 = por %p185, %p186
      %p188 = scmp.ne.s32.totalorder %s180, %s182
      %p189 = scmp.eq.s32.totalorder %s40, 1
      %p190 = por %p188, %p189
      %p191 = scmp.ne.s32.totalorder %s182, %s183
      %p192 = scmp.eq.s32.totalorder %s40, 0
      %p193 = por %p191, %p192
      %p194 = scmp.ne.s32.totalorder %s182, %s183
      %p195 = scmp.eq.s32.totalorder %s41, 1
      %p196 = por %p194, %p195
      %p198 = scmp.ne.s32.totalorder %s183, %s197
      %p199 = scmp.eq.s32.totalorder %s41, 0
      %p200 = por %p198, %p199
      %s202 = sadd.s32 %s201, 1
      %p205 = scmp.eq.s32.totalorder %s35, 1
      %p206 = scmp.ne.s32.totalorder %s201, %s203
      %p207 = scmp.eq.s32.totalorder %s35, 0
      %p208 = por %p206, %p207
      %p209 = scmp.ne.s32.totalorder %s201, %s203
      %p210 = scmp.eq.s32.totalorder %s40, 1
      %p211 = por %p209, %p210
      %p212 = scmp.ne.s32.totalorder %s203, %s204
      %p213 = scmp.eq.s32.totalorder %s40, 0
      %p214 = por %p212, %p213
      %p215 = scmp.ne.s32.totalorder %s203, %s204
      %p216 = scmp.eq.s32.totalorder %s41, 1
      %p217 = por %p215, %p216
      %p219 = scmp.ne.s32.totalorder %s204, %s218
      %p220 = scmp.eq.s32.totalorder %s41, 0
      %p221 = por %p219, %p220
      %s223 = sadd.s32 %s222, 1
      %p226 = scmp.eq.s32.totalorder %s35, 1
      %p227 = scmp.ne.s32.totalorder %s222, %s224
      %p228 = scmp.eq.s32.totalorder %s35, 0
      %p229 = por %p227, %p228
      %p230 = scmp.ne.s32.totalorder %s222, %s224
      %p231 = scmp.eq.s32.totalorder %s40, 1
      %p232 = por %p230, %p231
      %p233 = scmp.ne.s32.totalorder %s224, %s225
      %p234 = scmp.eq.s32.totalorder %s40, 0
      %p235 = por %p233, %p234
      %p236 = scmp.ne.s32.totalorder %s224, %s225
      %p237 = scmp.eq.s32.totalorder %s41, 1
      %p238 = por %p236, %p237
      %p240 = scmp.ne.s32.totalorder %s225, %s239
      %p241 = scmp.eq.s32.totalorder %s41, 0
      %p242 = por %p240, %p241
      %s244 = sadd.s32 %s243, 1
      %p247 = scmp.eq.s32.totalorder %s35, 1
      %p248 = scmp.ne.s32.totalorder %s243, %s245
      %p249 = scmp.eq.s32.totalorder %s35, 0
      %p250 = por %p248, %p249
      %p251 = scmp.ne.s32.totalorder %s243, %s245
      %p252 = scmp.eq.s32.totalorder %s40, 1
      %p253 = por %p251, %p252
      %p254 = scmp.ne.s32.totalorder %s245, %s246
      %p255 = scmp.eq.s32.totalorder %s40, 0
      %p256 = por %p254, %p255
      %p257 = scmp.ne.s32.totalorder %s245, %s246
      %p258 = scmp.eq.s32.totalorder %s41, 1
      %p259 = por %p257, %p258
      %p261 = scmp.ne.s32.totalorder %s246, %s260
      %p262 = scmp.eq.s32.totalorder %s41, 0
      %p263 = por %p261, %p262
      %s265 = sadd.s32 %s264, 1
      %p268 = scmp.eq.s32.totalorder %s35, 1
      %p269 = scmp.ne.s32.totalorder %s264, %s266
      %p270 = scmp.eq.s32.totalorder %s35, 0
      %p271 = por %p269, %p270
      %p272 = scmp.ne.s32.totalorder %s264, %s266
      %p273 = scmp.eq.s32.totalorder %s40, 1
      %p274 = por %p272, %p273
      %p275 = scmp.ne.s32.totalorder %s266, %s267
      %p276 = scmp.eq.s32.totalorder %s40, 0
      %p277 = por %p275, %p276
      %p278 = scmp.ne.s32.totalorder %s266, %s267
      %p279 = scmp.eq.s32.totalorder %s41, 1
      %p280 = por %p278, %p279
      %p282 = scmp.ne.s32.totalorder %s267, %s281
      %p283 = scmp.eq.s32.totalorder %s41, 0
      %p284 = por %p282, %p283
      %s286 = sadd.s32 %s285, 1
      %p289 = scmp.eq.s32.totalorder %s35, 1
      %p290 = scmp.ne.s32.totalorder %s285, %s287
      %p291 = scmp.eq.s32.totalorder %s35, 0
      %p292 = por %p290, %p291
      %p293 = scmp.ne.s32.totalorder %s285, %s287
      %p294 = scmp.eq.s32.totalorder %s40, 1
      %p295 = por %p293, %p294
      %p296 = scmp.ne.s32.totalorder %s287, %s288
      %p297 = scmp.eq.s32.totalorder %s40, 0
      %p298 = por %p296, %p297
      %p299 = scmp.ne.s32.totalorder %s287, %s288
      %p300 = scmp.eq.s32.totalorder %s41, 1
      %p301 = por %p299, %p300
      %p303 = scmp.ne.s32.totalorder %s288, %s302
      %p304 = scmp.eq.s32.totalorder %s41, 0
      %p305 = por %p303, %p304
      %s307 = sadd.s32 %s306, 1
      %p310 = scmp.eq.s32.totalorder %s35, 1
      %p311 = scmp.ne.s32.totalorder %s306, %s308
      %p312 = scmp.eq.s32.totalorder %s35, 0
      %p313 = por %p311, %p312
      %p314 = scmp.ne.s32.totalorder %s306, %s308
      %p315 = scmp.eq.s32.totalorder %s40, 1
      %p316 = por %p314, %p315
      %p317 = scmp.ne.s32.totalorder %s308, %s309
      %p318 = scmp.eq.s32.totalorder %s40, 0
      %p319 = por %p317, %p318
      %p320 = scmp.ne.s32.totalorder %s308, %s309
      %p321 = scmp.eq.s32.totalorder %s41, 1
      %p322 = por %p320, %p321
      %p324 = scmp.ne.s32.totalorder %s309, %s323
      %p325 = scmp.eq.s32.totalorder %s41, 0
      %p326 = por %p324, %p325
      %s328 = sadd.s32 %s327, 1
      %p331 = scmp.eq.s32.totalorder %s35, 1
      %p332 = scmp.ne.s32.totalorder %s327, %s329
      %p333 = scmp.eq.s32.totalorder %s35, 0
      %p334 = por %p332, %p333
      %p335 = scmp.ne.s32.totalorder %s327, %s329
      %p336 = scmp.eq.s32.totalorder %s40, 1
      %p337 = por %p335, %p336
      %p338 = scmp.ne.s32.totalorder %s329, %s330
      %p339 = scmp.eq.s32.totalorder %s40, 0
      %p340 = por %p338, %p339
      %p341 = scmp.ne.s32.totalorder %s329, %s330
      %p342 = scmp.eq.s32.totalorder %s41, 1
      %p343 = por %p341, %p342
      %p345 = scmp.ne.s32.totalorder %s330, %s344
      %p346 = scmp.eq.s32.totalorder %s41, 0
      %p347 = por %p345, %p346
      %s349 = sadd.s32 %s348, 1
      %p352 = scmp.eq.s32.totalorder %s35, 1
      %p353 = scmp.ne.s32.totalorder %s348, %s350
      %p354 = scmp.eq.s32.totalorder %s35, 0
      %p355 = por %p353, %p354
      %p356 = scmp.ne.s32.totalorder %s348, %s350
      %p357 = scmp.eq.s32.totalorder %s40, 1
      %p358 = por %p356, %p357
      %p359 = scmp.ne.s32.totalorder %s350, %s351
      %p360 = scmp.eq.s32.totalorder %s40, 0
      %p361 = por %p359, %p360
      %p362 = scmp.ne.s32.totalorder %s350, %s351
      %p363 = scmp.eq.s32.totalorder %s41, 1
      %p364 = por %p362, %p363
      %p366 = scmp.ne.s32.totalorder %s351, %s365
      %p367 = scmp.eq.s32.totalorder %s41, 0
      %p368 = por %p366, %p367
      %s370 = sadd.s32 %s369, 1
      %p373 = scmp.eq.s32.totalorder %s35, 1
      %p374 = scmp.ne.s32.totalorder %s369, %s371
      %p375 = scmp.eq.s32.totalorder %s35, 0
      %p376 = por %p374, %p375
      %p377 = scmp.ne.s32.totalorder %s369, %s371
      %p378 = scmp.eq.s32.totalorder %s40, 1
      %p379 = por %p377, %p378
      %p380 = scmp.ne.s32.totalorder %s371, %s372
      %p381 = scmp.eq.s32.totalorder %s40, 0
      %p382 = por %p380, %p381
      %p383 = scmp.ne.s32.totalorder %s371, %s372
      %p384 = scmp.eq.s32.totalorder %s41, 1
      %p385 = por %p383, %p384
      %p387 = scmp.ne.s32.totalorder %s372, %s386
      %p388 = scmp.eq.s32.totalorder %s41, 0
      %p389 = por %p387, %p388
      %s391 = sadd.s32 %s390, 1
      %p394 = scmp.eq.s32.totalorder %s35, 1
      %p395 = scmp.ne.s32.totalorder %s390, %s392
      %p396 = scmp.eq.s32.totalorder %s35, 0
      %p397 = por %p395, %p396
      %p398 = scmp.ne.s32.totalorder %s390, %s392
      %p399 = scmp.eq.s32.totalorder %s40, 1
      %p400 = por %p398, %p399
      %p401 = scmp.ne.s32.totalorder %s392, %s393
      %p402 = scmp.eq.s32.totalorder %s40, 0
      %p403 = por %p401, %p402
      %p404 = scmp.ne.s32.totalorder %s392, %s393
      %p405 = scmp.eq.s32.totalorder %s41, 1
      %p406 = por %p404, %p405
      %p408 = scmp.ne.s32.totalorder %s393, %s407
      %p409 = scmp.eq.s32.totalorder %s41, 0
      %p410 = por %p408, %p409
      %s412 = sadd.s32 %s411, 1
      %p415 = scmp.eq.s32.totalorder %s35, 1
      %p416 = scmp.ne.s32.totalorder %s411, %s413
      %p417 = scmp.eq.s32.totalorder %s35, 0
      %p418 = por %p416, %p417
      %p419 = scmp.ne.s32.totalorder %s411, %s413
      %p420 = scmp.eq.s32.totalorder %s40, 1
      %p421 = por %p419, %p420
      %p422 = scmp.ne.s32.totalorder %s413, %s414
      %p423 = scmp.eq.s32.totalorder %s40, 0
      %p424 = por %p422, %p423
      %p425 = scmp.ne.s32.totalorder %s413, %s414
      %p426 = scmp.eq.s32.totalorder %s41, 1
      %p427 = por %p425, %p426
      %p429 = scmp.ne.s32.totalorder %s414, %s428
      %p430 = scmp.eq.s32.totalorder %s41, 0
      %p431 = por %p429, %p430
      %s433 = sadd.s32 %s432, 1
      %p436 = scmp.eq.s32.totalorder %s35, 1
      %p437 = scmp.ne.s32.totalorder %s432, %s434
      %p438 = scmp.eq.s32.totalorder %s35, 0
      %p439 = por %p437, %p438
      %p440 = scmp.ne.s32.totalorder %s432, %s434
      %p441 = scmp.eq.s32.totalorder %s40, 1
      %p442 = por %p440, %p441
      %p443 = scmp.ne.s32.totalorder %s434, %s435
      %p444 = scmp.eq.s32.totalorder %s40, 0
      %p445 = por %p443, %p444
      %p446 = scmp.ne.s32.totalorder %s434, %s435
      %p447 = scmp.eq.s32.totalorder %s41, 1
      %p448 = por %p446, %p447
      %p450 = scmp.ne.s32.totalorder %s435, %s449
      %p451 = scmp.eq.s32.totalorder %s41, 0
      %p452 = por %p450, %p451
      %s454 = sadd.s32 %s453, 1
      %p457 = scmp.eq.s32.totalorder %s35, 1
      %p458 = scmp.ne.s32.totalorder %s453, %s455
      %p459 = scmp.eq.s32.totalorder %s35, 0
      %p460 = por %p458, %p459
      %p461 = scmp.ne.s32.totalorder %s453, %s455
      %p462 = scmp.eq.s32.totalorder %s40, 1
      %p463 = por %p461, %p462
      %p464 = scmp.ne.s32.totalorder %s455, %s456
      %p465 = scmp.eq.s32.totalorder %s40, 0
      %p466 = por %p464, %p465
      %p467 = scmp.ne.s32.totalorder %s455, %s456
      %p468 = scmp.eq.s32.totalorder %s41, 1
      %p469 = por %p467, %p468
      %p471 = scmp.ne.s32.totalorder %s456, %s470
      %p472 = scmp.eq.s32.totalorder %s41, 0
      %p473 = por %p471, %p472
      %s475 = sadd.s32 %s474, 1
      %p478 = scmp.eq.s32.totalorder %s35, 1
      %p479 = scmp.ne.s32.totalorder %s474, %s476
      %p480 = scmp.eq.s32.totalorder %s35, 0
      %p481 = por %p479, %p480
      %p482 = scmp.ne.s32.totalorder %s474, %s476
      %p483 = scmp.eq.s32.totalorder %s40, 1
      %p484 = por %p482, %p483
      %p485 = scmp.ne.s32.totalorder %s476, %s477
      %p486 = scmp.eq.s32.totalorder %s40, 0
      %p487 = por %p485, %p486
      %p488 = scmp.ne.s32.totalorder %s476, %s477
      %p489 = scmp.eq.s32.totalorder %s41, 1
      %p490 = por %p488, %p489
      %p492 = scmp.ne.s32.totalorder %s477, %s491
      %p493 = scmp.eq.s32.totalorder %s41, 0
      %p494 = por %p492, %p493
      %s496 = sadd.s32 %s495, 1
      %p499 = scmp.eq.s32.totalorder %s35, 1
      %p500 = scmp.ne.s32.totalorder %s495, %s497
      %p501 = scmp.eq.s32.totalorder %s35, 0
      %p502 = por %p500, %p501
      %p503 = scmp.ne.s32.totalorder %s495, %s497
      %p504 = scmp.eq.s32.totalorder %s40, 1
      %p505 = por %p503, %p504
      %p506 = scmp.ne.s32.totalorder %s497, %s498
      %p507 = scmp.eq.s32.totalorder %s40, 0
      %p508 = por %p506, %p507
      %p509 = scmp.ne.s32.totalorder %s497, %s498
      %p510 = scmp.eq.s32.totalorder %s41, 1
      %p511 = por %p509, %p510
      %p513 = scmp.ne.s32.totalorder %s498, %s512
      %p514 = scmp.eq.s32.totalorder %s41, 0
      %p515 = por %p513, %p514
      %s517 = sadd.s32 %s516, 1
      %p520 = scmp.eq.s32.totalorder %s35, 1
      %p521 = scmp.ne.s32.totalorder %s516, %s518
      %p522 = scmp.eq.s32.totalorder %s35, 0
      %p523 = por %p521, %p522
      %p524 = scmp.ne.s32.totalorder %s516, %s518
      %p525 = scmp.eq.s32.totalorder %s40, 1
      %p526 = por %p524, %p525
      %p527 = scmp.ne.s32.totalorder %s518, %s519
      %p528 = scmp.eq.s32.totalorder %s40, 0
      %p529 = por %p527, %p528
      %p530 = scmp.ne.s32.totalorder %s518, %s519
      %p531 = scmp.eq.s32.totalorder %s41, 1
      %p532 = por %p530, %p531
      %p534 = scmp.ne.s32.totalorder %s519, %s533
      %p535 = scmp.eq.s32.totalorder %s41, 0
      %p536 = por %p534, %p535
      %s538 = sadd.s32 %s537, 1
      %p541 = scmp.eq.s32.totalorder %s35, 1
      %p542 = scmp.ne.s32.totalorder %s537, %s539
      %p543 = scmp.eq.s32.totalorder %s35, 0
      %p544 = por %p542, %p543
      %p545 = scmp.ne.s32.totalorder %s537, %s539
      %p546 = scmp.eq.s32.totalorder %s40, 1
      %p547 = por %p545, %p546
      %p548 = scmp.ne.s32.totalorder %s539, %s540
      %p549 = scmp.eq.s32.totalorder %s40, 0
      %p550 = por %p548, %p549
      %p551 = scmp.ne.s32.totalorder %s539, %s540
      %p552 = scmp.eq.s32.totalorder %s41, 1
      %p553 = por %p551, %p552
      %p555 = scmp.ne.s32.totalorder %s540, %s554
      %p556 = scmp.eq.s32.totalorder %s41, 0
      %p557 = por %p555, %p556
      %s559 = sadd.s32 %s558, 1
      %p562 = scmp.eq.s32.totalorder %s35, 1
      %p563 = scmp.ne.s32.totalorder %s558, %s560
      %p564 = scmp.eq.s32.totalorder %s35, 0
      %p565 = por %p563, %p564
      %p566 = scmp.ne.s32.totalorder %s558, %s560
      %p567 = scmp.eq.s32.totalorder %s40, 1
      %p568 = por %p566, %p567
      %p569 = scmp.ne.s32.totalorder %s560, %s561
      %p570 = scmp.eq.s32.totalorder %s40, 0
      %p571 = por %p569, %p570
      %p572 = scmp.ne.s32.totalorder %s560, %s561
      %p573 = scmp.eq.s32.totalorder %s41, 1
      %p574 = por %p572, %p573
      %p576 = scmp.ne.s32.totalorder %s561, %s575
      %p577 = scmp.eq.s32.totalorder %s41, 0
      %p578 = por %p576, %p577
      %s580 = sadd.s32 %s579, 1
      %p583 = scmp.eq.s32.totalorder %s35, 1
      %p584 = scmp.ne.s32.totalorder %s579, %s581
      %p585 = scmp.eq.s32.totalorder %s35, 0
      %p586 = por %p584, %p585
      %p587 = scmp.ne.s32.totalorder %s579, %s581
      %p588 = scmp.eq.s32.totalorder %s40, 1
      %p589 = por %p587, %p588
      %p590 = scmp.ne.s32.totalorder %s581, %s582
      %p591 = scmp.eq.s32.totalorder %s40, 0
      %p592 = por %p590, %p591
      %p593 = scmp.ne.s32.totalorder %s581, %s582
      %p594 = scmp.eq.s32.totalorder %s41, 1
      %p595 = por %p593, %p594
      %p597 = scmp.ne.s32.totalorder %s582, %s596
      %p598 = scmp.eq.s32.totalorder %s41, 0
      %p599 = por %p597, %p598
      %s601 = sadd.s32 %s600, 1
      %p604 = scmp.eq.s32.totalorder %s35, 1
      %p605 = scmp.ne.s32.totalorder %s600, %s602
      %p606 = scmp.eq.s32.totalorder %s35, 0
      %p607 = por %p605, %p606
      %p608 = scmp.ne.s32.totalorder %s600, %s602
      %p609 = scmp.eq.s32.totalorder %s40, 1
      %p610 = por %p608, %p609
      %p611 = scmp.ne.s32.totalorder %s602, %s603
      %p612 = scmp.eq.s32.totalorder %s40, 0
      %p613 = por %p611, %p612
      %p614 = scmp.ne.s32.totalorder %s602, %s603
      %p615 = scmp.eq.s32.totalorder %s41, 1
      %p616 = por %p614, %p615
      %p618 = scmp.ne.s32.totalorder %s603, %s617
      %p619 = scmp.eq.s32.totalorder %s41, 0
      %p620 = por %p618, %p619
      %s621 = ssub.s32 %s42, %s54
      %s622 = ssub.s32 %s43, %s50
      %s623 = sor.u32 %s621, %s622
      %p624 = scmp.eq.s32.totalorder %s623, 0
      %s626 = sadd.s32 %s625, 1
      %s627 = scalar_select %p624, %s625, %s626
      %p630 = pneg %p624
      %p631 = scmp.eq.s32.totalorder %s35, 1
      %p632 = por %p630, %p631
      %p633 = scmp.ne.s32.totalorder %s625, %s628
      %p634 = scmp.eq.s32.totalorder %s35, 0
      %p635 = por %p633, %p634
      %p636 = scmp.ne.s32.totalorder %s625, %s628
      %p637 = scmp.eq.s32.totalorder %s40, 1
      %p638 = por %p636, %p637
      %p639 = scmp.ne.s32.totalorder %s628, %s629
      %p640 = scmp.eq.s32.totalorder %s40, 0
      %p641 = por %p639, %p640
      %p642 = scmp.ne.s32.totalorder %s628, %s629
      %p643 = scmp.eq.s32.totalorder %s41, 1
      %p644 = por %p642, %p643
      %p646 = scmp.ne.s32.totalorder %s629, %s645
      %p647 = scmp.eq.s32.totalorder %s41, 0
      %p648 = por %p646, %p647
      %p649 = scmp.le.s32.totalorder 1, %s35
      %p650 = scmp.lt.s32.totalorder %s35, 3
      %p651 = pnand %p649, %p650
      %p652 = pneg %p651
      // Predicated region
      $region9: #{sga_forward.1} parent=5 // pred_check
        _
      $region10: #{sga_forward.1} parent=5 // pred_check_branch
        %654 = sbr.rel (%p651) target = $region12
      $region11: #{sga_forward.1} parent=5 // pred_region
        %s655 = ssub.s32 %s35, 1
        // Predicated region
        $region13: #{sga_forward.1} parent=11 // pred_check
          %p656 = pneg %p172
        $region14: #{sga_forward.1} parent=11 // pred_check_branch
          %658 = sbr.rel (%p656) target = $region16
        $region15: #{sga_forward.1} parent=11 // pred_region
          _
        $region16: #{sga_forward.1} parent=11 // pred_fallthru
          _
        // Predicated region
        $region17: #{sga_forward.1} parent=11 // pred_check
          %p659 = pneg %p193
        $region18: #{sga_forward.1} parent=11 // pred_check_branch
          %661 = sbr.rel (%p659) target = $region20
        $region19: #{sga_forward.1} parent=11 // pred_region
          _
        $region20: #{sga_forward.1} parent=11 // pred_fallthru
          _
        // Predicated region
        $region21: #{sga_forward.1} parent=11 // pred_check
          %p662 = pneg %p214
        $region22: #{sga_forward.1} parent=11 // pred_check_branch
          %664 = sbr.rel (%p662) target = $region24
        $region23: #{sga_forward.1} parent=11 // pred_region
          _
        $region24: #{sga_forward.1} parent=11 // pred_fallthru
          _
        // Predicated region
        $region25: #{sga_forward.1} parent=11 // pred_check
          %p665 = pneg %p235
        $region26: #{sga_forward.1} parent=11 // pred_check_branch
          %667 = sbr.rel (%p665) target = $region28
        $region27: #{sga_forward.1} parent=11 // pred_region
          _
        $region28: #{sga_forward.1} parent=11 // pred_fallthru
          _
        // Predicated region
        $region29: #{sga_forward.1} parent=11 // pred_check
          %p668 = pneg %p256
        $region30: #{sga_forward.1} parent=11 // pred_check_branch
          %670 = sbr.rel (%p668) target = $region32
        $region31: #{sga_forward.1} parent=11 // pred_region
          _
        $region32: #{sga_forward.1} parent=11 // pred_fallthru
          _
        // Predicated region
        $region33: #{sga_forward.1} parent=11 // pred_check
          %p671 = pneg %p277
        $region34: #{sga_forward.1} parent=11 // pred_check_branch
          %673 = sbr.rel (%p671) target = $region36
        $region35: #{sga_forward.1} parent=11 // pred_region
          _
        $region36: #{sga_forward.1} parent=11 // pred_fallthru
          _
        // Predicated region
        $region37: #{sga_forward.1} parent=11 // pred_check
          %p674 = pneg %p298
        $region38: #{sga_forward.1} parent=11 // pred_check_branch
          %676 = sbr.rel (%p674) target = $region40
        $region39: #{sga_forward.1} parent=11 // pred_region
          _
        $region40: #{sga_forward.1} parent=11 // pred_fallthru
          _
        // Predicated region
        $region41: #{sga_forward.1} parent=11 // pred_check
          %p677 = pneg %p319
        $region42: #{sga_forward.1} parent=11 // pred_check_branch
          %679 = sbr.rel (%p677) target = $region44
        $region43: #{sga_forward.1} parent=11 // pred_region
          _
        $region44: #{sga_forward.1} parent=11 // pred_fallthru
          _
        // Predicated region
        $region45: #{sga_forward.1} parent=11 // pred_check
          %p680 = pneg %p340
        $region46: #{sga_forward.1} parent=11 // pred_check_branch
          %682 = sbr.rel (%p680) target = $region48
        $region47: #{sga_forward.1} parent=11 // pred_region
          _
        $region48: #{sga_forward.1} parent=11 // pred_fallthru
          _
        // Predicated region
        $region49: #{sga_forward.1} parent=11 // pred_check
          %p683 = pneg %p361
        $region50: #{sga_forward.1} parent=11 // pred_check_branch
          %685 = sbr.rel (%p683) target = $region52
        $region51: #{sga_forward.1} parent=11 // pred_region
          _
        $region52: #{sga_forward.1} parent=11 // pred_fallthru
          _
        // Predicated region
        $region53: #{sga_forward.1} parent=11 // pred_check
          %p686 = pneg %p382
        $region54: #{sga_forward.1} parent=11 // pred_check_branch
          %688 = sbr.rel (%p686) target = $region56
        $region55: #{sga_forward.1} parent=11 // pred_region
          _
        $region56: #{sga_forward.1} parent=11 // pred_fallthru
          _
        // Predicated region
        $region57: #{sga_forward.1} parent=11 // pred_check
          %p689 = pneg %p403
        $region58: #{sga_forward.1} parent=11 // pred_check_branch
          %691 = sbr.rel (%p689) target = $region60
        $region59: #{sga_forward.1} parent=11 // pred_region
          _
        $region60: #{sga_forward.1} parent=11 // pred_fallthru
          _
        // Predicated region
        $region61: #{sga_forward.1} parent=11 // pred_check
          %p692 = pneg %p424
        $region62: #{sga_forward.1} parent=11 // pred_check_branch
          %694 = sbr.rel (%p692) target = $region64
        $region63: #{sga_forward.1} parent=11 // pred_region
          _
        $region64: #{sga_forward.1} parent=11 // pred_fallthru
          _
        // Predicated region
        $region65: #{sga_forward.1} parent=11 // pred_check
          %p695 = pneg %p445
        $region66: #{sga_forward.1} parent=11 // pred_check_branch
          %697 = sbr.rel (%p695) target = $region68
        $region67: #{sga_forward.1} parent=11 // pred_region
          _
        $region68: #{sga_forward.1} parent=11 // pred_fallthru
          _
        // Predicated region
        $region69: #{sga_forward.1} parent=11 // pred_check
          %p698 = pneg %p466
        $region70: #{sga_forward.1} parent=11 // pred_check_branch
          %700 = sbr.rel (%p698) target = $region72
        $region71: #{sga_forward.1} parent=11 // pred_region
          _
        $region72: #{sga_forward.1} parent=11 // pred_fallthru
          _
        // Predicated region
        $region73: #{sga_forward.1} parent=11 // pred_check
          %p701 = pneg %p487
        $region74: #{sga_forward.1} parent=11 // pred_check_branch
          %703 = sbr.rel (%p701) target = $region76
        $region75: #{sga_forward.1} parent=11 // pred_region
          _
        $region76: #{sga_forward.1} parent=11 // pred_fallthru
          _
        // Predicated region
        $region77: #{sga_forward.1} parent=11 // pred_check
          %p704 = pneg %p508
        $region78: #{sga_forward.1} parent=11 // pred_check_branch
          %706 = sbr.rel (%p704) target = $region80
        $region79: #{sga_forward.1} parent=11 // pred_region
          _
        $region80: #{sga_forward.1} parent=11 // pred_fallthru
          _
        // Predicated region
        $region81: #{sga_forward.1} parent=11 // pred_check
          %p707 = pneg %p529
        $region82: #{sga_forward.1} parent=11 // pred_check_branch
          %709 = sbr.rel (%p707) target = $region84
        $region83: #{sga_forward.1} parent=11 // pred_region
          _
        $region84: #{sga_forward.1} parent=11 // pred_fallthru
          _
        // Predicated region
        $region85: #{sga_forward.1} parent=11 // pred_check
          %p710 = pneg %p550
        $region86: #{sga_forward.1} parent=11 // pred_check_branch
          %712 = sbr.rel (%p710) target = $region88
        $region87: #{sga_forward.1} parent=11 // pred_region
          _
        $region88: #{sga_forward.1} parent=11 // pred_fallthru
          _
        // Predicated region
        $region89: #{sga_forward.1} parent=11 // pred_check
          %p713 = pneg %p571
        $region90: #{sga_forward.1} parent=11 // pred_check_branch
          %715 = sbr.rel (%p713) target = $region92
        $region91: #{sga_forward.1} parent=11 // pred_region
          _
        $region92: #{sga_forward.1} parent=11 // pred_fallthru
          _
        // Predicated region
        $region93: #{sga_forward.1} parent=11 // pred_check
          %p716 = pneg %p592
        $region94: #{sga_forward.1} parent=11 // pred_check_branch
          %718 = sbr.rel (%p716) target = $region96
        $region95: #{sga_forward.1} parent=11 // pred_region
          _
        $region96: #{sga_forward.1} parent=11 // pred_fallthru
          _
        // Predicated region
        $region97: #{sga_forward.1} parent=11 // pred_check
          %p719 = pneg %p613
        $region98: #{sga_forward.1} parent=11 // pred_check_branch
          %721 = sbr.rel (%p719) target = $region100
        $region99: #{sga_forward.1} parent=11 // pred_region
          _
        $region100: #{sga_forward.1} parent=11 // pred_fallthru
          _
      $region12: #{sga_forward.1} parent=5 // pred_fallthru
        _
      %p722 = scmp.lt.s32.totalorder %s35, 2
      // Predicated region
      $region101: #{sga_forward.1} parent=5 // pred_check
        %p723 = pneg %p722
      $region102: #{sga_forward.1} parent=5 // pred_check_branch
        %725 = sbr.rel (%p723) target = $region104
      $region103: #{sga_forward.1} parent=5 // pred_region
        // Predicated region
        $region105: #{sga_forward.1} parent=103 // pred_check
          %p726 = pneg %p67
        $region106: #{sga_forward.1} parent=103 // pred_check_branch
          %728 = sbr.rel (%p726) target = $region108
        $region107: #{sga_forward.1} parent=103 // pred_region
          %p729 = scmp.lt.s32.totalorder %s42, 1
          %s730 = scalar_select %p729, %s42, 1
          %s731 = smul.addr %s730, 2
          %s732 = smul.addr %s731, 8
          %s733 = scalar_lea.vmem %s0, %s732
        $region108: #{sga_forward.1} parent=103 // pred_fallthru
          _
        // Predicated region
        $region109: #{sga_forward.1} parent=103 // pred_check
          %p734 = pneg %p93
        $region110: #{sga_forward.1} parent=103 // pred_check_branch
          %736 = sbr.rel (%p734) target = $region112
        $region111: #{sga_forward.1} parent=103 // pred_region
          %p737 = scmp.lt.s32.totalorder %s42, 1
          %s738 = scalar_select %p737, %s42, 1
          %s739 = smul.addr %s738, 8
          %s740 = scalar_lea.vmem %s1, %s739
        $region112: #{sga_forward.1} parent=103 // pred_fallthru
          _
        // Predicated region
        $region113: #{sga_forward.1} parent=103 // pred_check
          %p741 = pneg %p119
        $region114: #{sga_forward.1} parent=103 // pred_check_branch
          %743 = sbr.rel (%p741) target = $region116
        $region115: #{sga_forward.1} parent=103 // pred_region
          %p744 = scmp.lt.s32.totalorder %s42, 1
          %s745 = scalar_select %p744, %s42, 1
          %s746 = scalar_lea.vmem %s2, %s745
        $region116: #{sga_forward.1} parent=103 // pred_fallthru
          _
        // Predicated region
        $region117: #{sga_forward.1} parent=103 // pred_check
          %p747 = pneg %p145
        $region118: #{sga_forward.1} parent=103 // pred_check_branch
          %749 = sbr.rel (%p747) target = $region120
        $region119: #{sga_forward.1} parent=103 // pred_region
          %p750 = scmp.lt.s32.totalorder %s42, 1
          %s751 = scalar_select %p750, %s42, 1
          %s752 = scalar_lea.vmem %s3, %s751
        $region120: #{sga_forward.1} parent=103 // pred_fallthru
          _
      $region104: #{sga_forward.1} parent=5 // pred_fallthru
        _
      %p753 = scmp.le.s32.totalorder 1, %s35
      %p754 = scmp.lt.s32.totalorder %s35, 3
      %p755 = pnand %p753, %p754
      %p756 = pneg %p755
      // Predicated region
      $region121: #{sga_forward.1} parent=5 // pred_check
        _
      $region122: #{sga_forward.1} parent=5 // pred_check_branch
        %758 = sbr.rel (%p755) target = $region124
      $region123: #{sga_forward.1} parent=5 // pred_region
        %s759 = ssub.s32 %s35, 1
        %p760 = scmp.lt.s32.totalorder %s44, 1
        %s761 = scalar_select %p760, %s44, 1
        %s762 = smul.addr %s761, 2
        %s763 = smul.addr %s762, 8
        %s764 = scalar_lea.vmem %s0, %s763
        %p765 = pneg %p73
        %p766 = pneg %p70
        %p767 = scmp.lt.s32.totalorder %s44, 1
        %s768 = scalar_select %p767, %s44, 1
        %s769 = smul.addr %s768, 8
        %s770 = scalar_lea.vmem %s1, %s769
        %p771 = pneg %p99
        %p772 = pneg %p96
        %p773 = scmp.lt.s32.totalorder %s44, 1
        %s774 = scalar_select %p773, %s44, 1
        %s775 = scalar_lea.vmem %s2, %s774
        %p776 = pneg %p125
        %p777 = pneg %p122
        %p778 = scmp.lt.s32.totalorder %s44, 1
        %s779 = scalar_select %p778, %s44, 1
        %s780 = scalar_lea.vmem %s3, %s779
        %p781 = pneg %p151
        %p782 = pneg %p148
        %p783 = pneg %p172
        %p784 = pneg %p169
        %p785 = pneg %p193
        %p786 = pneg %p190
        %p787 = pneg %p214
        %p788 = pneg %p211
        %p789 = pneg %p235
        %p790 = pneg %p232
        %p791 = pneg %p256
        %p792 = pneg %p253
        %p793 = pneg %p277
        %p794 = pneg %p274
        %p795 = pneg %p298
        %p796 = pneg %p295
        %p797 = pneg %p319
        %p798 = pneg %p316
        %p799 = pneg %p340
        %p800 = pneg %p337
        %p801 = pneg %p361
        %p802 = pneg %p358
        %p803 = pneg %p382
        %p804 = pneg %p379
        %p805 = pneg %p403
        %p806 = pneg %p400
        %p807 = pneg %p424
        %p808 = pneg %p421
        %p809 = pneg %p445
        %p810 = pneg %p442
        %p811 = pneg %p466
        %p812 = pneg %p463
        %p813 = pneg %p487
        %p814 = pneg %p484
        %p815 = pneg %p508
        %p816 = pneg %p505
        %p817 = pneg %p529
        %p818 = pneg %p526
        %p819 = pneg %p550
        %p820 = pneg %p547
        %p821 = pneg %p571
        %p822 = pneg %p568
        %p823 = pneg %p592
        %p824 = pneg %p589
        %p825 = pneg %p613
        %p826 = pneg %p610
        %p827 = pneg %p641
        %p828 = pneg %p638
        %s829 = sand.u32 %s628, 1
        %s830 = scalar_lea.sflag [#allocation6], %s829
        %s831 = sand.u32 %s628, 1
        %s832 = smul.addr %s831, 16
        %s833 = scalar_lea.vmem [#allocation5], %s832
        %p834 = scmp.lt.s32.totalorder %s44, 1
        %s835 = scalar_select %p834, %s44, 1
        %s836 = smul.addr %s835, 2
        %s837 = smul.addr %s836, 8
        %s838 = scalar_lea.vmem %s0, %s837
        %p839 = scmp.lt.s32.totalorder %s44, 1
        %s840 = scalar_select %p839, %s44, 1
        %s841 = smul.addr %s840, 8
        %s842 = scalar_lea.vmem %s1, %s841
        %p843 = scmp.lt.s32.totalorder %s44, 1
        %s844 = scalar_select %p843, %s44, 1
        %s845 = scalar_lea.vmem %s2, %s844
        %p846 = scmp.lt.s32.totalorder %s44, 1
        %s847 = scalar_select %p846, %s44, 1
        %s848 = scalar_lea.vmem %s3, %s847
        %s849 = smul.u32 2, %s45
        %p851 = scmp.eq.s32.totalorder %s45, 0
        // Predicated region
        $region125: #{sga_forward.1} parent=123 // pred_check
          %p852 = pneg %p851
        $region126: #{sga_forward.1} parent=123 // pred_check_branch
          %854 = sbr.rel (%p852) target = $region128
        $region127: #{sga_forward.1} parent=123 // pred_region
          %v855 = vld [vmem:[%s838] sm:$0xff]
          %v856 = vld [vmem:[%s838 + $0x8] sm:$0xff]
          %v857 = vld [vmem:[%s842] sm:$0xff]
          %v858 = vpack.c.bf16 %v856, %v855
          %v859 = vld [vmem:[%s6] sm:$0xf]
          %v860 = vld [vmem:[%s6 + $0x4] sm:$0xf]
          %v861 = vld [vmem:[%s6 + $0x8] sm:$0xf]
          %v862 = vld [vmem:[%s6 + $0xc] sm:$0xf]
          %v863 = vld [vmem:[%s7] sm:$0x1]
          %v865 = vlaneseq
          %v866 = vshrl.u32 %v865, 7
          %v867 = vsub.s32 0, %v866
          %v868 = vrot.slane %v863, %v867
          %v874 = vunpack.c.l.b16 %v859
          %v875 = vunpack.c.l.b16 %v860
          %v876 = vunpack.c.l.b16 %v861
          %v877 = vunpack.c.l.b16 %v862
          %v878 = vpack.c.b16 %v875, %v874
          %v879 = vpack.c.b16 %v877, %v876
          %vm882 = vcmask 261120
          %v884 = vsel %vm882, %v858, 0
          %886 = vmatprep.subr.bf16.mxu0 0
          %887 = vmatpush1.bf16.msra.mxu0 %v878
          %888 = vmatprep.subr.bf16.mxu0 0
          %889 = vmatpush1.bf16.msra.mxu0 %v879
          %890 = vmatprep.subr.bf16.mxu0 0
          %891 = vmatpush1.bf16.msra.mxu0 0
          %892 = vmatprep.subr.bf16.mxu0 0
          %893 = vmatpush1.bf16.msra.mxu0 0
          %894 = vmatprep.subr.bf16.mxu0 0
          %895 = vmatpush1.bf16.msra.mxu0 0
          %896 = vmatprep.subr.bf16.mxu0 0
          %897 = vmatpush1.bf16.msra.mxu0 0
          %898 = vmatprep.subr.bf16.mxu0 0
          %899 = vmatpush1.bf16.msra.mxu0 0
          %900 = vmatprep.subr.bf16.mxu0 0
          %901 = vmatpush1.bf16.msra.mxu0 0
          %902 = vmatprep.subr.bf16.mxu0 0
          %903 = vmatpush1.bf16.msra.mxu0 0
          %904 = vmatprep.subr.bf16.mxu0 0
          %905 = vmatpush1.bf16.msra.mxu0 0
          %906 = vmatprep.subr.bf16.mxu0 0
          %907 = vmatpush1.bf16.msra.mxu0 0
          %908 = vmatprep.subr.bf16.mxu0 0
          %909 = vmatpush1.bf16.msra.mxu0 0
          %910 = vmatprep.subr.bf16.mxu0 0
          %911 = vmatpush1.bf16.msra.mxu0 0
          %912 = vmatprep.subr.bf16.mxu0 0
          %913 = vmatpush1.bf16.msra.mxu0 0
          %914 = vmatprep.subr.bf16.mxu0 0
          %915 = vmatpush1.bf16.msra.mxu0 0
          %916 = vmatprep.subr.bf16.mxu0 0
          %917 = vmatpush1.bf16.msra.mxu0 0
          %918 = vmatprep.mubr.bf16.mxu0 0
          %919 = vmatmul.mubr.bf16.gmra.mrb[0].mxu0 %v884
          %v920 = vpop.f32.mrb[0].mxu0
          %v921 = vadd.f32 %v868, %v920
          %v922 = vpop.f32.mrb[0].mxu0
          %v923 = vpop.f32.mrb[0].mxu0
          %v924 = vadd.f32 %v868, %v923
          %v925 = vpop.f32.mrb[0].mxu0
          %926 = vdwg.mxu0
          %v927 = vpack.c.bf16 %v924, %v921
          %vm928 = vcmask 523264
          %929 = vst.msk [vmem:[#allocation2] sm:$0xff] %vm928, %v927
          %v930 = vpack.c.bf16 %v857, %v857
          %v931 = vld [vmem:[%s14] sm:$0xf]
          %v932 = vld [vmem:[%s14 + $0x4] sm:$0xf]
          %v933 = vld [vmem:[%s14 + $0x8] sm:$0xf]
          %v934 = vld [vmem:[%s14 + $0xc] sm:$0xf]
          %v935 = vld [vmem:[%s14 + $0x10] sm:$0xf]
          %v936 = vld [vmem:[%s14 + $0x14] sm:$0xf]
          %v937 = vld [vmem:[%s15] sm:$0x1]
          %v939 = vlaneseq
          %v940 = vshrl.u32 %v939, 7
          %v941 = vsub.s32 0, %v940
          %v942 = vrot.slane %v937, %v941
          %v950 = vunpack.c.l.b16 %v931
          %v951 = vunpack.c.l.b16 %v932
          %v952 = vunpack.c.l.b16 %v933
          %v953 = vunpack.c.l.b16 %v934
          %v954 = vunpack.c.l.b16 %v935
          %v955 = vunpack.c.l.b16 %v936
          %v956 = vpack.c.b16 %v951, %v950
          %v957 = vpack.c.b16 %v953, %v952
          %v958 = vpack.c.b16 %v955, %v954
          %vm962 = vcmask 392192
          %v964 = vsel %vm962, %v930, 0
          %966 = vmatprep.subr.bf16.mxu0 0
          %967 = vmatpush1.bf16.msra.mxu0 %v956
          %968 = vmatprep.subr.bf16.mxu0 0
          %969 = vmatpush1.bf16.msra.mxu0 %v957
          %970 = vmatprep.subr.bf16.mxu0 0
          %971 = vmatpush1.bf16.msra.mxu0 %v958
          %972 = vmatprep.subr.bf16.mxu0 0
          %973 = vmatpush1.bf16.msra.mxu0 0
          %974 = vmatprep.subr.bf16.mxu0 0
          %975 = vmatpush1.bf16.msra.mxu0 0
          %976 = vmatprep.subr.bf16.mxu0 0
          %977 = vmatpush1.bf16.msra.mxu0 0
          %978 = vmatprep.subr.bf16.mxu0 0
          %979 = vmatpush1.bf16.msra.mxu0 0
          %980 = vmatprep.subr.bf16.mxu0 0
          %981 = vmatpush1.bf16.msra.mxu0 0
          %982 = vmatprep.subr.bf16.mxu0 0
          %983 = vmatpush1.bf16.msra.mxu0 0
          %984 = vmatprep.subr.bf16.mxu0 0
          %985 = vmatpush1.bf16.msra.mxu0 0
          %986 = vmatprep.subr.bf16.mxu0 0
          %987 = vmatpush1.bf16.msra.mxu0 0
          %988 = vmatprep.subr.bf16.mxu0 0
          %989 = vmatpush1.bf16.msra.mxu0 0
          %990 = vmatprep.subr.bf16.mxu0 0
          %991 = vmatpush1.bf16.msra.mxu0 0
          %992 = vmatprep.subr.bf16.mxu0 0
          %993 = vmatpush1.bf16.msra.mxu0 0
          %994 = vmatprep.subr.bf16.mxu0 0
          %995 = vmatpush1.bf16.msra.mxu0 0
          %996 = vmatprep.subr.bf16.mxu0 0
          %997 = vmatpush1.bf16.msra.mxu0 0
          %998 = vmatprep.mubr.bf16.mxu0 0
          %999 = vmatmul.mubr.bf16.gmra.mrb[0].mxu0 %v964
          %v1000 = vpop.f32.mrb[0].mxu0
          %v1001 = vadd.f32 %v942, %v1000
          %v1002 = vpop.f32.mrb[0].mxu0
          %v1003 = vpop.f32.mrb[0].mxu0
          %v1004 = vpop.f32.mrb[0].mxu0
          %1005 = vdwg.mxu0
          %v1006 = vpack.c.bf16 %v1001, %v1001
          %vm1007 = vcmask 519168
          %1008 = vst.msk [vmem:[#allocation3] sm:$0xf] %vm1007, %v1006
        $region128: #{sga_forward.1} parent=123 // pred_fallthru
          _
        %s1009 = smul.u32 %s45, 16
        %s1010 = scalar_lea.vmem %s838, %s1009
        %v1011 = vld [vmem:[%s1010] sm:$0xff]
        %v1012 = vld [vmem:[%s1010 + $0x8] sm:$0xff]
        %v1013 = vld [vmem:[%s845] sm:$0x1]
        %v1014 = vld [vmem:[%s848] sm:$0x1]
        %v1015 = vpack.c.bf16 %v1012, %v1011
        %v1016 = vld [vmem:[%s4] sm:$0xf]
        %v1017 = vld [vmem:[%s4 + $0x4] sm:$0xf]
        %v1018 = vld [vmem:[%s4 + $0x8] sm:$0xf]
        %v1019 = vld [vmem:[%s4 + $0xc] sm:$0xf]
        %v1020 = vld [vmem:[%s5] sm:$0x1]
        %v1022 = vlaneseq
        %v1023 = vshrl.u32 %v1022, 7
        %v1024 = vsub.s32 0, %v1023
        %v1025 = vrot.slane %v1020, %v1024
        %v1031 = vunpack.c.l.b16 %v1016
        %v1032 = vunpack.c.l.b16 %v1017
        %v1033 = vunpack.c.l.b16 %v1018
        %v1034 = vunpack.c.l.b16 %v1019
        %v1035 = vpack.c.b16 %v1032, %v1031
        %v1036 = vpack.c.b16 %v1034, %v1033
        %vm1039 = vcmask 261120
        %v1041 = vsel %vm1039, %v1015, 0
        %1043 = vmatprep.subr.bf16.mxu0 0
        %1044 = vmatpush1.bf16.msra.mxu0 %v1035
        %1045 = vmatprep.subr.bf16.mxu0 0
        %1046 = vmatpush1.bf16.msra.mxu0 %v1036
        %1047 = vmatprep.subr.bf16.mxu0 0
        %1048 = vmatpush1.bf16.msra.mxu0 0
        %1049 = vmatprep.subr.bf16.mxu0 0
        %1050 = vmatpush1.bf16.msra.mxu0 0
        %1051 = vmatprep.subr.bf16.mxu0 0
        %1052 = vmatpush1.bf16.msra.mxu0 0
        %1053 = vmatprep.subr.bf16.mxu0 0
        %1054 = vmatpush1.bf16.msra.mxu0 0
        %1055 = vmatprep.subr.bf16.mxu0 0
        %1056 = vmatpush1.bf16.msra.mxu0 0
        %1057 = vmatprep.subr.bf16.mxu0 0
        %1058 = vmatpush1.bf16.msra.mxu0 0
        %1059 = vmatprep.subr.bf16.mxu0 0
        %1060 = vmatpush1.bf16.msra.mxu0 0
        %1061 = vmatprep.subr.bf16.mxu0 0
        %1062 = vmatpush1.bf16.msra.mxu0 0
        %1063 = vmatprep.subr.bf16.mxu0 0
        %1064 = vmatpush1.bf16.msra.mxu0 0
        %1065 = vmatprep.subr.bf16.mxu0 0
        %1066 = vmatpush1.bf16.msra.mxu0 0
        %1067 = vmatprep.subr.bf16.mxu0 0
        %1068 = vmatpush1.bf16.msra.mxu0 0
        %1069 = vmatprep.subr.bf16.mxu0 0
        %1070 = vmatpush1.bf16.msra.mxu0 0
        %1071 = vmatprep.subr.bf16.mxu0 0
        %1072 = vmatpush1.bf16.msra.mxu0 0
        %1073 = vmatprep.subr.bf16.mxu0 0
        %1074 = vmatpush1.bf16.msra.mxu0 0
        %1075 = vmatprep.mubr.bf16.mxu0 0
        %1076 = vmatmul.mubr.bf16.gmra.mrb[0].mxu0 %v1041
        %v1077 = vpop.f32.mrb[0].mxu0
        %v1078 = vadd.f32 %v1025, %v1077
        %v1079 = vpop.f32.mrb[0].mxu0
        %v1080 = vpop.f32.mrb[0].mxu0
        %v1081 = vadd.f32 %v1025, %v1080
        %v1082 = vpop.f32.mrb[0].mxu0
        %1083 = vdwg.mxu0
        %v1084 = vld [vmem:[#allocation2] sm:$0xff]
        %v1085 = vpack.c.bf16 %v1081, %v1078
        %v1087 = vlaneseq
        %v1088 = vshrl.u32 %v1087, 7
        %v1089 = vsub.s32 0, %v1088
        %v1090 = vrot.slane %v1013, %v1089
        %vm1092 = vcmask 31744
        %v1094 = vsel %vm1092, %v1085, 0
        %v1097 = vsel %vm1092, %v1084, 0
        %1099 = vmatprep.subr.bf16.mxu0 0
        %1100 = vmatpush1.bf16.xpose.msra.mxu0 %v1097
        %1101 = vmatprep.subr.bf16.mxu0 0
        %1102 = vmatpush1.bf16.xpose.msra.mxu0 0
        %1103 = vmatprep.subr.bf16.mxu0 0
        %1104 = vmatpush1.bf16.xpose.msra.mxu0 0
        %1105 = vmatprep.subr.bf16.mxu0 0
        %1106 = vmatpush1.bf16.xpose.msra.mxu0 0
        %1107 = vmatprep.subr.bf16.mxu0 0
        %1108 = vmatpush1.bf16.xpose.msra.mxu0 0
        %1109 = vmatprep.subr.bf16.mxu0 0
        %1110 = vmatpush1.bf16.xpose.msra.mxu0 0
        %1111 = vmatprep.subr.bf16.mxu0 0
        %1112 = vmatpush1.bf16.xpose.msra.mxu0 0
        %1113 = vmatprep.subr.bf16.mxu0 0
        %1114 = vmatpush1.bf16.xpose.msra.mxu0 0
        %1115 = vmatprep.subr.bf16.mxu0 0
        %1116 = vmatpush1.bf16.xpose.msra.mxu0 0
        %1117 = vmatprep.subr.bf16.mxu0 0
        %1118 = vmatpush1.bf16.xpose.msra.mxu0 0
        %1119 = vmatprep.subr.bf16.mxu0 0
        %1120 = vmatpush1.bf16.xpose.msra.mxu0 0
        %1121 = vmatprep.subr.bf16.mxu0 0
        %1122 = vmatpush1.bf16.xpose.msra.mxu0 0
        %1123 = vmatprep.subr.bf16.mxu0 0
        %1124 = vmatpush1.bf16.xpose.msra.mxu0 0
        %1125 = vmatprep.subr.bf16.mxu0 0
        %1126 = vmatpush1.bf16.xpose.msra.mxu0 0
        %1127 = vmatprep.subr.bf16.mxu0 0
        %1128 = vmatpush1.bf16.xpose.msra.mxu0 0
        %1129 = vmatprep.subr.bf16.mxu0 0
        %1130 = vmatpush1.bf16.xpose.msra.mxu0 0
        %1131 = vmatprep.mubr.bf16.mxu0 0
        %1132 = vmatmul.mubr.bf16.gmra.mrb[0].mxu0 %v1094
        %v1133 = vpop.f32.mrb[0].mxu0
        %v1134 = vadd.f32 0.0, %v1133
        %v1135 = vpop.f32.mrb[0].mxu0
        %v1136 = vpop.f32.mrb[0].mxu0
        %v1137 = vadd.f32 0.0, %v1136
        %v1138 = vpop.f32.mrb[0].mxu0
        %1139 = vdwg.mxu0
        %v1140 = vmul.f32 %v1134, 0.5
        %v1141 = vmul.f32 %v1137, 0.5
        %v1142 = vadd.f32 %v1140, %v1090
        %v1143 = vadd.f32 %v1141, %v1090
        %vm1144 = vcmask 130048
        %v1145 = vsel %vm1144, %v1142, -inf
        %1146 = vmax.xlane.f32.xlu0 %v1145
        %v1147 = vpop.xlane.xlu0 %1146
        %v1148 = vsel %vm1144, %v1143, -inf
        %1149 = vmax.xlane.f32.xlu0 %v1148
        %v1150 = vpop.xlane.xlu0 %1149
        %v1151 = vsub.f32 %v1142, %v1147
        %v1152 = vsub.f32 %v1143, %v1150
        %v1153 = vmul.f32 %v1151, 1.442695
        %v1154 = vpow.pop %v1153
        %v1155 = vmul.f32 %v1152, 1.442695
        %v1156 = vpow.pop %v1155
        %v1157 = vsel %vm1144, %v1154, 0.0
        %1158 = vadd.xlane.f32.xlu0 %v1157
        %v1159 = vpop.xlane.xlu0 %1158
        %v1160 = vsel %vm1144, %v1156, 0.0
        %1161 = vadd.xlane.f32.xlu0 %v1160
        %v1162 = vpop.xlane.xlu0 %1161
        %v1163 = vrcp.pop %v1159
        %v1164 = vrcp.pop %v1162
        %v1165 = vmul.f32 %v1154, %v1163
        %v1166 = vmul.f32 %v1156, %v1164
        %v1167 = vpack.c.bf16 %v1166, %v1165
        %1169 = vrot.lane.b32.xlu0 %v1084, 96
        %v1170 = vpop.permute.xlu0 %1169
        %v1173 = vsel %vm1144, %v1167, 0
        %1175 = vmatprep.subr.bf16.mxu0 0
        %1176 = vmatpush1.bf16.msra.mxu0 %v1170
        %1177 = vmatprep.subr.bf16.mxu0 0
        %1178 = vmatpush1.bf16.msra.mxu0 0
        %1179 = vmatprep.subr.bf16.mxu0 0
        %1180 = vmatpush1.bf16.msra.mxu0 0
        %1181 = vmatprep.subr.bf16.mxu0 0
        %1182 = vmatpush1.bf16.msra.mxu0 0
        %1183 = vmatprep.subr.bf16.mxu0 0
        %1184 = vmatpush1.bf16.msra.mxu0 0
        %1185 = vmatprep.subr.bf16.mxu0 0
        %1186 = vmatpush1.bf16.msra.mxu0 0
        %1187 = vmatprep.subr.bf16.mxu0 0
        %1188 = vmatpush1.bf16.msra.mxu0 0
        %1189 = vmatprep.subr.bf16.mxu0 0
        %1190 = vmatpush1.bf16.msra.mxu0 0
        %1191 = vmatprep.subr.bf16.mxu0 0
        %1192 = vmatpush1.bf16.msra.mxu0 0
        %1193 = vmatprep.subr.bf16.mxu0 0
        %1194 = vmatpush1.bf16.msra.mxu0 0
        %1195 = vmatprep.subr.bf16.mxu0 0
        %1196 = vmatpush1.bf16.msra.mxu0 0
        %1197 = vmatprep.subr.bf16.mxu0 0
        %1198 = vmatpush1.bf16.msra.mxu0 0
        %1199 = vmatprep.subr.bf16.mxu0 0
        %1200 = vmatpush1.bf16.msra.mxu0 0
        %1201 = vmatprep.subr.bf16.mxu0 0
        %1202 = vmatpush1.bf16.msra.mxu0 0
        %1203 = vmatprep.subr.bf16.mxu0 0
        %1204 = vmatpush1.bf16.msra.mxu0 0
        %1205 = vmatprep.subr.bf16.mxu0 0
        %1206 = vmatpush1.bf16.msra.mxu0 0
        %1207 = vmatprep.mubr.bf16.mxu0 0
        %1208 = vmatmul.mubr.bf16.gmra.mrb[0].mxu0 %v1173
        %v1209 = vpop.f32.mrb[0].mxu0
        %v1210 = vadd.f32 0.0, %v1209
        %v1211 = vpop.f32.mrb[0].mxu0
        %v1212 = vpop.f32.mrb[0].mxu0
        %v1213 = vadd.f32 0.0, %v1212
        %v1214 = vpop.f32.mrb[0].mxu0
        %1215 = vdwg.mxu0
        %v1216 = vpack.c.bf16 %v1213, %v1210
        %1217 = vst.msk [vmem:[#allocation4] sm:$0xff] %vm1092, %v1216
        %1219 = vrot.lane.b32.xlu0 %v1085, 124
        %v1220 = vpop.permute.xlu0 %1219
        %1221 = vrot.lane.b32.xlu0 %v1084, 124
        %v1222 = vpop.permute.xlu0 %1221
        %v1224 = vsel %vm1092, %v1220, 0
        %v1227 = vsel %vm1092, %v1222, 0
        %1229 = vmatprep.subr.bf16.mxu0 0
        %1230 = vmatpush1.bf16.xpose.msra.mxu0 %v1227
        %1231 = vmatprep.subr.bf16.mxu0 0
        %1232 = vmatpush1.bf16.xpose.msra.mxu0 0
        %1233 = vmatprep.subr.bf16.mxu0 0
        %1234 = vmatpush1.bf16.xpose.msra.mxu0 0
        %1235 = vmatprep.subr.bf16.mxu0 0
        %1236 = vmatpush1.bf16.xpose.msra.mxu0 0
        %1237 = vmatprep.subr.bf16.mxu0 0
        %1238 = vmatpush1.bf16.xpose.msra.mxu0 0
        %1239 = vmatprep.subr.bf16.mxu0 0
        %1240 = vmatpush1.bf16.xpose.msra.mxu0 0
        %1241 = vmatprep.subr.bf16.mxu0 0
        %1242 = vmatpush1.bf16.xpose.msra.mxu0 0
        %1243 = vmatprep.subr.bf16.mxu0 0
        %1244 = vmatpush1.bf16.xpose.msra.mxu0 0
        %1245 = vmatprep.subr.bf16.mxu0 0
        %1246 = vmatpush1.bf16.xpose.msra.mxu0 0
        %1247 = vmatprep.subr.bf16.mxu0 0
        %1248 = vmatpush1.bf16.xpose.msra.mxu0 0
        %1249 = vmatprep.subr.bf16.mxu0 0
        %1250 = vmatpush1.bf16.xpose.msra.mxu0 0
        %1251 = vmatprep.subr.bf16.mxu0 0
        %1252 = vmatpush1.bf16.xpose.msra.mxu0 0
        %1253 = vmatprep.subr.bf16.mxu0 0
        %1254 = vmatpush1.bf16.xpose.msra.mxu0 0
        %1255 = vmatprep.subr.bf16.mxu0 0
        %1256 = vmatpush1.bf16.xpose.msra.mxu0 0
        %1257 = vmatprep.subr.bf16.mxu0 0
        %1258 = vmatpush1.bf16.xpose.msra.mxu0 0
        %1259 = vmatprep.subr.bf16.mxu0 0
        %1260 = vmatpush1.bf16.xpose.msra.mxu0 0
        %1261 = vmatprep.mubr.bf16.mxu0 0
        %1262 = vmatmul.mubr.bf16.gmra.mrb[0].mxu0 %v1224
        %v1263 = vpop.f32.mrb[0].mxu0
        %v1264 = vadd.f32 0.0, %v1263
        %v1265 = vpop.f32.mrb[0].mxu0
        %v1266 = vpop.f32.mrb[0].mxu0
        %v1267 = vadd.f32 0.0, %v1266
        %v1268 = vpop.f32.mrb[0].mxu0
        %1269 = vdwg.mxu0
        %v1270 = vmul.f32 %v1264, 0.5
        %v1271 = vmul.f32 %v1267, 0.5
        %v1272 = vadd.f32 %v1270, %v1090
        %v1273 = vadd.f32 %v1271, %v1090
        %v1274 = vsel %vm1144, %v1272, -inf
        %1275 = vmax.xlane.f32.xlu0 %v1274
        %v1276 = vpop.xlane.xlu0 %1275
        %v1277 = vsel %vm1144, %v1273, -inf
        %1278 = vmax.xlane.f32.xlu0 %v1277
        %v1279 = vpop.xlane.xlu0 %1278
        %v1280 = vsub.f32 %v1272, %v1276
        %v1281 = vsub.f32 %v1273, %v1279
        %v1282 = vmul.f32 %v1280, 1.442695
        %v1283 = vpow.pop %v1282
        %v1284 = vmul.f32 %v1281, 1.442695
        %v1285 = vpow.pop %v1284
        %v1286 = vsel %vm1144, %v1283, 0.0
        %1287 = vadd.xlane.f32.xlu0 %v1286
        %v1288 = vpop.xlane.xlu0 %1287
        %v1289 = vsel %vm1144, %v1285, 0.0
        %1290 = vadd.xlane.f32.xlu0 %v1289
        %v1291 = vpop.xlane.xlu0 %1290
        %v1292 = vrcp.pop %v1288
        %v1293 = vrcp.pop %v1291
        %v1294 = vmul.f32 %v1283, %v1292
        %v1295 = vmul.f32 %v1285, %v1293
        %v1296 = vpack.c.bf16 %v1295, %v1294
        %1297 = vrot.lane.b32.xlu0 %v1084, 92
        %v1298 = vpop.permute.xlu0 %1297
        %v1301 = vsel %vm1144, %v1296, 0
        %1303 = vmatprep.subr.bf16.mxu0 0
        %1304 = vmatpush1.bf16.msra.mxu0 %v1298
        %1305 = vmatprep.subr.bf16.mxu0 0
        %1306 = vmatpush1.bf16.msra.mxu0 0
        %1307 = vmatprep.subr.bf16.mxu0 0
        %1308 = vmatpush1.bf16.msra.mxu0 0
        %1309 = vmatprep.subr.bf16.mxu0 0
        %1310 = vmatpush1.bf16.msra.mxu0 0
        %1311 = vmatprep.subr.bf16.mxu0 0
        %1312 = vmatpush1.bf16.msra.mxu0 0
        %1313 = vmatprep.subr.bf16.mxu0 0
        %1314 = vmatpush1.bf16.msra.mxu0 0
        %1315 = vmatprep.subr.bf16.mxu0 0
        %1316 = vmatpush1.bf16.msra.mxu0 0
        %1317 = vmatprep.subr.bf16.mxu0 0
        %1318 = vmatpush1.bf16.msra.mxu0 0
        %1319 = vmatprep.subr.bf16.mxu0 0
        %1320 = vmatpush1.bf16.msra.mxu0 0
        %1321 = vmatprep.subr.bf16.mxu0 0
        %1322 = vmatpush1.bf16.msra.mxu0 0
        %1323 = vmatprep.subr.bf16.mxu0 0
        %1324 = vmatpush1.bf16.msra.mxu0 0
        %1325 = vmatprep.subr.bf16.mxu0 0
        %1326 = vmatpush1.bf16.msra.mxu0 0
        %1327 = vmatprep.subr.bf16.mxu0 0
        %1328 = vmatpush1.bf16.msra.mxu0 0
        %1329 = vmatprep.subr.bf16.mxu0 0
        %1330 = vmatpush1.bf16.msra.mxu0 0
        %1331 = vmatprep.subr.bf16.mxu0 0
        %1332 = vmatpush1.bf16.msra.mxu0 0
        %1333 = vmatprep.subr.bf16.mxu0 0
        %1334 = vmatpush1.bf16.msra.mxu0 0
        %1335 = vmatprep.mubr.bf16.mxu0 0
        %1336 = vmatmul.mubr.bf16.gmra.mrb[0].mxu0 %v1301
        %v1337 = vpop.f32.mrb[0].mxu0
        %v1338 = vadd.f32 0.0, %v1337
        %v1339 = vpop.f32.mrb[0].mxu0
        %v1340 = vpop.f32.mrb[0].mxu0
        %v1341 = vadd.f32 0.0, %v1340
        %v1342 = vpop.f32.mrb[0].mxu0
        %1343 = vdwg.mxu0
        %v1344 = vpack.c.bf16 %v1341, %v1338
        %1346 = vrot.lane.b32.xlu0 %v1344, 4
        %v1347 = vpop.permute.xlu0 %1346
        %vm1349 = vcmask 64544
        %1350 = vst.msk [vmem:[#allocation4] sm:$0xff] %vm1349, %v1347
        %1351 = vrot.lane.b32.xlu0 %v1085, 120
        %v1352 = vpop.permute.xlu0 %1351
        %1353 = vrot.lane.b32.xlu0 %v1084, 120
        %v1354 = vpop.permute.xlu0 %1353
        %v1356 = vsel %vm1092, %v1352, 0
        %v1359 = vsel %vm1092, %v1354, 0
        %1361 = vmatprep.subr.bf16.mxu0 0
        %1362 = vmatpush1.bf16.xpose.msra.mxu0 %v1359
        %1363 = vmatprep.subr.bf16.mxu0 0
        %1364 = vmatpush1.bf16.xpose.msra.mxu0 0
        %1365 = vmatprep.subr.bf16.mxu0 0
        %1366 = vmatpush1.bf16.xpose.msra.mxu0 0
        %1367 = vmatprep.subr.bf16.mxu0 0
        %1368 = vmatpush1.bf16.xpose.msra.mxu0 0
        %1369 = vmatprep.subr.bf16.mxu0 0
        %1370 = vmatpush1.bf16.xpose.msra.mxu0 0
        %1371 = vmatprep.subr.bf16.mxu0 0
        %1372 = vmatpush1.bf16.xpose.msra.mxu0 0
        %1373 = vmatprep.subr.bf16.mxu0 0
        %1374 = vmatpush1.bf16.xpose.msra.mxu0 0
        %1375 = vmatprep.subr.bf16.mxu0 0
        %1376 = vmatpush1.bf16.xpose.msra.mxu0 0
        %1377 = vmatprep.subr.bf16.mxu0 0
        %1378 = vmatpush1.bf16.xpose.msra.mxu0 0
        %1379 = vmatprep.subr.bf16.mxu0 0
        %1380 = vmatpush1.bf16.xpose.msra.mxu0 0
        %1381 = vmatprep.subr.bf16.mxu0 0
        %1382 = vmatpush1.bf16.xpose.msra.mxu0 0
        %1383 = vmatprep.subr.bf16.mxu0 0
        %1384 = vmatpush1.bf16.xpose.msra.mxu0 0
        %1385 = vmatprep.subr.bf16.mxu0 0
        %1386 = vmatpush1.bf16.xpose.msra.mxu0 0
        %1387 = vmatprep.subr.bf16.mxu0 0
        %1388 = vmatpush1.bf16.xpose.msra.mxu0 0
        %1389 = vmatprep.subr.bf16.mxu0 0
        %1390 = vmatpush1.bf16.xpose.msra.mxu0 0
        %1391 = vmatprep.subr.bf16.mxu0 0
        %1392 = vmatpush1.bf16.xpose.msra.mxu0 0
        %1393 = vmatprep.mubr.bf16.mxu0 0
        %1394 = vmatmul.mubr.bf16.gmra.mrb[0].mxu0 %v1356
        %v1395 = vpop.f32.mrb[0].mxu0
        %v1396 = vadd.f32 0.0, %v1395
        %v1397 = vpop.f32.mrb[0].mxu0
        %v1398 = vpop.f32.mrb[0].mxu0
        %v1399 = vadd.f32 0.0, %v1398
        %v1400 = vpop.f32.mrb[0].mxu0
        %1401 = vdwg.mxu0
        %v1402 = vmul.f32 %v1396, 0.5
        %v1403 = vmul.f32 %v1399, 0.5
        %v1404 = vadd.f32 %v1402, %v1090
        %v1405 = vadd.f32 %v1403, %v1090
        %v1406 = vsel %vm1144, %v1404, -inf
        %1407 = vmax.xlane.f32.xlu0 %v1406
        %v1408 = vpop.xlane.xlu0 %1407
        %v1409 = vsel %vm1144, %v1405, -inf
        %1410 = vmax.xlane.f32.xlu0 %v1409
        %v1411 = vpop.xlane.xlu0 %1410
        %v1412 = vsub.f32 %v1404, %v1408
        %v1413 = vsub.f32 %v1405, %v1411
        %v1414 = vmul.f32 %v1412, 1.442695
        %v1415 = vpow.pop %v1414
        %v1416 = vmul.f32 %v1413, 1.442695
        %v1417 = vpow.pop %v1416
        %v1418 = vsel %vm1144, %v1415, 0.0
        %1419 = vadd.xlane.f32.xlu0 %v1418
        %v1420 = vpop.xlane.xlu0 %1419
        %v1421 = vsel %vm1144, %v1417, 0.0
        %1422 = vadd.xlane.f32.xlu0 %v1421
        %v1423 = vpop.xlane.xlu0 %1422
        %v1424 = vrcp.pop %v1420
        %v1425 = vrcp.pop %v1423
        %v1426 = vmul.f32 %v1415, %v1424
        %v1427 = vmul.f32 %v1417, %v1425
        %v1428 = vpack.c.bf16 %v1427, %v1426
        %1429 = vrot.lane.b32.xlu0 %v1084, 88
        %v1430 = vpop.permute.xlu0 %1429
        %v1433 = vsel %vm1144, %v1428, 0
        %1435 = vmatprep.subr.bf16.mxu0 0
        %1436 = vmatpush1.bf16.msra.mxu0 %v1430
        %1437 = vmatprep.subr.bf16.mxu0 0
        %1438 = vmatpush1.bf16.msra.mxu0 0
        %1439 = vmatprep.subr.bf16.mxu0 0
        %1440 = vmatpush1.bf16.msra.mxu0 0
        %1441 = vmatprep.subr.bf16.mxu0 0
        %1442 = vmatpush1.bf16.msra.mxu0 0
        %1443 = vmatprep.subr.bf16.mxu0 0
        %1444 = vmatpush1.bf16.msra.mxu0 0
        %1445 = vmatprep.subr.bf16.mxu0 0
        %1446 = vmatpush1.bf16.msra.mxu0 0
        %1447 = vmatprep.subr.bf16.mxu0 0
        %1448 = vmatpush1.bf16.msra.mxu0 0
        %1449 = vmatprep.subr.bf16.mxu0 0
        %1450 = vmatpush1.bf16.msra.mxu0 0
        %1451 = vmatprep.subr.bf16.mxu0 0
        %1452 = vmatpush1.bf16.msra.mxu0 0
        %1453 = vmatprep.subr.bf16.mxu0 0
        %1454 = vmatpush1.bf16.msra.mxu0 0
        %1455 = vmatprep.subr.bf16.mxu0 0
        %1456 = vmatpush1.bf16.msra.mxu0 0
        %1457 = vmatprep.subr.bf16.mxu0 0
        %1458 = vmatpush1.bf16.msra.mxu0 0
        %1459 = vmatprep.subr.bf16.mxu0 0
        %1460 = vmatpush1.bf16.msra.mxu0 0
        %1461 = vmatprep.subr.bf16.mxu0 0
        %1462 = vmatpush1.bf16.msra.mxu0 0
        %1463 = vmatprep.subr.bf16.mxu0 0
        %1464 = vmatpush1.bf16.msra.mxu0 0
        %1465 = vmatprep.subr.bf16.mxu0 0
        %1466 = vmatpush1.bf16.msra.mxu0 0
        %1467 = vmatprep.mubr.bf16.mxu0 0
        %1468 = vmatmul.mubr.bf16.gmra.mrb[0].mxu0 %v1433
        %v1469 = vpop.f32.mrb[0].mxu0
        %v1470 = vadd.f32 0.0, %v1469
        %v1471 = vpop.f32.mrb[0].mxu0
        %v1472 = vpop.f32.mrb[0].mxu0
        %v1473 = vadd.f32 0.0, %v1472
        %v1474 = vpop.f32.mrb[0].mxu0
        %1475 = vdwg.mxu0
        %v1476 = vpack.c.bf16 %v1473, %v1470
        %1478 = vrot.lane.b32.xlu0 %v1476, 8
        %v1479 = vpop.permute.xlu0 %1478
        %vm1481 = vcmask 97344
        %1482 = vst.msk [vmem:[#allocation4] sm:$0xff] %vm1481, %v1479
        %1483 = vrot.lane.b32.xlu0 %v1085, 116
        %v1484 = vpop.permute.xlu0 %1483
        %1485 = vrot.lane.b32.xlu0 %v1084, 116
        %v1486 = vpop.permute.xlu0 %1485
        %v1488 = vsel %vm1092, %v1484, 0
        %v1491 = vsel %vm1092, %v1486, 0
        %1493 = vmatprep.subr.bf16.mxu0 0
        %1494 = vmatpush1.bf16.xpose.msra.mxu0 %v1491
        %1495 = vmatprep.subr.bf16.mxu0 0
        %1496 = vmatpush1.bf16.xpose.msra.mxu0 0
        %1497 = vmatprep.subr.bf16.mxu0 0
        %1498 = vmatpush1.bf16.xpose.msra.mxu0 0
        %1499 = vmatprep.subr.bf16.mxu0 0
        %1500 = vmatpush1.bf16.xpose.msra.mxu0 0
        %1501 = vmatprep.subr.bf16.mxu0 0
        %1502 = vmatpush1.bf16.xpose.msra.mxu0 0
        %1503 = vmatprep.subr.bf16.mxu0 0
        %1504 = vmatpush1.bf16.xpose.msra.mxu0 0
        %1505 = vmatprep.subr.bf16.mxu0 0
        %1506 = vmatpush1.bf16.xpose.msra.mxu0 0
        %1507 = vmatprep.subr.bf16.mxu0 0
        %1508 = vmatpush1.bf16.xpose.msra.mxu0 0
        %1509 = vmatprep.subr.bf16.mxu0 0
        %1510 = vmatpush1.bf16.xpose.msra.mxu0 0
        %1511 = vmatprep.subr.bf16.mxu0 0
        %1512 = vmatpush1.bf16.xpose.msra.mxu0 0
        %1513 = vmatprep.subr.bf16.mxu0 0
        %1514 = vmatpush1.bf16.xpose.msra.mxu0 0
        %1515 = vmatprep.subr.bf16.mxu0 0
        %1516 = vmatpush1.bf16.xpose.msra.mxu0 0
        %1517 = vmatprep.subr.bf16.mxu0 0
        %1518 = vmatpush1.bf16.xpose.msra.mxu0 0
        %1519 = vmatprep.subr.bf16.mxu0 0
        %1520 = vmatpush1.bf16.xpose.msra.mxu0 0
        %1521 = vmatprep.subr.bf16.mxu0 0
        %1522 = vmatpush1.bf16.xpose.msra.mxu0 0
        %1523 = vmatprep.subr.bf16.mxu0 0
        %1524 = vmatpush1.bf16.xpose.msra.mxu0 0
        %1525 = vmatprep.mubr.bf16.mxu0 0
        %1526 = vmatmul.mubr.bf16.gmra.mrb[0].mxu0 %v1488
        %v1527 = vpop.f32.mrb[0].mxu0
        %v1528 = vadd.f32 0.0, %v1527
        %v1529 = vpop.f32.mrb[0].mxu0
        %v1530 = vpop.f32.mrb[0].mxu0
        %v1531 = vadd.f32 0.0, %v1530
        %v1532 = vpop.f32.mrb[0].mxu0
        %1533 = vdwg.mxu0
        %v1534 = vmul.f32 %v1528, 0.5
        %v1535 = vmul.f32 %v1531, 0.5
        %v1536 = vadd.f32 %v1534, %v1090
        %v1537 = vadd.f32 %v1535, %v1090
        %v1538 = vsel %vm1144, %v1536, -inf
        %1539 = vmax.xlane.f32.xlu0 %v1538
        %v1540 = vpop.xlane.xlu0 %1539
        %v1541 = vsel %vm1144, %v1537, -inf
        %1542 = vmax.xlane.f32.xlu0 %v1541
        %v1543 = vpop.xlane.xlu0 %1542
        %v1544 = vsub.f32 %v1536, %v1540
        %v1545 = vsub.f32 %v1537, %v1543
        %v1546 = vmul.f32 %v1544, 1.442695
        %v1547 = vpow.pop %v1546
        %v1548 = vmul.f32 %v1545, 1.442695
        %v1549 = vpow.pop %v1548
        %v1550 = vsel %vm1144, %v1547, 0.0
        %1551 = vadd.xlane.f32.xlu0 %v1550
        %v1552 = vpop.xlane.xlu0 %1551
        %v1553 = vsel %vm1144, %v1549, 0.0
        %1554 = vadd.xlane.f32.xlu0 %v1553
        %v1555 = vpop.xlane.xlu0 %1554
        %v1556 = vrcp.pop %v1552
        %v1557 = vrcp.pop %v1555
        %v1558 = vmul.f32 %v1547, %v1556
        %v1559 = vmul.f32 %v1549, %v1557
        %v1560 = vpack.c.bf16 %v1559, %v1558
        %1561 = vrot.lane.b32.xlu0 %v1084, 84
        %v1562 = vpop.permute.xlu0 %1561
        %v1565 = vsel %vm1144, %v1560, 0
        %1567 = vmatprep.subr.bf16.mxu0 0
        %1568 = vmatpush1.bf16.msra.mxu0 %v1562
        %1569 = vmatprep.subr.bf16.mxu0 0
        %1570 = vmatpush1.bf16.msra.mxu0 0
        %1571 = vmatprep.subr.bf16.mxu0 0
        %1572 = vmatpush1.bf16.msra.mxu0 0
        %1573 = vmatprep.subr.bf16.mxu0 0
        %1574 = vmatpush1.bf16.msra.mxu0 0
        %1575 = vmatprep.subr.bf16.mxu0 0
        %1576 = vmatpush1.bf16.msra.mxu0 0
        %1577 = vmatprep.subr.bf16.mxu0 0
        %1578 = vmatpush1.bf16.msra.mxu0 0
        %1579 = vmatprep.subr.bf16.mxu0 0
        %1580 = vmatpush1.bf16.msra.mxu0 0
        %1581 = vmatprep.subr.bf16.mxu0 0
        %1582 = vmatpush1.bf16.msra.mxu0 0
        %1583 = vmatprep.subr.bf16.mxu0 0
        %1584 = vmatpush1.bf16.msra.mxu0 0
        %1585 = vmatprep.subr.bf16.mxu0 0
        %1586 = vmatpush1.bf16.msra.mxu0 0
        %1587 = vmatprep.subr.bf16.mxu0 0
        %1588 = vmatpush1.bf16.msra.mxu0 0
        %1589 = vmatprep.subr.bf16.mxu0 0
        %1590 = vmatpush1.bf16.msra.mxu0 0
        %1591 = vmatprep.subr.bf16.mxu0 0
        %1592 = vmatpush1.bf16.msra.mxu0 0
        %1593 = vmatprep.subr.bf16.mxu0 0
        %1594 = vmatpush1.bf16.msra.mxu0 0
        %1595 = vmatprep.subr.bf16.mxu0 0
        %1596 = vmatpush1.bf16.msra.mxu0 0
        %1597 = vmatprep.subr.bf16.mxu0 0
        %1598 = vmatpush1.bf16.msra.mxu0 0
        %1599 = vmatprep.mubr.bf16.mxu0 0
        %1600 = vmatmul.mubr.bf16.gmra.mrb[0].mxu0 %v1565
        %v1601 = vpop.f32.mrb[0].mxu0
        %v1602 = vadd.f32 0.0, %v1601
        %v1603 = vpop.f32.mrb[0].mxu0
        %v1604 = vpop.f32.mrb[0].mxu0
        %v1605 = vadd.f32 0.0, %v1604
        %v1606 = vpop.f32.mrb[0].mxu0
        %1607 = vdwg.mxu0
        %v1608 = vpack.c.bf16 %v1605, %v1602
        %1610 = vrot.lane.b32.xlu0 %v1608, 12
        %v1611 = vpop.permute.xlu0 %1610
        %vm1613 = vcmask 130144
        %1614 = vst.msk [vmem:[#allocation4] sm:$0xff] %vm1613, %v1611
        %1615 = vrot.lane.b32.xlu0 %v1085, 112
        %v1616 = vpop.permute.xlu0 %1615
        %1617 = vrot.lane.b32.xlu0 %v1084, 112
        %v1618 = vpop.permute.xlu0 %1617
        %v1620 = vsel %vm1092, %v1616, 0
        %v1623 = vsel %vm1092, %v1618, 0
        %1625 = vmatprep.subr.bf16.mxu0 0
        %1626 = vmatpush1.bf16.xpose.msra.mxu0 %v1623
        %1627 = vmatprep.subr.bf16.mxu0 0
        %1628 = vmatpush1.bf16.xpose.msra.mxu0 0
        %1629 = vmatprep.subr.bf16.mxu0 0
        %1630 = vmatpush1.bf16.xpose.msra.mxu0 0
        %1631 = vmatprep.subr.bf16.mxu0 0
        %1632 = vmatpush1.bf16.xpose.msra.mxu0 0
        %1633 = vmatprep.subr.bf16.mxu0 0
        %1634 = vmatpush1.bf16.xpose.msra.mxu0 0
        %1635 = vmatprep.subr.bf16.mxu0 0
        %1636 = vmatpush1.bf16.xpose.msra.mxu0 0
        %1637 = vmatprep.subr.bf16.mxu0 0
        %1638 = vmatpush1.bf16.xpose.msra.mxu0 0
        %1639 = vmatprep.subr.bf16.mxu0 0
        %1640 = vmatpush1.bf16.xpose.msra.mxu0 0
        %1641 = vmatprep.subr.bf16.mxu0 0
        %1642 = vmatpush1.bf16.xpose.msra.mxu0 0
        %1643 = vmatprep.subr.bf16.mxu0 0
        %1644 = vmatpush1.bf16.xpose.msra.mxu0 0
        %1645 = vmatprep.subr.bf16.mxu0 0
        %1646 = vmatpush1.bf16.xpose.msra.mxu0 0
        %1647 = vmatprep.subr.bf16.mxu0 0
        %1648 = vmatpush1.bf16.xpose.msra.mxu0 0
        %1649 = vmatprep.subr.bf16.mxu0 0
        %1650 = vmatpush1.bf16.xpose.msra.mxu0 0
        %1651 = vmatprep.subr.bf16.mxu0 0
        %1652 = vmatpush1.bf16.xpose.msra.mxu0 0
        %1653 = vmatprep.subr.bf16.mxu0 0
        %1654 = vmatpush1.bf16.xpose.msra.mxu0 0
        %1655 = vmatprep.subr.bf16.mxu0 0
        %1656 = vmatpush1.bf16.xpose.msra.mxu0 0
        %1657 = vmatprep.mubr.bf16.mxu0 0
        %1658 = vmatmul.mubr.bf16.gmra.mrb[0].mxu0 %v1620
        %v1659 = vpop.f32.mrb[0].mxu0
        %v1660 = vadd.f32 0.0, %v1659
        %v1661 = vpop.f32.mrb[0].mxu0
        %v1662 = vpop.f32.mrb[0].mxu0
        %v1663 = vadd.f32 0.0, %v1662
        %v1664 = vpop.f32.mrb[0].mxu0
        %1665 = vdwg.mxu0
        %v1666 = vmul.f32 %v1660, 0.5
        %v1667 = vmul.f32 %v1663, 0.5
        %v1668 = vadd.f32 %v1666, %v1090
        %v1669 = vadd.f32 %v1667, %v1090
        %v1670 = vsel %vm1144, %v1668, -inf
        %1671 = vmax.xlane.f32.xlu0 %v1670
        %v1672 = vpop.xlane.xlu0 %1671
        %v1673 = vsel %vm1144, %v1669, -inf
        %1674 = vmax.xlane.f32.xlu0 %v1673
        %v1675 = vpop.xlane.xlu0 %1674
        %v1676 = vsub.f32 %v1668, %v1672
        %v1677 = vsub.f32 %v1669, %v1675
        %v1678 = vmul.f32 %v1676, 1.442695
        %v1679 = vpow.pop %v1678
        %v1680 = vmul.f32 %v1677, 1.442695
        %v1681 = vpow.pop %v1680
        %v1682 = vsel %vm1144, %v1679, 0.0
        %1683 = vadd.xlane.f32.xlu0 %v1682
        %v1684 = vpop.xlane.xlu0 %1683
        %v1685 = vsel %vm1144, %v1681, 0.0
        %1686 = vadd.xlane.f32.xlu0 %v1685
        %v1687 = vpop.xlane.xlu0 %1686
        %v1688 = vrcp.pop %v1684
        %v1689 = vrcp.pop %v1687
        %v1690 = vmul.f32 %v1679, %v1688
        %v1691 = vmul.f32 %v1681, %v1689
        %v1692 = vpack.c.bf16 %v1691, %v1690
        %1693 = vrot.lane.b32.xlu0 %v1084, 80
        %v1694 = vpop.permute.xlu0 %1693
        %v1697 = vsel %vm1144, %v1692, 0
        %1699 = vmatprep.subr.bf16.mxu0 0
        %1700 = vmatpush1.bf16.msra.mxu0 %v1694
        %1701 = vmatprep.subr.bf16.mxu0 0
        %1702 = vmatpush1.bf16.msra.mxu0 0
        %1703 = vmatprep.subr.bf16.mxu0 0
        %1704 = vmatpush1.bf16.msra.mxu0 0
        %1705 = vmatprep.subr.bf16.mxu0 0
        %1706 = vmatpush1.bf16.msra.mxu0 0
        %1707 = vmatprep.subr.bf16.mxu0 0
        %1708 = vmatpush1.bf16.msra.mxu0 0
        %1709 = vmatprep.subr.bf16.mxu0 0
        %1710 = vmatpush1.bf16.msra.mxu0 0
        %1711 = vmatprep.subr.bf16.mxu0 0
        %1712 = vmatpush1.bf16.msra.mxu0 0
        %1713 = vmatprep.subr.bf16.mxu0 0
        %1714 = vmatpush1.bf16.msra.mxu0 0
        %1715 = vmatprep.subr.bf16.mxu0 0
        %1716 = vmatpush1.bf16.msra.mxu0 0
        %1717 = vmatprep.subr.bf16.mxu0 0
        %1718 = vmatpush1.bf16.msra.mxu0 0
        %1719 = vmatprep.subr.bf16.mxu0 0
        %1720 = vmatpush1.bf16.msra.mxu0 0
        %1721 = vmatprep.subr.bf16.mxu0 0
        %1722 = vmatpush1.bf16.msra.mxu0 0
        %1723 = vmatprep.subr.bf16.mxu0 0
        %1724 = vmatpush1.bf16.msra.mxu0 0
        %1725 = vmatprep.subr.bf16.mxu0 0
        %1726 = vmatpush1.bf16.msra.mxu0 0
        %1727 = vmatprep.subr.bf16.mxu0 0
        %1728 = vmatpush1.bf16.msra.mxu0 0
        %1729 = vmatprep.subr.bf16.mxu0 0
        %1730 = vmatpush1.bf16.msra.mxu0 0
        %1731 = vmatprep.mubr.bf16.mxu0 0
        %1732 = vmatmul.mubr.bf16.gmra.mrb[0].mxu0 %v1697
        %v1733 = vpop.f32.mrb[0].mxu0
        %v1734 = vadd.f32 0.0, %v1733
        %v1735 = vpop.f32.mrb[0].mxu0
        %v1736 = vpop.f32.mrb[0].mxu0
        %v1737 = vadd.f32 0.0, %v1736
        %v1738 = vpop.f32.mrb[0].mxu0
        %1739 = vdwg.mxu0
        %v1740 = vpack.c.bf16 %v1737, %v1734
        %1742 = vrot.lane.b32.xlu0 %v1740, 16
        %v1743 = vpop.permute.xlu0 %1742
        %vm1745 = vcmask 162944
        %1746 = vst.msk [vmem:[#allocation4] sm:$0xff] %vm1745, %v1743
        %1747 = vrot.lane.b32.xlu0 %v1085, 108
        %v1748 = vpop.permute.xlu0 %1747
        %1749 = vrot.lane.b32.xlu0 %v1084, 108
        %v1750 = vpop.permute.xlu0 %1749
        %v1752 = vsel %vm1092, %v1748, 0
        %v1755 = vsel %vm1092, %v1750, 0
        %1757 = vmatprep.subr.bf16.mxu0 0
        %1758 = vmatpush1.bf16.xpose.msra.mxu0 %v1755
        %1759 = vmatprep.subr.bf16.mxu0 0
        %1760 = vmatpush1.bf16.xpose.msra.mxu0 0
        %1761 = vmatprep.subr.bf16.mxu0 0
        %1762 = vmatpush1.bf16.xpose.msra.mxu0 0
        %1763 = vmatprep.subr.bf16.mxu0 0
        %1764 = vmatpush1.bf16.xpose.msra.mxu0 0
        %1765 = vmatprep.subr.bf16.mxu0 0
        %1766 = vmatpush1.bf16.xpose.msra.mxu0 0
        %1767 = vmatprep.subr.bf16.mxu0 0
        %1768 = vmatpush1.bf16.xpose.msra.mxu0 0
        %1769 = vmatprep.subr.bf16.mxu0 0
        %1770 = vmatpush1.bf16.xpose.msra.mxu0 0
        %1771 = vmatprep.subr.bf16.mxu0 0
        %1772 = vmatpush1.bf16.xpose.msra.mxu0 0
        %1773 = vmatprep.subr.bf16.mxu0 0
        %1774 = vmatpush1.bf16.xpose.msra.mxu0 0
        %1775 = vmatprep.subr.bf16.mxu0 0
        %1776 = vmatpush1.bf16.xpose.msra.mxu0 0
        %1777 = vmatprep.subr.bf16.mxu0 0
        %1778 = vmatpush1.bf16.xpose.msra.mxu0 0
        %1779 = vmatprep.subr.bf16.mxu0 0
        %1780 = vmatpush1.bf16.xpose.msra.mxu0 0
        %1781 = vmatprep.subr.bf16.mxu0 0
        %1782 = vmatpush1.bf16.xpose.msra.mxu0 0
        %1783 = vmatprep.subr.bf16.mxu0 0
        %1784 = vmatpush1.bf16.xpose.msra.mxu0 0
        %1785 = vmatprep.subr.bf16.mxu0 0
        %1786 = vmatpush1.bf16.xpose.msra.mxu0 0
        %1787 = vmatprep.subr.bf16.mxu0 0
        %1788 = vmatpush1.bf16.xpose.msra.mxu0 0
        %1789 = vmatprep.mubr.bf16.mxu0 0
        %1790 = vmatmul.mubr.bf16.gmra.mrb[0].mxu0 %v1752
        %v1791 = vpop.f32.mrb[0].mxu0
        %v1792 = vadd.f32 0.0, %v1791
        %v1793 = vpop.f32.mrb[0].mxu0
        %v1794 = vpop.f32.mrb[0].mxu0
        %v1795 = vadd.f32 0.0, %v1794
        %v1796 = vpop.f32.mrb[0].mxu0
        %1797 = vdwg.mxu0
        %v1798 = vmul.f32 %v1792, 0.5
        %v1799 = vmul.f32 %v1795, 0.5
        %v1800 = vadd.f32 %v1798, %v1090
        %v1801 = vadd.f32 %v1799, %v1090
        %v1802 = vsel %vm1144, %v1800, -inf
        %1803 = vmax.xlane.f32.xlu0 %v1802
        %v1804 = vpop.xlane.xlu0 %1803
        %v1805 = vsel %vm1144, %v1801, -inf
        %1806 = vmax.xlane.f32.xlu0 %v1805
        %v1807 = vpop.xlane.xlu0 %1806
        %v1808 = vsub.f32 %v1800, %v1804
        %v1809 = vsub.f32 %v1801, %v1807
        %v1810 = vmul.f32 %v1808, 1.442695
        %v1811 = vpow.pop %v1810
        %v1812 = vmul.f32 %v1809, 1.442695
        %v1813 = vpow.pop %v1812
        %v1814 = vsel %vm1144, %v1811, 0.0
        %1815 = vadd.xlane.f32.xlu0 %v1814
        %v1816 = vpop.xlane.xlu0 %1815
        %v1817 = vsel %vm1144, %v1813, 0.0
        %1818 = vadd.xlane.f32.xlu0 %v1817
        %v1819 = vpop.xlane.xlu0 %1818
        %v1820 = vrcp.pop %v1816
        %v1821 = vrcp.pop %v1819
        %v1822 = vmul.f32 %v1811, %v1820
        %v1823 = vmul.f32 %v1813, %v1821
        %v1824 = vpack.c.bf16 %v1823, %v1822
        %1825 = vrot.lane.b32.xlu0 %v1084, 76
        %v1826 = vpop.permute.xlu0 %1825
        %v1829 = vsel %vm1144, %v1824, 0
        %1831 = vmatprep.subr.bf16.mxu0 0
        %1832 = vmatpush1.bf16.msra.mxu0 %v1826
        %1833 = vmatprep.subr.bf16.mxu0 0
        %1834 = vmatpush1.bf16.msra.mxu0 0
        %1835 = vmatprep.subr.bf16.mxu0 0
        %1836 = vmatpush1.bf16.msra.mxu0 0
        %1837 = vmatprep.subr.bf16.mxu0 0
        %1838 = vmatpush1.bf16.msra.mxu0 0
        %1839 = vmatprep.subr.bf16.mxu0 0
        %1840 = vmatpush1.bf16.msra.mxu0 0
        %1841 = vmatprep.subr.bf16.mxu0 0
        %1842 = vmatpush1.bf16.msra.mxu0 0
        %1843 = vmatprep.subr.bf16.mxu0 0
        %1844 = vmatpush1.bf16.msra.mxu0 0
        %1845 = vmatprep.subr.bf16.mxu0 0
        %1846 = vmatpush1.bf16.msra.mxu0 0
        %1847 = vmatprep.subr.bf16.mxu0 0
        %1848 = vmatpush1.bf16.msra.mxu0 0
        %1849 = vmatprep.subr.bf16.mxu0 0
        %1850 = vmatpush1.bf16.msra.mxu0 0
        %1851 = vmatprep.subr.bf16.mxu0 0
        %1852 = vmatpush1.bf16.msra.mxu0 0
        %1853 = vmatprep.subr.bf16.mxu0 0
        %1854 = vmatpush1.bf16.msra.mxu0 0
        %1855 = vmatprep.subr.bf16.mxu0 0
        %1856 = vmatpush1.bf16.msra.mxu0 0
        %1857 = vmatprep.subr.bf16.mxu0 0
        %1858 = vmatpush1.bf16.msra.mxu0 0
        %1859 = vmatprep.subr.bf16.mxu0 0
        %1860 = vmatpush1.bf16.msra.mxu0 0
        %1861 = vmatprep.subr.bf16.mxu0 0
        %1862 = vmatpush1.bf16.msra.mxu0 0
        %1863 = vmatprep.mubr.bf16.mxu0 0
        %1864 = vmatmul.mubr.bf16.gmra.mrb[0].mxu0 %v1829
        %v1865 = vpop.f32.mrb[0].mxu0
        %v1866 = vadd.f32 0.0, %v1865
        %v1867 = vpop.f32.mrb[0].mxu0
        %v1868 = vpop.f32.mrb[0].mxu0
        %v1869 = vadd.f32 0.0, %v1868
        %v1870 = vpop.f32.mrb[0].mxu0
        %1871 = vdwg.mxu0
        %v1872 = vpack.c.bf16 %v1869, %v1866
        %1874 = vrot.lane.b32.xlu0 %v1872, 20
        %v1875 = vpop.permute.xlu0 %1874
        %vm1877 = vcmask 195744
        %1878 = vst.msk [vmem:[#allocation4] sm:$0xff] %vm1877, %v1875
        %1879 = vrot.lane.b32.xlu0 %v1085, 104
        %v1880 = vpop.permute.xlu0 %1879
        %1881 = vrot.lane.b32.xlu0 %v1084, 104
        %v1882 = vpop.permute.xlu0 %1881
        %v1884 = vsel %vm1092, %v1880, 0
        %v1887 = vsel %vm1092, %v1882, 0
        %1889 = vmatprep.subr.bf16.mxu0 0
        %1890 = vmatpush1.bf16.xpose.msra.mxu0 %v1887
        %1891 = vmatprep.subr.bf16.mxu0 0
        %1892 = vmatpush1.bf16.xpose.msra.mxu0 0
        %1893 = vmatprep.subr.bf16.mxu0 0
        %1894 = vmatpush1.bf16.xpose.msra.mxu0 0
        %1895 = vmatprep.subr.bf16.mxu0 0
        %1896 = vmatpush1.bf16.xpose.msra.mxu0 0
        %1897 = vmatprep.subr.bf16.mxu0 0
        %1898 = vmatpush1.bf16.xpose.msra.mxu0 0
        %1899 = vmatprep.subr.bf16.mxu0 0
        %1900 = vmatpush1.bf16.xpose.msra.mxu0 0
        %1901 = vmatprep.subr.bf16.mxu0 0
        %1902 = vmatpush1.bf16.xpose.msra.mxu0 0
        %1903 = vmatprep.subr.bf16.mxu0 0
        %1904 = vmatpush1.bf16.xpose.msra.mxu0 0
        %1905 = vmatprep.subr.bf16.mxu0 0
        %1906 = vmatpush1.bf16.xpose.msra.mxu0 0
        %1907 = vmatprep.subr.bf16.mxu0 0
        %1908 = vmatpush1.bf16.xpose.msra.mxu0 0
        %1909 = vmatprep.subr.bf16.mxu0 0
        %1910 = vmatpush1.bf16.xpose.msra.mxu0 0
        %1911 = vmatprep.subr.bf16.mxu0 0
        %1912 = vmatpush1.bf16.xpose.msra.mxu0 0
        %1913 = vmatprep.subr.bf16.mxu0 0
        %1914 = vmatpush1.bf16.xpose.msra.mxu0 0
        %1915 = vmatprep.subr.bf16.mxu0 0
        %1916 = vmatpush1.bf16.xpose.msra.mxu0 0
        %1917 = vmatprep.subr.bf16.mxu0 0
        %1918 = vmatpush1.bf16.xpose.msra.mxu0 0
        %1919 = vmatprep.subr.bf16.mxu0 0
        %1920 = vmatpush1.bf16.xpose.msra.mxu0 0
        %1921 = vmatprep.mubr.bf16.mxu0 0
        %1922 = vmatmul.mubr.bf16.gmra.mrb[0].mxu0 %v1884
        %v1923 = vpop.f32.mrb[0].mxu0
        %v1924 = vadd.f32 0.0, %v1923
        %v1925 = vpop.f32.mrb[0].mxu0
        %v1926 = vpop.f32.mrb[0].mxu0
        %v1927 = vadd.f32 0.0, %v1926
        %v1928 = vpop.f32.mrb[0].mxu0
        %1929 = vdwg.mxu0
        %v1930 = vmul.f32 %v1924, 0.5
        %v1931 = vmul.f32 %v1927, 0.5
        %v1932 = vadd.f32 %v1930, %v1090
        %v1933 = vadd.f32 %v1931, %v1090
        %v1934 = vsel %vm1144, %v1932, -inf
        %1935 = vmax.xlane.f32.xlu0 %v1934
        %v1936 = vpop.xlane.xlu0 %1935
        %v1937 = vsel %vm1144, %v1933, -inf
        %1938 = vmax.xlane.f32.xlu0 %v1937
        %v1939 = vpop.xlane.xlu0 %1938
        %v1940 = vsub.f32 %v1932, %v1936
        %v1941 = vsub.f32 %v1933, %v1939
        %v1942 = vmul.f32 %v1940, 1.442695
        %v1943 = vpow.pop %v1942
        %v1944 = vmul.f32 %v1941, 1.442695
        %v1945 = vpow.pop %v1944
        %v1946 = vsel %vm1144, %v1943, 0.0
        %1947 = vadd.xlane.f32.xlu0 %v1946
        %v1948 = vpop.xlane.xlu0 %1947
        %v1949 = vsel %vm1144, %v1945, 0.0
        %1950 = vadd.xlane.f32.xlu0 %v1949
        %v1951 = vpop.xlane.xlu0 %1950
        %v1952 = vrcp.pop %v1948
        %v1953 = vrcp.pop %v1951
        %v1954 = vmul.f32 %v1943, %v1952
        %v1955 = vmul.f32 %v1945, %v1953
        %v1956 = vpack.c.bf16 %v1955, %v1954
        %1957 = vrot.lane.b32.xlu0 %v1084, 72
        %v1958 = vpop.permute.xlu0 %1957
        %v1961 = vsel %vm1144, %v1956, 0
        %1963 = vmatprep.subr.bf16.mxu0 0
        %1964 = vmatpush1.bf16.msra.mxu0 %v1958
        %1965 = vmatprep.subr.bf16.mxu0 0
        %1966 = vmatpush1.bf16.msra.mxu0 0
        %1967 = vmatprep.subr.bf16.mxu0 0
        %1968 = vmatpush1.bf16.msra.mxu0 0
        %1969 = vmatprep.subr.bf16.mxu0 0
        %1970 = vmatpush1.bf16.msra.mxu0 0
        %1971 = vmatprep.subr.bf16.mxu0 0
        %1972 = vmatpush1.bf16.msra.mxu0 0
        %1973 = vmatprep.subr.bf16.mxu0 0
        %1974 = vmatpush1.bf16.msra.mxu0 0
        %1975 = vmatprep.subr.bf16.mxu0 0
        %1976 = vmatpush1.bf16.msra.mxu0 0
        %1977 = vmatprep.subr.bf16.mxu0 0
        %1978 = vmatpush1.bf16.msra.mxu0 0
        %1979 = vmatprep.subr.bf16.mxu0 0
        %1980 = vmatpush1.bf16.msra.mxu0 0
        %1981 = vmatprep.subr.bf16.mxu0 0
        %1982 = vmatpush1.bf16.msra.mxu0 0
        %1983 = vmatprep.subr.bf16.mxu0 0
        %1984 = vmatpush1.bf16.msra.mxu0 0
        %1985 = vmatprep.subr.bf16.mxu0 0
        %1986 = vmatpush1.bf16.msra.mxu0 0
        %1987 = vmatprep.subr.bf16.mxu0 0
        %1988 = vmatpush1.bf16.msra.mxu0 0
        %1989 = vmatprep.subr.bf16.mxu0 0
        %1990 = vmatpush1.bf16.msra.mxu0 0
        %1991 = vmatprep.subr.bf16.mxu0 0
        %1992 = vmatpush1.bf16.msra.mxu0 0
        %1993 = vmatprep.subr.bf16.mxu0 0
        %1994 = vmatpush1.bf16.msra.mxu0 0
        %1995 = vmatprep.mubr.bf16.mxu0 0
        %1996 = vmatmul.mubr.bf16.gmra.mrb[0].mxu0 %v1961
        %v1997 = vpop.f32.mrb[0].mxu0
        %v1998 = vadd.f32 0.0, %v1997
        %v1999 = vpop.f32.mrb[0].mxu0
        %v2000 = vpop.f32.mrb[0].mxu0
        %v2001 = vadd.f32 0.0, %v2000
        %v2002 = vpop.f32.mrb[0].mxu0
        %2003 = vdwg.mxu0
        %v2004 = vpack.c.bf16 %v2001, %v1998
        %2006 = vrot.lane.b32.xlu0 %v2004, 24
        %v2007 = vpop.permute.xlu0 %2006
        %vm2009 = vcmask 228544
        %2010 = vst.msk [vmem:[#allocation4] sm:$0xff] %vm2009, %v2007
        %2011 = vrot.lane.b32.xlu0 %v1085, 100
        %v2012 = vpop.permute.xlu0 %2011
        %2013 = vrot.lane.b32.xlu0 %v1084, 100
        %v2014 = vpop.permute.xlu0 %2013
        %v2016 = vsel %vm1092, %v2012, 0
        %v2019 = vsel %vm1092, %v2014, 0
        %2021 = vmatprep.subr.bf16.mxu0 0
        %2022 = vmatpush1.bf16.xpose.msra.mxu0 %v2019
        %2023 = vmatprep.subr.bf16.mxu0 0
        %2024 = vmatpush1.bf16.xpose.msra.mxu0 0
        %2025 = vmatprep.subr.bf16.mxu0 0
        %2026 = vmatpush1.bf16.xpose.msra.mxu0 0
        %2027 = vmatprep.subr.bf16.mxu0 0
        %2028 = vmatpush1.bf16.xpose.msra.mxu0 0
        %2029 = vmatprep.subr.bf16.mxu0 0
        %2030 = vmatpush1.bf16.xpose.msra.mxu0 0
        %2031 = vmatprep.subr.bf16.mxu0 0
        %2032 = vmatpush1.bf16.xpose.msra.mxu0 0
        %2033 = vmatprep.subr.bf16.mxu0 0
        %2034 = vmatpush1.bf16.xpose.msra.mxu0 0
        %2035 = vmatprep.subr.bf16.mxu0 0
        %2036 = vmatpush1.bf16.xpose.msra.mxu0 0
        %2037 = vmatprep.subr.bf16.mxu0 0
        %2038 = vmatpush1.bf16.xpose.msra.mxu0 0
        %2039 = vmatprep.subr.bf16.mxu0 0
        %2040 = vmatpush1.bf16.xpose.msra.mxu0 0
        %2041 = vmatprep.subr.bf16.mxu0 0
        %2042 = vmatpush1.bf16.xpose.msra.mxu0 0
        %2043 = vmatprep.subr.bf16.mxu0 0
        %2044 = vmatpush1.bf16.xpose.msra.mxu0 0
        %2045 = vmatprep.subr.bf16.mxu0 0
        %2046 = vmatpush1.bf16.xpose.msra.mxu0 0
        %2047 = vmatprep.subr.bf16.mxu0 0
        %2048 = vmatpush1.bf16.xpose.msra.mxu0 0
        %2049 = vmatprep.subr.bf16.mxu0 0
        %2050 = vmatpush1.bf16.xpose.msra.mxu0 0
        %2051 = vmatprep.subr.bf16.mxu0 0
        %2052 = vmatpush1.bf16.xpose.msra.mxu0 0
        %2053 = vmatprep.mubr.bf16.mxu0 0
        %2054 = vmatmul.mubr.bf16.gmra.mrb[0].mxu0 %v2016
        %v2055 = vpop.f32.mrb[0].mxu0
        %v2056 = vadd.f32 0.0, %v2055
        %v2057 = vpop.f32.mrb[0].mxu0
        %v2058 = vpop.f32.mrb[0].mxu0
        %v2059 = vadd.f32 0.0, %v2058
        %v2060 = vpop.f32.mrb[0].mxu0
        %2061 = vdwg.mxu0
        %v2062 = vmul.f32 %v2056, 0.5
        %v2063 = vmul.f32 %v2059, 0.5
        %v2064 = vadd.f32 %v2062, %v1090
        %v2065 = vadd.f32 %v2063, %v1090
        %v2066 = vsel %vm1144, %v2064, -inf
        %2067 = vmax.xlane.f32.xlu0 %v2066
        %v2068 = vpop.xlane.xlu0 %2067
        %v2069 = vsel %vm1144, %v2065, -inf
        %2070 = vmax.xlane.f32.xlu0 %v2069
        %v2071 = vpop.xlane.xlu0 %2070
        %v2072 = vsub.f32 %v2064, %v2068
        %v2073 = vsub.f32 %v2065, %v2071
        %v2074 = vmul.f32 %v2072, 1.442695
        %v2075 = vpow.pop %v2074
        %v2076 = vmul.f32 %v2073, 1.442695
        %v2077 = vpow.pop %v2076
        %v2078 = vsel %vm1144, %v2075, 0.0
        %2079 = vadd.xlane.f32.xlu0 %v2078
        %v2080 = vpop.xlane.xlu0 %2079
        %v2081 = vsel %vm1144, %v2077, 0.0
        %2082 = vadd.xlane.f32.xlu0 %v2081
        %v2083 = vpop.xlane.xlu0 %2082
        %v2084 = vrcp.pop %v2080
        %v2085 = vrcp.pop %v2083
        %v2086 = vmul.f32 %v2075, %v2084
        %v2087 = vmul.f32 %v2077, %v2085
        %v2088 = vpack.c.bf16 %v2087, %v2086
        %2089 = vrot.lane.b32.xlu0 %v1084, 68
        %v2090 = vpop.permute.xlu0 %2089
        %v2093 = vsel %vm1144, %v2088, 0
        %2095 = vmatprep.subr.bf16.mxu0 0
        %2096 = vmatpush1.bf16.msra.mxu0 %v2090
        %2097 = vmatprep.subr.bf16.mxu0 0
        %2098 = vmatpush1.bf16.msra.mxu0 0
        %2099 = vmatprep.subr.bf16.mxu0 0
        %2100 = vmatpush1.bf16.msra.mxu0 0
        %2101 = vmatprep.subr.bf16.mxu0 0
        %2102 = vmatpush1.bf16.msra.mxu0 0
        %2103 = vmatprep.subr.bf16.mxu0 0
        %2104 = vmatpush1.bf16.msra.mxu0 0
        %2105 = vmatprep.subr.bf16.mxu0 0
        %2106 = vmatpush1.bf16.msra.mxu0 0
        %2107 = vmatprep.subr.bf16.mxu0 0
        %2108 = vmatpush1.bf16.msra.mxu0 0
        %2109 = vmatprep.subr.bf16.mxu0 0
        %2110 = vmatpush1.bf16.msra.mxu0 0
        %2111 = vmatprep.subr.bf16.mxu0 0
        %2112 = vmatpush1.bf16.msra.mxu0 0
        %2113 = vmatprep.subr.bf16.mxu0 0
        %2114 = vmatpush1.bf16.msra.mxu0 0
        %2115 = vmatprep.subr.bf16.mxu0 0
        %2116 = vmatpush1.bf16.msra.mxu0 0
        %2117 = vmatprep.subr.bf16.mxu0 0
        %2118 = vmatpush1.bf16.msra.mxu0 0
        %2119 = vmatprep.subr.bf16.mxu0 0
        %2120 = vmatpush1.bf16.msra.mxu0 0
        %2121 = vmatprep.subr.bf16.mxu0 0
        %2122 = vmatpush1.bf16.msra.mxu0 0
        %2123 = vmatprep.subr.bf16.mxu0 0
        %2124 = vmatpush1.bf16.msra.mxu0 0
        %2125 = vmatprep.subr.bf16.mxu0 0
        %2126 = vmatpush1.bf16.msra.mxu0 0
        %2127 = vmatprep.mubr.bf16.mxu0 0
        %2128 = vmatmul.mubr.bf16.gmra.mrb[0].mxu0 %v2093
        %v2129 = vpop.f32.mrb[0].mxu0
        %v2130 = vadd.f32 0.0, %v2129
        %v2131 = vpop.f32.mrb[0].mxu0
        %v2132 = vpop.f32.mrb[0].mxu0
        %v2133 = vadd.f32 0.0, %v2132
        %v2134 = vpop.f32.mrb[0].mxu0
        %2135 = vdwg.mxu0
        %v2136 = vpack.c.bf16 %v2133, %v2130
        %2138 = vrot.lane.b32.xlu0 %v2136, 28
        %v2139 = vpop.permute.xlu0 %2138
        %vm2141 = vcmask 261344
        %2142 = vst.msk [vmem:[#allocation4] sm:$0xff] %vm2141, %v2139
        %v2143 = vld [vmem:[#allocation4] sm:$0xff]
        %v2144 = vld [vmem:[%s8] sm:$0xf]
        %v2145 = vld [vmem:[%s8 + $0x4] sm:$0xf]
        %v2146 = vld [vmem:[%s8 + $0x8] sm:$0xf]
        %v2147 = vld [vmem:[%s8 + $0xc] sm:$0xf]
        %v2148 = vld [vmem:[%s9] sm:$0x1]
        %v2150 = vlaneseq
        %v2151 = vshrl.u32 %v2150, 7
        %v2152 = vsub.s32 0, %v2151
        %v2153 = vrot.slane %v2148, %v2152
        %v2159 = vunpack.c.l.b16 %v2144
        %v2160 = vunpack.c.l.b16 %v2145
        %v2161 = vunpack.c.l.b16 %v2146
        %v2162 = vunpack.c.l.b16 %v2147
        %v2163 = vpack.c.b16 %v2160, %v2159
        %v2164 = vpack.c.b16 %v2162, %v2161
        %v2168 = vsel %vm1039, %v2143, 0
        %2170 = vmatprep.subr.bf16.mxu0 0
        %2171 = vmatpush1.bf16.msra.mxu0 %v2163
        %2172 = vmatprep.subr.bf16.mxu0 0
        %2173 = vmatpush1.bf16.msra.mxu0 %v2164
        %2174 = vmatprep.subr.bf16.mxu0 0
        %2175 = vmatpush1.bf16.msra.mxu0 0
        %2176 = vmatprep.subr.bf16.mxu0 0
        %2177 = vmatpush1.bf16.msra.mxu0 0
        %2178 = vmatprep.subr.bf16.mxu0 0
        %2179 = vmatpush1.bf16.msra.mxu0 0
        %2180 = vmatprep.subr.bf16.mxu0 0
        %2181 = vmatpush1.bf16.msra.mxu0 0
        %2182 = vmatprep.subr.bf16.mxu0 0
        %2183 = vmatpush1.bf16.msra.mxu0 0
        %2184 = vmatprep.subr.bf16.mxu0 0
        %2185 = vmatpush1.bf16.msra.mxu0 0
        %2186 = vmatprep.subr.bf16.mxu0 0
        %2187 = vmatpush1.bf16.msra.mxu0 0
        %2188 = vmatprep.subr.bf16.mxu0 0
        %2189 = vmatpush1.bf16.msra.mxu0 0
        %2190 = vmatprep.subr.bf16.mxu0 0
        %2191 = vmatpush1.bf16.msra.mxu0 0
        %2192 = vmatprep.subr.bf16.mxu0 0
        %2193 = vmatpush1.bf16.msra.mxu0 0
        %2194 = vmatprep.subr.bf16.mxu0 0
        %2195 = vmatpush1.bf16.msra.mxu0 0
        %2196 = vmatprep.subr.bf16.mxu0 0
        %2197 = vmatpush1.bf16.msra.mxu0 0
        %2198 = vmatprep.subr.bf16.mxu0 0
        %2199 = vmatpush1.bf16.msra.mxu0 0
        %2200 = vmatprep.subr.bf16.mxu0 0
        %2201 = vmatpush1.bf16.msra.mxu0 0
        %2202 = vmatprep.mubr.bf16.mxu0 0
        %2203 = vmatmul.mubr.bf16.gmra.mrb[0].mxu0 %v2168
        %v2204 = vpop.f32.mrb[0].mxu0
        %v2205 = vadd.f32 %v2153, %v2204
        %v2206 = vpop.f32.mrb[0].mxu0
        %v2207 = vpop.f32.mrb[0].mxu0
        %v2208 = vadd.f32 %v2153, %v2207
        %v2209 = vpop.f32.mrb[0].mxu0
        %2210 = vdwg.mxu0
        %v2211 = vadd.f32 %v1011, %v2205
        %v2212 = vadd.f32 %v1012, %v2208
        %v2213 = vld [vmem:[%s10] sm:$0x1]
        %v2214 = vld [vmem:[%s11] sm:$0x1]
        %v2215 = vsel %vm1039, %v2211, 0.0
        %2216 = vadd.xlane.f32.xlu0 %v2215
        %v2217 = vpop.xlane.xlu0 %2216
        %v2218 = vsel %vm1039, %v2212, 0.0
        %2219 = vadd.xlane.f32.xlu0 %v2218
        %v2220 = vpop.xlane.xlu0 %2219
        %v2221 = vrcp.pop 32.0
        %v2222 = vmul.f32 %v2217, %v2221
        %v2223 = vmul.f32 %v2220, %v2221
        %v2224 = vsub.f32 %v2211, %v2222
        %v2225 = vsub.f32 %v2212, %v2223
        %v2226 = vmul.f32 %v2224, %v2224
        %v2227 = vmul.f32 %v2225, %v2225
        %v2228 = vsel %vm1039, %v2226, 0.0
        %2229 = vadd.xlane.f32.xlu0 %v2228
        %v2230 = vpop.xlane.xlu0 %2229
        %v2231 = vsel %vm1039, %v2227, 0.0
        %2232 = vadd.xlane.f32.xlu0 %v2231
        %v2233 = vpop.xlane.xlu0 %2232
        %v2234 = vmul.f32 %v2230, 0.032258064
        %v2235 = vmul.f32 %v2233, 0.032258064
        %v2236 = vrsqrt.pop %v2234
        %v2237 = vmul.f32 %v2234, %v2236
        %vm2238 = vcmp.eq.f32.partialorder %v2234, inf
        %v2239 = vsel %vm2238, %v2234, %v2237
        %vm2240 = vcmp.eq.f32.partialorder %v2234, 0.0
        %v2241 = vand.u32 %v2234, 2147483648
        %v2242 = vsel %vm2240, %v2241, %v2239
        %v2243 = vrsqrt.pop %v2235
        %v2244 = vmul.f32 %v2235, %v2243
        %vm2245 = vcmp.eq.f32.partialorder %v2235, inf
        %v2246 = vsel %vm2245, %v2235, %v2244
        %vm2247 = vcmp.eq.f32.partialorder %v2235, 0.0
        %v2248 = vand.u32 %v2235, 2147483648
        %v2249 = vsel %vm2247, %v2248, %v2246
        %v2250 = vadd.f32 %v2242, 1e-06
        %v2251 = vadd.f32 %v2249, 1e-06
        %v2252 = vrcp.pop %v2250
        %v2253 = vmul.f32 %v2224, %v2252
        %v2254 = vrcp.pop %v2251
        %v2255 = vmul.f32 %v2225, %v2254
        %v2257 = vlaneseq
        %v2258 = vshrl.u32 %v2257, 7
        %v2259 = vsub.s32 0, %v2258
        %v2260 = vrot.slane %v2213, %v2259
        %v2262 = vmul.f32 %v2260, %v2253
        %v2263 = vmul.f32 %v2260, %v2255
        %v2265 = vlaneseq
        %v2266 = vshrl.u32 %v2265, 7
        %v2267 = vsub.s32 0, %v2266
        %v2268 = vrot.slane %v2214, %v2267
        %v2270 = vadd.f32 %v2262, %v2268
        %v2271 = vadd.f32 %v2263, %v2268
        %v2272 = vpack.c.bf16 %v2271, %v2270
        %v2273 = vld [vmem:[%s12] sm:$0xf]
        %v2274 = vld [vmem:[%s12 + $0x4] sm:$0xf]
        %v2275 = vld [vmem:[%s12 + $0x8] sm:$0xf]
        %v2276 = vld [vmem:[%s12 + $0xc] sm:$0xf]
        %v2277 = vld [vmem:[%s13] sm:$0x1]
        %v2279 = vlaneseq
        %v2280 = vshrl.u32 %v2279, 7
        %v2281 = vsub.s32 0, %v2280
        %v2282 = vrot.slane %v2277, %v2281
        %v2288 = vunpack.c.l.b16 %v2273
        %v2289 = vunpack.c.l.b16 %v2274
        %v2290 = vunpack.c.l.b16 %v2275
        %v2291 = vunpack.c.l.b16 %v2276
        %v2292 = vpack.c.b16 %v2289, %v2288
        %v2293 = vpack.c.b16 %v2291, %v2290
        %v2297 = vsel %vm1039, %v2272, 0
        %2299 = vmatprep.subr.bf16.mxu0 0
        %2300 = vmatpush1.bf16.msra.mxu0 %v2292
        %2301 = vmatprep.subr.bf16.mxu0 0
        %2302 = vmatpush1.bf16.msra.mxu0 %v2293
        %2303 = vmatprep.subr.bf16.mxu0 0
        %2304 = vmatpush1.bf16.msra.mxu0 0
        %2305 = vmatprep.subr.bf16.mxu0 0
        %2306 = vmatpush1.bf16.msra.mxu0 0
        %2307 = vmatprep.subr.bf16.mxu0 0
        %2308 = vmatpush1.bf16.msra.mxu0 0
        %2309 = vmatprep.subr.bf16.mxu0 0
        %2310 = vmatpush1.bf16.msra.mxu0 0
        %2311 = vmatprep.subr.bf16.mxu0 0
        %2312 = vmatpush1.bf16.msra.mxu0 0
        %2313 = vmatprep.subr.bf16.mxu0 0
        %2314 = vmatpush1.bf16.msra.mxu0 0
        %2315 = vmatprep.subr.bf16.mxu0 0
        %2316 = vmatpush1.bf16.msra.mxu0 0
        %2317 = vmatprep.subr.bf16.mxu0 0
        %2318 = vmatpush1.bf16.msra.mxu0 0
        %2319 = vmatprep.subr.bf16.mxu0 0
        %2320 = vmatpush1.bf16.msra.mxu0 0
        %2321 = vmatprep.subr.bf16.mxu0 0
        %2322 = vmatpush1.bf16.msra.mxu0 0
        %2323 = vmatprep.subr.bf16.mxu0 0
        %2324 = vmatpush1.bf16.msra.mxu0 0
        %2325 = vmatprep.subr.bf16.mxu0 0
        %2326 = vmatpush1.bf16.msra.mxu0 0
        %2327 = vmatprep.subr.bf16.mxu0 0
        %2328 = vmatpush1.bf16.msra.mxu0 0
        %2329 = vmatprep.subr.bf16.mxu0 0
        %2330 = vmatpush1.bf16.msra.mxu0 0
        %2331 = vmatprep.mubr.bf16.mxu0 0
        %2332 = vmatmul.mubr.bf16.gmra.mrb[0].mxu0 %v2297
        %v2333 = vpop.f32.mrb[0].mxu0
        %v2334 = vadd.f32 %v2282, %v2333
        %v2335 = vpop.f32.mrb[0].mxu0
        %v2336 = vpop.f32.mrb[0].mxu0
        %v2337 = vadd.f32 %v2282, %v2336
        %v2338 = vpop.f32.mrb[0].mxu0
        %2339 = vdwg.mxu0
        %v2340 = vld [vmem:[#allocation3] sm:$0xf]
        %v2341 = vpack.c.bf16 %v2337, %v2334
        %v2343 = vlaneseq
        %v2344 = vshrl.u32 %v2343, 7
        %v2345 = vsub.s32 0, %v2344
        %v2346 = vrot.slane %v1014, %v2345
        %v2349 = vsel %vm1092, %v2341, 0
        %v2352 = vsel %vm1092, %v2340, 0
        %2354 = vmatprep.subr.bf16.mxu0 0
        %2355 = vmatpush1.bf16.xpose.msra.mxu0 %v2352
        %2356 = vmatprep.subr.bf16.mxu0 0
        %2357 = vmatpush1.bf16.xpose.msra.mxu0 0
        %2358 = vmatprep.subr.bf16.mxu0 0
        %2359 = vmatpush1.bf16.xpose.msra.mxu0 0
        %2360 = vmatprep.subr.bf16.mxu0 0
        %2361 = vmatpush1.bf16.xpose.msra.mxu0 0
        %2362 = vmatprep.subr.bf16.mxu0 0
        %2363 = vmatpush1.bf16.xpose.msra.mxu0 0
        %2364 = vmatprep.subr.bf16.mxu0 0
        %2365 = vmatpush1.bf16.xpose.msra.mxu0 0
        %2366 = vmatprep.subr.bf16.mxu0 0
        %2367 = vmatpush1.bf16.xpose.msra.mxu0 0
        %2368 = vmatprep.subr.bf16.mxu0 0
        %2369 = vmatpush1.bf16.xpose.msra.mxu0 0
        %2370 = vmatprep.subr.bf16.mxu0 0
        %2371 = vmatpush1.bf16.xpose.msra.mxu0 0
        %2372 = vmatprep.subr.bf16.mxu0 0
        %2373 = vmatpush1.bf16.xpose.msra.mxu0 0
        %2374 = vmatprep.subr.bf16.mxu0 0
        %2375 = vmatpush1.bf16.xpose.msra.mxu0 0
        %2376 = vmatprep.subr.bf16.mxu0 0
        %2377 = vmatpush1.bf16.xpose.msra.mxu0 0
        %2378 = vmatprep.subr.bf16.mxu0 0
        %2379 = vmatpush1.bf16.xpose.msra.mxu0 0
        %2380 = vmatprep.subr.bf16.mxu0 0
        %2381 = vmatpush1.bf16.xpose.msra.mxu0 0
        %2382 = vmatprep.subr.bf16.mxu0 0
        %2383 = vmatpush1.bf16.xpose.msra.mxu0 0
        %2384 = vmatprep.subr.bf16.mxu0 0
        %2385 = vmatpush1.bf16.xpose.msra.mxu0 0
        %2386 = vmatprep.mubr.bf16.mxu0 0
        %2387 = vmatmul.mubr.bf16.gmra.mrb[0].mxu0 %v2349
        %v2388 = vpop.f32.mrb[0].mxu0
        %v2389 = vadd.f32 0.0, %v2388
        %v2390 = vpop.f32.mrb[0].mxu0
        %v2391 = vpop.f32.mrb[0].mxu0
        %v2392 = vadd.f32 0.0, %v2391
        %v2393 = vpop.f32.mrb[0].mxu0
        %2394 = vdwg.mxu0
        %v2395 = vmul.f32 %v2389, 0.5
        %v2396 = vmul.f32 %v2392, 0.5
        %v2397 = vadd.f32 %v2395, %v2346
        %v2398 = vadd.f32 %v2396, %v2346
        %vm2399 = vcmask 64512
        %v2400 = vsel %vm2399, %v2397, -inf
        %2401 = vmax.xlane.f32.xlu0 %v2400
        %v2402 = vpop.xlane.xlu0 %2401
        %v2403 = vsel %vm2399, %v2398, -inf
        %2404 = vmax.xlane.f32.xlu0 %v2403
        %v2405 = vpop.xlane.xlu0 %2404
        %v2406 = vsub.f32 %v2397, %v2402
        %v2407 = vsub.f32 %v2398, %v2405
        %v2408 = vmul.f32 %v2406, 1.442695
        %v2409 = vpow.pop %v2408
        %v2410 = vmul.f32 %v2407, 1.442695
        %v2411 = vpow.pop %v2410
        %v2412 = vsel %vm2399, %v2409, 0.0
        %2413 = vadd.xlane.f32.xlu0 %v2412
        %v2414 = vpop.xlane.xlu0 %2413
        %v2415 = vsel %vm2399, %v2411, 0.0
        %2416 = vadd.xlane.f32.xlu0 %v2415
        %v2417 = vpop.xlane.xlu0 %2416
        %v2418 = vrcp.pop %v2414
        %v2419 = vrcp.pop %v2417
        %v2420 = vmul.f32 %v2409, %v2418
        %v2421 = vmul.f32 %v2411, %v2419
        %v2422 = vpack.c.bf16 %v2421, %v2420
        %v2424 = vunpack.c.l.b16 %v2340
        %v2425 = vpack.c.b16 %v2424, %v2424
        %2426 = vrot.lane.b32.xlu0 %v2425, 96
        %v2427 = vpop.permute.xlu0 %2426
        %v2429 = vsel %vm2399, %v2422, 0
        %vm2431 = vcmask 1043456
        %v2433 = vsel %vm2431, %v2427, 0
        %2435 = vmatprep.subr.bf16.mxu0 0
        %2436 = vmatpush1.bf16.msra.mxu0 %v2433
        %2437 = vmatprep.subr.bf16.mxu0 0
        %2438 = vmatpush1.bf16.msra.mxu0 0
        %2439 = vmatprep.subr.bf16.mxu0 0
        %2440 = vmatpush1.bf16.msra.mxu0 0
        %2441 = vmatprep.subr.bf16.mxu0 0
        %2442 = vmatpush1.bf16.msra.mxu0 0
        %2443 = vmatprep.subr.bf16.mxu0 0
        %2444 = vmatpush1.bf16.msra.mxu0 0
        %2445 = vmatprep.subr.bf16.mxu0 0
        %2446 = vmatpush1.bf16.msra.mxu0 0
        %2447 = vmatprep.subr.bf16.mxu0 0
        %2448 = vmatpush1.bf16.msra.mxu0 0
        %2449 = vmatprep.subr.bf16.mxu0 0
        %2450 = vmatpush1.bf16.msra.mxu0 0
        %2451 = vmatprep.subr.bf16.mxu0 0
        %2452 = vmatpush1.bf16.msra.mxu0 0
        %2453 = vmatprep.subr.bf16.mxu0 0
        %2454 = vmatpush1.bf16.msra.mxu0 0
        %2455 = vmatprep.subr.bf16.mxu0 0
        %2456 = vmatpush1.bf16.msra.mxu0 0
        %2457 = vmatprep.subr.bf16.mxu0 0
        %2458 = vmatpush1.bf16.msra.mxu0 0
        %2459 = vmatprep.subr.bf16.mxu0 0
        %2460 = vmatpush1.bf16.msra.mxu0 0
        %2461 = vmatprep.subr.bf16.mxu0 0
        %2462 = vmatpush1.bf16.msra.mxu0 0
        %2463 = vmatprep.subr.bf16.mxu0 0
        %2464 = vmatpush1.bf16.msra.mxu0 0
        %2465 = vmatprep.subr.bf16.mxu0 0
        %2466 = vmatpush1.bf16.msra.mxu0 0
        %2467 = vmatprep.mubr.bf16.mxu0 0
        %2468 = vmatmul.mubr.bf16.gmra.mrb[0].mxu0 %v2429
        %v2469 = vpop.f32.mrb[0].mxu0
        %v2470 = vadd.f32 0.0, %v2469
        %v2471 = vpop.f32.mrb[0].mxu0
        %v2472 = vpop.f32.mrb[0].mxu0
        %v2473 = vadd.f32 0.0, %v2472
        %v2474 = vpop.f32.mrb[0].mxu0
        %2475 = vdwg.mxu0
        %v2476 = vpack.c.bf16 %v2473, %v2470
        %2477 = vst.msk [vmem:[#allocation4] sm:$0xff] %vm1092, %v2476
        %2479 = vrot.lane.b32.xlu0 %v2341, 124
        %v2480 = vpop.permute.xlu0 %2479
        %2481 = vrot.lane.b32.xlu0 %v2425, 124
        %v2482 = vpop.permute.xlu0 %2481
        %v2484 = vsel %vm1092, %v2480, 0
        %v2487 = vsel %vm1092, %v2482, 0
        %2489 = vmatprep.subr.bf16.mxu0 0
        %2490 = vmatpush1.bf16.xpose.msra.mxu0 %v2487
        %2491 = vmatprep.subr.bf16.mxu0 0
        %2492 = vmatpush1.bf16.xpose.msra.mxu0 0
        %2493 = vmatprep.subr.bf16.mxu0 0
        %2494 = vmatpush1.bf16.xpose.msra.mxu0 0
        %2495 = vmatprep.subr.bf16.mxu0 0
        %2496 = vmatpush1.bf16.xpose.msra.mxu0 0
        %2497 = vmatprep.subr.bf16.mxu0 0
        %2498 = vmatpush1.bf16.xpose.msra.mxu0 0
        %2499 = vmatprep.subr.bf16.mxu0 0
        %2500 = vmatpush1.bf16.xpose.msra.mxu0 0
        %2501 = vmatprep.subr.bf16.mxu0 0
        %2502 = vmatpush1.bf16.xpose.msra.mxu0 0
        %2503 = vmatprep.subr.bf16.mxu0 0
        %2504 = vmatpush1.bf16.xpose.msra.mxu0 0
        %2505 = vmatprep.subr.bf16.mxu0 0
        %2506 = vmatpush1.bf16.xpose.msra.mxu0 0
        %2507 = vmatprep.subr.bf16.mxu0 0
        %2508 = vmatpush1.bf16.xpose.msra.mxu0 0
        %2509 = vmatprep.subr.bf16.mxu0 0
        %2510 = vmatpush1.bf16.xpose.msra.mxu0 0
        %2511 = vmatprep.subr.bf16.mxu0 0
        %2512 = vmatpush1.bf16.xpose.msra.mxu0 0
        %2513 = vmatprep.subr.bf16.mxu0 0
        %2514 = vmatpush1.bf16.xpose.msra.mxu0 0
        %2515 = vmatprep.subr.bf16.mxu0 0
        %2516 = vmatpush1.bf16.xpose.msra.mxu0 0
        %2517 = vmatprep.subr.bf16.mxu0 0
        %2518 = vmatpush1.bf16.xpose.msra.mxu0 0
        %2519 = vmatprep.subr.bf16.mxu0 0
        %2520 = vmatpush1.bf16.xpose.msra.mxu0 0
        %2521 = vmatprep.mubr.bf16.mxu0 0
        %2522 = vmatmul.mubr.bf16.gmra.mrb[0].mxu0 %v2484
        %v2523 = vpop.f32.mrb[0].mxu0
        %v2524 = vadd.f32 0.0, %v2523
        %v2525 = vpop.f32.mrb[0].mxu0
        %v2526 = vpop.f32.mrb[0].mxu0
        %v2527 = vadd.f32 0.0, %v2526
        %v2528 = vpop.f32.mrb[0].mxu0
        %2529 = vdwg.mxu0
        %v2530 = vmul.f32 %v2524, 0.5
        %v2531 = vmul.f32 %v2527, 0.5
        %v2532 = vadd.f32 %v2530, %v2346
        %v2533 = vadd.f32 %v2531, %v2346
        %v2534 = vsel %vm2399, %v2532, -inf
        %2535 = vmax.xlane.f32.xlu0 %v2534
        %v2536 = vpop.xlane.xlu0 %2535
        %v2537 = vsel %vm2399, %v2533, -inf
        %2538 = vmax.xlane.f32.xlu0 %v2537
        %v2539 = vpop.xlane.xlu0 %2538
        %v2540 = vsub.f32 %v2532, %v2536
        %v2541 = vsub.f32 %v2533, %v2539
        %v2542 = vmul.f32 %v2540, 1.442695
        %v2543 = vpow.pop %v2542
        %v2544 = vmul.f32 %v2541, 1.442695
        %v2545 = vpow.pop %v2544
        %v2546 = vsel %vm2399, %v2543, 0.0
        %2547 = vadd.xlane.f32.xlu0 %v2546
        %v2548 = vpop.xlane.xlu0 %2547
        %v2549 = vsel %vm2399, %v2545, 0.0
        %2550 = vadd.xlane.f32.xlu0 %v2549
        %v2551 = vpop.xlane.xlu0 %2550
        %v2552 = vrcp.pop %v2548
        %v2553 = vrcp.pop %v2551
        %v2554 = vmul.f32 %v2543, %v2552
        %v2555 = vmul.f32 %v2545, %v2553
        %v2556 = vpack.c.bf16 %v2555, %v2554
        %2557 = vrot.lane.b32.xlu0 %v2425, 92
        %v2558 = vpop.permute.xlu0 %2557
        %v2560 = vsel %vm2399, %v2556, 0
        %v2563 = vsel %vm2431, %v2558, 0
        %2565 = vmatprep.subr.bf16.mxu0 0
        %2566 = vmatpush1.bf16.msra.mxu0 %v2563
        %2567 = vmatprep.subr.bf16.mxu0 0
        %2568 = vmatpush1.bf16.msra.mxu0 0
        %2569 = vmatprep.subr.bf16.mxu0 0
        %2570 = vmatpush1.bf16.msra.mxu0 0
        %2571 = vmatprep.subr.bf16.mxu0 0
        %2572 = vmatpush1.bf16.msra.mxu0 0
        %2573 = vmatprep.subr.bf16.mxu0 0
        %2574 = vmatpush1.bf16.msra.mxu0 0
        %2575 = vmatprep.subr.bf16.mxu0 0
        %2576 = vmatpush1.bf16.msra.mxu0 0
        %2577 = vmatprep.subr.bf16.mxu0 0
        %2578 = vmatpush1.bf16.msra.mxu0 0
        %2579 = vmatprep.subr.bf16.mxu0 0
        %2580 = vmatpush1.bf16.msra.mxu0 0
        %2581 = vmatprep.subr.bf16.mxu0 0
        %2582 = vmatpush1.bf16.msra.mxu0 0
        %2583 = vmatprep.subr.bf16.mxu0 0
        %2584 = vmatpush1.bf16.msra.mxu0 0
        %2585 = vmatprep.subr.bf16.mxu0 0
        %2586 = vmatpush1.bf16.msra.mxu0 0
        %2587 = vmatprep.subr.bf16.mxu0 0
        %2588 = vmatpush1.bf16.msra.mxu0 0
        %2589 = vmatprep.subr.bf16.mxu0 0
        %2590 = vmatpush1.bf16.msra.mxu0 0
        %2591 = vmatprep.subr.bf16.mxu0 0
        %2592 = vmatpush1.bf16.msra.mxu0 0
        %2593 = vmatprep.subr.bf16.mxu0 0
        %2594 = vmatpush1.bf16.msra.mxu0 0
        %2595 = vmatprep.subr.bf16.mxu0 0
        %2596 = vmatpush1.bf16.msra.mxu0 0
        %2597 = vmatprep.mubr.bf16.mxu0 0
        %2598 = vmatmul.mubr.bf16.gmra.mrb[0].mxu0 %v2560
        %v2599 = vpop.f32.mrb[0].mxu0
        %v2600 = vadd.f32 0.0, %v2599
        %v2601 = vpop.f32.mrb[0].mxu0
        %v2602 = vpop.f32.mrb[0].mxu0
        %v2603 = vadd.f32 0.0, %v2602
        %v2604 = vpop.f32.mrb[0].mxu0
        %2605 = vdwg.mxu0
        %v2606 = vpack.c.bf16 %v2603, %v2600
        %2608 = vrot.lane.b32.xlu0 %v2606, 4
        %v2609 = vpop.permute.xlu0 %2608
        %2611 = vst.msk [vmem:[#allocation4] sm:$0xff] %vm1349, %v2609
        %2612 = vrot.lane.b32.xlu0 %v2341, 120
        %v2613 = vpop.permute.xlu0 %2612
        %2614 = vrot.lane.b32.xlu0 %v2425, 120
        %v2615 = vpop.permute.xlu0 %2614
        %v2617 = vsel %vm1092, %v2613, 0
        %v2620 = vsel %vm1092, %v2615, 0
        %2622 = vmatprep.subr.bf16.mxu0 0
        %2623 = vmatpush1.bf16.xpose.msra.mxu0 %v2620
        %2624 = vmatprep.subr.bf16.mxu0 0
        %2625 = vmatpush1.bf16.xpose.msra.mxu0 0
        %2626 = vmatprep.subr.bf16.mxu0 0
        %2627 = vmatpush1.bf16.xpose.msra.mxu0 0
        %2628 = vmatprep.subr.bf16.mxu0 0
        %2629 = vmatpush1.bf16.xpose.msra.mxu0 0
        %2630 = vmatprep.subr.bf16.mxu0 0
        %2631 = vmatpush1.bf16.xpose.msra.mxu0 0
        %2632 = vmatprep.subr.bf16.mxu0 0
        %2633 = vmatpush1.bf16.xpose.msra.mxu0 0
        %2634 = vmatprep.subr.bf16.mxu0 0
        %2635 = vmatpush1.bf16.xpose.msra.mxu0 0
        %2636 = vmatprep.subr.bf16.mxu0 0
        %2637 = vmatpush1.bf16.xpose.msra.mxu0 0
        %2638 = vmatprep.subr.bf16.mxu0 0
        %2639 = vmatpush1.bf16.xpose.msra.mxu0 0
        %2640 = vmatprep.subr.bf16.mxu0 0
        %2641 = vmatpush1.bf16.xpose.msra.mxu0 0
        %2642 = vmatprep.subr.bf16.mxu0 0
        %2643 = vmatpush1.bf16.xpose.msra.mxu0 0
        %2644 = vmatprep.subr.bf16.mxu0 0
        %2645 = vmatpush1.bf16.xpose.msra.mxu0 0
        %2646 = vmatprep.subr.bf16.mxu0 0
        %2647 = vmatpush1.bf16.xpose.msra.mxu0 0
        %2648 = vmatprep.subr.bf16.mxu0 0
        %2649 = vmatpush1.bf16.xpose.msra.mxu0 0
        %2650 = vmatprep.subr.bf16.mxu0 0
        %2651 = vmatpush1.bf16.xpose.msra.mxu0 0
        %2652 = vmatprep.subr.bf16.mxu0 0
        %2653 = vmatpush1.bf16.xpose.msra.mxu0 0
        %2654 = vmatprep.mubr.bf16.mxu0 0
        %2655 = vmatmul.mubr.bf16.gmra.mrb[0].mxu0 %v2617
        %v2656 = vpop.f32.mrb[0].mxu0
        %v2657 = vadd.f32 0.0, %v2656
        %v2658 = vpop.f32.mrb[0].mxu0
        %v2659 = vpop.f32.mrb[0].mxu0
        %v2660 = vadd.f32 0.0, %v2659
        %v2661 = vpop.f32.mrb[0].mxu0
        %2662 = vdwg.mxu0
        %v2663 = vmul.f32 %v2657, 0.5
        %v2664 = vmul.f32 %v2660, 0.5
        %v2665 = vadd.f32 %v2663, %v2346
        %v2666 = vadd.f32 %v2664, %v2346
        %v2667 = vsel %vm2399, %v2665, -inf
        %2668 = vmax.xlane.f32.xlu0 %v2667
        %v2669 = vpop.xlane.xlu0 %2668
        %v2670 = vsel %vm2399, %v2666, -inf
        %2671 = vmax.xlane.f32.xlu0 %v2670
        %v2672 = vpop.xlane.xlu0 %2671
        %v2673 = vsub.f32 %v2665, %v2669
        %v2674 = vsub.f32 %v2666, %v2672
        %v2675 = vmul.f32 %v2673, 1.442695
        %v2676 = vpow.pop %v2675
        %v2677 = vmul.f32 %v2674, 1.442695
        %v2678 = vpow.pop %v2677
        %v2679 = vsel %vm2399, %v2676, 0.0
        %2680 = vadd.xlane.f32.xlu0 %v2679
        %v2681 = vpop.xlane.xlu0 %2680
        %v2682 = vsel %vm2399, %v2678, 0.0
        %2683 = vadd.xlane.f32.xlu0 %v2682
        %v2684 = vpop.xlane.xlu0 %2683
        %v2685 = vrcp.pop %v2681
        %v2686 = vrcp.pop %v2684
        %v2687 = vmul.f32 %v2676, %v2685
        %v2688 = vmul.f32 %v2678, %v2686
        %v2689 = vpack.c.bf16 %v2688, %v2687
        %2690 = vrot.lane.b32.xlu0 %v2425, 88
        %v2691 = vpop.permute.xlu0 %2690
        %v2693 = vsel %vm2399, %v2689, 0
        %v2696 = vsel %vm2431, %v2691, 0
        %2698 = vmatprep.subr.bf16.mxu0 0
        %2699 = vmatpush1.bf16.msra.mxu0 %v2696
        %2700 = vmatprep.subr.bf16.mxu0 0
        %2701 = vmatpush1.bf16.msra.mxu0 0
        %2702 = vmatprep.subr.bf16.mxu0 0
        %2703 = vmatpush1.bf16.msra.mxu0 0
        %2704 = vmatprep.subr.bf16.mxu0 0
        %2705 = vmatpush1.bf16.msra.mxu0 0
        %2706 = vmatprep.subr.bf16.mxu0 0
        %2707 = vmatpush1.bf16.msra.mxu0 0
        %2708 = vmatprep.subr.bf16.mxu0 0
        %2709 = vmatpush1.bf16.msra.mxu0 0
        %2710 = vmatprep.subr.bf16.mxu0 0
        %2711 = vmatpush1.bf16.msra.mxu0 0
        %2712 = vmatprep.subr.bf16.mxu0 0
        %2713 = vmatpush1.bf16.msra.mxu0 0
        %2714 = vmatprep.subr.bf16.mxu0 0
        %2715 = vmatpush1.bf16.msra.mxu0 0
        %2716 = vmatprep.subr.bf16.mxu0 0
        %2717 = vmatpush1.bf16.msra.mxu0 0
        %2718 = vmatprep.subr.bf16.mxu0 0
        %2719 = vmatpush1.bf16.msra.mxu0 0
        %2720 = vmatprep.subr.bf16.mxu0 0
        %2721 = vmatpush1.bf16.msra.mxu0 0
        %2722 = vmatprep.subr.bf16.mxu0 0
        %2723 = vmatpush1.bf16.msra.mxu0 0
        %2724 = vmatprep.subr.bf16.mxu0 0
        %2725 = vmatpush1.bf16.msra.mxu0 0
        %2726 = vmatprep.subr.bf16.mxu0 0
        %2727 = vmatpush1.bf16.msra.mxu0 0
        %2728 = vmatprep.subr.bf16.mxu0 0
        %2729 = vmatpush1.bf16.msra.mxu0 0
        %2730 = vmatprep.mubr.bf16.mxu0 0
        %2731 = vmatmul.mubr.bf16.gmra.mrb[0].mxu0 %v2693
        %v2732 = vpop.f32.mrb[0].mxu0
        %v2733 = vadd.f32 0.0, %v2732
        %v2734 = vpop.f32.mrb[0].mxu0
        %v2735 = vpop.f32.mrb[0].mxu0
        %v2736 = vadd.f32 0.0, %v2735
        %v2737 = vpop.f32.mrb[0].mxu0
        %2738 = vdwg.mxu0
        %v2739 = vpack.c.bf16 %v2736, %v2733
        %2741 = vrot.lane.b32.xlu0 %v2739, 8
        %v2742 = vpop.permute.xlu0 %2741
        %2744 = vst.msk [vmem:[#allocation4] sm:$0xff] %vm1481, %v2742
        %2745 = vrot.lane.b32.xlu0 %v2341, 116
        %v2746 = vpop.permute.xlu0 %2745
        %2747 = vrot.lane.b32.xlu0 %v2425, 116
        %v2748 = vpop.permute.xlu0 %2747
        %v2750 = vsel %vm1092, %v2746, 0
        %v2753 = vsel %vm1092, %v2748, 0
        %2755 = vmatprep.subr.bf16.mxu0 0
        %2756 = vmatpush1.bf16.xpose.msra.mxu0 %v2753
        %2757 = vmatprep.subr.bf16.mxu0 0
        %2758 = vmatpush1.bf16.xpose.msra.mxu0 0
        %2759 = vmatprep.subr.bf16.mxu0 0
        %2760 = vmatpush1.bf16.xpose.msra.mxu0 0
        %2761 = vmatprep.subr.bf16.mxu0 0
        %2762 = vmatpush1.bf16.xpose.msra.mxu0 0
        %2763 = vmatprep.subr.bf16.mxu0 0
        %2764 = vmatpush1.bf16.xpose.msra.mxu0 0
        %2765 = vmatprep.subr.bf16.mxu0 0
        %2766 = vmatpush1.bf16.xpose.msra.mxu0 0
        %2767 = vmatprep.subr.bf16.mxu0 0
        %2768 = vmatpush1.bf16.xpose.msra.mxu0 0
        %2769 = vmatprep.subr.bf16.mxu0 0
        %2770 = vmatpush1.bf16.xpose.msra.mxu0 0
        %2771 = vmatprep.subr.bf16.mxu0 0
        %2772 = vmatpush1.bf16.xpose.msra.mxu0 0
        %2773 = vmatprep.subr.bf16.mxu0 0
        %2774 = vmatpush1.bf16.xpose.msra.mxu0 0
        %2775 = vmatprep.subr.bf16.mxu0 0
        %2776 = vmatpush1.bf16.xpose.msra.mxu0 0
        %2777 = vmatprep.subr.bf16.mxu0 0
        %2778 = vmatpush1.bf16.xpose.msra.mxu0 0
        %2779 = vmatprep.subr.bf16.mxu0 0
        %2780 = vmatpush1.bf16.xpose.msra.mxu0 0
        %2781 = vmatprep.subr.bf16.mxu0 0
        %2782 = vmatpush1.bf16.xpose.msra.mxu0 0
        %2783 = vmatprep.subr.bf16.mxu0 0
        %2784 = vmatpush1.bf16.xpose.msra.mxu0 0
        %2785 = vmatprep.subr.bf16.mxu0 0
        %2786 = vmatpush1.bf16.xpose.msra.mxu0 0
        %2787 = vmatprep.mubr.bf16.mxu0 0
        %2788 = vmatmul.mubr.bf16.gmra.mrb[0].mxu0 %v2750
        %v2789 = vpop.f32.mrb[0].mxu0
        %v2790 = vadd.f32 0.0, %v2789
        %v2791 = vpop.f32.mrb[0].mxu0
        %v2792 = vpop.f32.mrb[0].mxu0
        %v2793 = vadd.f32 0.0, %v2792
        %v2794 = vpop.f32.mrb[0].mxu0
        %2795 = vdwg.mxu0
        %v2796 = vmul.f32 %v2790, 0.5
        %v2797 = vmul.f32 %v2793, 0.5
        %v2798 = vadd.f32 %v2796, %v2346
        %v2799 = vadd.f32 %v2797, %v2346
        %v2800 = vsel %vm2399, %v2798, -inf
        %2801 = vmax.xlane.f32.xlu0 %v2800
        %v2802 = vpop.xlane.xlu0 %2801
        %v2803 = vsel %vm2399, %v2799, -inf
        %2804 = vmax.xlane.f32.xlu0 %v2803
        %v2805 = vpop.xlane.xlu0 %2804
        %v2806 = vsub.f32 %v2798, %v2802
        %v2807 = vsub.f32 %v2799, %v2805
        %v2808 = vmul.f32 %v2806, 1.442695
        %v2809 = vpow.pop %v2808
        %v2810 = vmul.f32 %v2807, 1.442695
        %v2811 = vpow.pop %v2810
        %v2812 = vsel %vm2399, %v2809, 0.0
        %2813 = vadd.xlane.f32.xlu0 %v2812
        %v2814 = vpop.xlane.xlu0 %2813
        %v2815 = vsel %vm2399, %v2811, 0.0
        %2816 = vadd.xlane.f32.xlu0 %v2815
        %v2817 = vpop.xlane.xlu0 %2816
        %v2818 = vrcp.pop %v2814
        %v2819 = vrcp.pop %v2817
        %v2820 = vmul.f32 %v2809, %v2818
        %v2821 = vmul.f32 %v2811, %v2819
        %v2822 = vpack.c.bf16 %v2821, %v2820
        %2823 = vrot.lane.b32.xlu0 %v2425, 84
        %v2824 = vpop.permute.xlu0 %2823
        %v2826 = vsel %vm2399, %v2822, 0
        %v2829 = vsel %vm2431, %v2824, 0
        %2831 = vmatprep.subr.bf16.mxu0 0
        %2832 = vmatpush1.bf16.msra.mxu0 %v2829
        %2833 = vmatprep.subr.bf16.mxu0 0
        %2834 = vmatpush1.bf16.msra.mxu0 0
        %2835 = vmatprep.subr.bf16.mxu0 0
        %2836 = vmatpush1.bf16.msra.mxu0 0
        %2837 = vmatprep.subr.bf16.mxu0 0
        %2838 = vmatpush1.bf16.msra.mxu0 0
        %2839 = vmatprep.subr.bf16.mxu0 0
        %2840 = vmatpush1.bf16.msra.mxu0 0
        %2841 = vmatprep.subr.bf16.mxu0 0
        %2842 = vmatpush1.bf16.msra.mxu0 0
        %2843 = vmatprep.subr.bf16.mxu0 0
        %2844 = vmatpush1.bf16.msra.mxu0 0
        %2845 = vmatprep.subr.bf16.mxu0 0
        %2846 = vmatpush1.bf16.msra.mxu0 0
        %2847 = vmatprep.subr.bf16.mxu0 0
        %2848 = vmatpush1.bf16.msra.mxu0 0
        %2849 = vmatprep.subr.bf16.mxu0 0
        %2850 = vmatpush1.bf16.msra.mxu0 0
        %2851 = vmatprep.subr.bf16.mxu0 0
        %2852 = vmatpush1.bf16.msra.mxu0 0
        %2853 = vmatprep.subr.bf16.mxu0 0
        %2854 = vmatpush1.bf16.msra.mxu0 0
        %2855 = vmatprep.subr.bf16.mxu0 0
        %2856 = vmatpush1.bf16.msra.mxu0 0
        %2857 = vmatprep.subr.bf16.mxu0 0
        %2858 = vmatpush1.bf16.msra.mxu0 0
        %2859 = vmatprep.subr.bf16.mxu0 0
        %2860 = vmatpush1.bf16.msra.mxu0 0
        %2861 = vmatprep.subr.bf16.mxu0 0
        %2862 = vmatpush1.bf16.msra.mxu0 0
        %2863 = vmatprep.mubr.bf16.mxu0 0
        %2864 = vmatmul.mubr.bf16.gmra.mrb[0].mxu0 %v2826
        %v2865 = vpop.f32.mrb[0].mxu0
        %v2866 = vadd.f32 0.0, %v2865
        %v2867 = vpop.f32.mrb[0].mxu0
        %v2868 = vpop.f32.mrb[0].mxu0
        %v2869 = vadd.f32 0.0, %v2868
        %v2870 = vpop.f32.mrb[0].mxu0
        %2871 = vdwg.mxu0
        %v2872 = vpack.c.bf16 %v2869, %v2866
        %2874 = vrot.lane.b32.xlu0 %v2872, 12
        %v2875 = vpop.permute.xlu0 %2874
        %2877 = vst.msk [vmem:[#allocation4] sm:$0xff] %vm1613, %v2875
        %2878 = vrot.lane.b32.xlu0 %v2341, 112
        %v2879 = vpop.permute.xlu0 %2878
        %2880 = vrot.lane.b32.xlu0 %v2425, 112
        %v2881 = vpop.permute.xlu0 %2880
        %v2883 = vsel %vm1092, %v2879, 0
        %v2886 = vsel %vm1092, %v2881, 0
        %2888 = vmatprep.subr.bf16.mxu0 0
        %2889 = vmatpush1.bf16.xpose.msra.mxu0 %v2886
        %2890 = vmatprep.subr.bf16.mxu0 0
        %2891 = vmatpush1.bf16.xpose.msra.mxu0 0
        %2892 = vmatprep.subr.bf16.mxu0 0
        %2893 = vmatpush1.bf16.xpose.msra.mxu0 0
        %2894 = vmatprep.subr.bf16.mxu0 0
        %2895 = vmatpush1.bf16.xpose.msra.mxu0 0
        %2896 = vmatprep.subr.bf16.mxu0 0
        %2897 = vmatpush1.bf16.xpose.msra.mxu0 0
        %2898 = vmatprep.subr.bf16.mxu0 0
        %2899 = vmatpush1.bf16.xpose.msra.mxu0 0
        %2900 = vmatprep.subr.bf16.mxu0 0
        %2901 = vmatpush1.bf16.xpose.msra.mxu0 0
        %2902 = vmatprep.subr.bf16.mxu0 0
        %2903 = vmatpush1.bf16.xpose.msra.mxu0 0
        %2904 = vmatprep.subr.bf16.mxu0 0
        %2905 = vmatpush1.bf16.xpose.msra.mxu0 0
        %2906 = vmatprep.subr.bf16.mxu0 0
        %2907 = vmatpush1.bf16.xpose.msra.mxu0 0
        %2908 = vmatprep.subr.bf16.mxu0 0
        %2909 = vmatpush1.bf16.xpose.msra.mxu0 0
        %2910 = vmatprep.subr.bf16.mxu0 0
        %2911 = vmatpush1.bf16.xpose.msra.mxu0 0
        %2912 = vmatprep.subr.bf16.mxu0 0
        %2913 = vmatpush1.bf16.xpose.msra.mxu0 0
        %2914 = vmatprep.subr.bf16.mxu0 0
        %2915 = vmatpush1.bf16.xpose.msra.mxu0 0
        %2916 = vmatprep.subr.bf16.mxu0 0
        %2917 = vmatpush1.bf16.xpose.msra.mxu0 0
        %2918 = vmatprep.subr.bf16.mxu0 0
        %2919 = vmatpush1.bf16.xpose.msra.mxu0 0
        %2920 = vmatprep.mubr.bf16.mxu0 0
        %2921 = vmatmul.mubr.bf16.gmra.mrb[0].mxu0 %v2883
        %v2922 = vpop.f32.mrb[0].mxu0
        %v2923 = vadd.f32 0.0, %v2922
        %v2924 = vpop.f32.mrb[0].mxu0
        %v2925 = vpop.f32.mrb[0].mxu0
        %v2926 = vadd.f32 0.0, %v2925
        %v2927 = vpop.f32.mrb[0].mxu0
        %2928 = vdwg.mxu0
        %v2929 = vmul.f32 %v2923, 0.5
        %v2930 = vmul.f32 %v2926, 0.5
        %v2931 = vadd.f32 %v2929, %v2346
        %v2932 = vadd.f32 %v2930, %v2346
        %v2933 = vsel %vm2399, %v2931, -inf
        %2934 = vmax.xlane.f32.xlu0 %v2933
        %v2935 = vpop.xlane.xlu0 %2934
        %v2936 = vsel %vm2399, %v2932, -inf
        %2937 = vmax.xlane.f32.xlu0 %v2936
        %v2938 = vpop.xlane.xlu0 %2937
        %v2939 = vsub.f32 %v2931, %v2935
        %v2940 = vsub.f32 %v2932, %v2938
        %v2941 = vmul.f32 %v2939, 1.442695
        %v2942 = vpow.pop %v2941
        %v2943 = vmul.f32 %v2940, 1.442695
        %v2944 = vpow.pop %v2943
        %v2945 = vsel %vm2399, %v2942, 0.0
        %2946 = vadd.xlane.f32.xlu0 %v2945
        %v2947 = vpop.xlane.xlu0 %2946
        %v2948 = vsel %vm2399, %v2944, 0.0
        %2949 = vadd.xlane.f32.xlu0 %v2948
        %v2950 = vpop.xlane.xlu0 %2949
        %v2951 = vrcp.pop %v2947
        %v2952 = vrcp.pop %v2950
        %v2953 = vmul.f32 %v2942, %v2951
        %v2954 = vmul.f32 %v2944, %v2952
        %v2955 = vpack.c.bf16 %v2954, %v2953
        %2956 = vrot.lane.b32.xlu0 %v2425, 80
        %v2957 = vpop.permute.xlu0 %2956
        %v2959 = vsel %vm2399, %v2955, 0
        %v2962 = vsel %vm2431, %v2957, 0
        %2964 = vmatprep.subr.bf16.mxu0 0
        %2965 = vmatpush1.bf16.msra.mxu0 %v2962
        %2966 = vmatprep.subr.bf16.mxu0 0
        %2967 = vmatpush1.bf16.msra.mxu0 0
        %2968 = vmatprep.subr.bf16.mxu0 0
        %2969 = vmatpush1.bf16.msra.mxu0 0
        %2970 = vmatprep.subr.bf16.mxu0 0
        %2971 = vmatpush1.bf16.msra.mxu0 0
        %2972 = vmatprep.subr.bf16.mxu0 0
        %2973 = vmatpush1.bf16.msra.mxu0 0
        %2974 = vmatprep.subr.bf16.mxu0 0
        %2975 = vmatpush1.bf16.msra.mxu0 0
        %2976 = vmatprep.subr.bf16.mxu0 0
        %2977 = vmatpush1.bf16.msra.mxu0 0
        %2978 = vmatprep.subr.bf16.mxu0 0
        %2979 = vmatpush1.bf16.msra.mxu0 0
        %2980 = vmatprep.subr.bf16.mxu0 0
        %2981 = vmatpush1.bf16.msra.mxu0 0
        %2982 = vmatprep.subr.bf16.mxu0 0
        %2983 = vmatpush1.bf16.msra.mxu0 0
        %2984 = vmatprep.subr.bf16.mxu0 0
        %2985 = vmatpush1.bf16.msra.mxu0 0
        %2986 = vmatprep.subr.bf16.mxu0 0
        %2987 = vmatpush1.bf16.msra.mxu0 0
        %2988 = vmatprep.subr.bf16.mxu0 0
        %2989 = vmatpush1.bf16.msra.mxu0 0
        %2990 = vmatprep.subr.bf16.mxu0 0
        %2991 = vmatpush1.bf16.msra.mxu0 0
        %2992 = vmatprep.subr.bf16.mxu0 0
        %2993 = vmatpush1.bf16.msra.mxu0 0
        %2994 = vmatprep.subr.bf16.mxu0 0
        %2995 = vmatpush1.bf16.msra.mxu0 0
        %2996 = vmatprep.mubr.bf16.mxu0 0
        %2997 = vmatmul.mubr.bf16.gmra.mrb[0].mxu0 %v2959
        %v2998 = vpop.f32.mrb[0].mxu0
        %v2999 = vadd.f32 0.0, %v2998
        %v3000 = vpop.f32.mrb[0].mxu0
        %v3001 = vpop.f32.mrb[0].mxu0
        %v3002 = vadd.f32 0.0, %v3001
        %v3003 = vpop.f32.mrb[0].mxu0
        %3004 = vdwg.mxu0
        %v3005 = vpack.c.bf16 %v3002, %v2999
        %3007 = vrot.lane.b32.xlu0 %v3005, 16
        %v3008 = vpop.permute.xlu0 %3007
        %3010 = vst.msk [vmem:[#allocation4] sm:$0xff] %vm1745, %v3008
        %3011 = vrot.lane.b32.xlu0 %v2341, 108
        %v3012 = vpop.permute.xlu0 %3011
        %3013 = vrot.lane.b32.xlu0 %v2425, 108
        %v3014 = vpop.permute.xlu0 %3013
        %v3016 = vsel %vm1092, %v3012, 0
        %v3019 = vsel %vm1092, %v3014, 0
        %3021 = vmatprep.subr.bf16.mxu0 0
        %3022 = vmatpush1.bf16.xpose.msra.mxu0 %v3019
        %3023 = vmatprep.subr.bf16.mxu0 0
        %3024 = vmatpush1.bf16.xpose.msra.mxu0 0
        %3025 = vmatprep.subr.bf16.mxu0 0
        %3026 = vmatpush1.bf16.xpose.msra.mxu0 0
        %3027 = vmatprep.subr.bf16.mxu0 0
        %3028 = vmatpush1.bf16.xpose.msra.mxu0 0
        %3029 = vmatprep.subr.bf16.mxu0 0
        %3030 = vmatpush1.bf16.xpose.msra.mxu0 0
        %3031 = vmatprep.subr.bf16.mxu0 0
        %3032 = vmatpush1.bf16.xpose.msra.mxu0 0
        %3033 = vmatprep.subr.bf16.mxu0 0
        %3034 = vmatpush1.bf16.xpose.msra.mxu0 0
        %3035 = vmatprep.subr.bf16.mxu0 0
        %3036 = vmatpush1.bf16.xpose.msra.mxu0 0
        %3037 = vmatprep.subr.bf16.mxu0 0
        %3038 = vmatpush1.bf16.xpose.msra.mxu0 0
        %3039 = vmatprep.subr.bf16.mxu0 0
        %3040 = vmatpush1.bf16.xpose.msra.mxu0 0
        %3041 = vmatprep.subr.bf16.mxu0 0
        %3042 = vmatpush1.bf16.xpose.msra.mxu0 0
        %3043 = vmatprep.subr.bf16.mxu0 0
        %3044 = vmatpush1.bf16.xpose.msra.mxu0 0
        %3045 = vmatprep.subr.bf16.mxu0 0
        %3046 = vmatpush1.bf16.xpose.msra.mxu0 0
        %3047 = vmatprep.subr.bf16.mxu0 0
        %3048 = vmatpush1.bf16.xpose.msra.mxu0 0
        %3049 = vmatprep.subr.bf16.mxu0 0
        %3050 = vmatpush1.bf16.xpose.msra.mxu0 0
        %3051 = vmatprep.subr.bf16.mxu0 0
        %3052 = vmatpush1.bf16.xpose.msra.mxu0 0
        %3053 = vmatprep.mubr.bf16.mxu0 0
        %3054 = vmatmul.mubr.bf16.gmra.mrb[0].mxu0 %v3016
        %v3055 = vpop.f32.mrb[0].mxu0
        %v3056 = vadd.f32 0.0, %v3055
        %v3057 = vpop.f32.mrb[0].mxu0
        %v3058 = vpop.f32.mrb[0].mxu0
        %v3059 = vadd.f32 0.0, %v3058
        %v3060 = vpop.f32.mrb[0].mxu0
        %3061 = vdwg.mxu0
        %v3062 = vmul.f32 %v3056, 0.5
        %v3063 = vmul.f32 %v3059, 0.5
        %v3064 = vadd.f32 %v3062, %v2346
        %v3065 = vadd.f32 %v3063, %v2346
        %v3066 = vsel %vm2399, %v3064, -inf
        %3067 = vmax.xlane.f32.xlu0 %v3066
        %v3068 = vpop.xlane.xlu0 %3067
        %v3069 = vsel %vm2399, %v3065, -inf
        %3070 = vmax.xlane.f32.xlu0 %v3069
        %v3071 = vpop.xlane.xlu0 %3070
        %v3072 = vsub.f32 %v3064, %v3068
        %v3073 = vsub.f32 %v3065, %v3071
        %v3074 = vmul.f32 %v3072, 1.442695
        %v3075 = vpow.pop %v3074
        %v3076 = vmul.f32 %v3073, 1.442695
        %v3077 = vpow.pop %v3076
        %v3078 = vsel %vm2399, %v3075, 0.0
        %3079 = vadd.xlane.f32.xlu0 %v3078
        %v3080 = vpop.xlane.xlu0 %3079
        %v3081 = vsel %vm2399, %v3077, 0.0
        %3082 = vadd.xlane.f32.xlu0 %v3081
        %v3083 = vpop.xlane.xlu0 %3082
        %v3084 = vrcp.pop %v3080
        %v3085 = vrcp.pop %v3083
        %v3086 = vmul.f32 %v3075, %v3084
        %v3087 = vmul.f32 %v3077, %v3085
        %v3088 = vpack.c.bf16 %v3087, %v3086
        %3089 = vrot.lane.b32.xlu0 %v2425, 76
        %v3090 = vpop.permute.xlu0 %3089
        %v3092 = vsel %vm2399, %v3088, 0
        %v3095 = vsel %vm2431, %v3090, 0
        %3097 = vmatprep.subr.bf16.mxu0 0
        %3098 = vmatpush1.bf16.msra.mxu0 %v3095
        %3099 = vmatprep.subr.bf16.mxu0 0
        %3100 = vmatpush1.bf16.msra.mxu0 0
        %3101 = vmatprep.subr.bf16.mxu0 0
        %3102 = vmatpush1.bf16.msra.mxu0 0
        %3103 = vmatprep.subr.bf16.mxu0 0
        %3104 = vmatpush1.bf16.msra.mxu0 0
        %3105 = vmatprep.subr.bf16.mxu0 0
        %3106 = vmatpush1.bf16.msra.mxu0 0
        %3107 = vmatprep.subr.bf16.mxu0 0
        %3108 = vmatpush1.bf16.msra.mxu0 0
        %3109 = vmatprep.subr.bf16.mxu0 0
        %3110 = vmatpush1.bf16.msra.mxu0 0
        %3111 = vmatprep.subr.bf16.mxu0 0
        %3112 = vmatpush1.bf16.msra.mxu0 0
        %3113 = vmatprep.subr.bf16.mxu0 0
        %3114 = vmatpush1.bf16.msra.mxu0 0
        %3115 = vmatprep.subr.bf16.mxu0 0
        %3116 = vmatpush1.bf16.msra.mxu0 0
        %3117 = vmatprep.subr.bf16.mxu0 0
        %3118 = vmatpush1.bf16.msra.mxu0 0
        %3119 = vmatprep.subr.bf16.mxu0 0
        %3120 = vmatpush1.bf16.msra.mxu0 0
        %3121 = vmatprep.subr.bf16.mxu0 0
        %3122 = vmatpush1.bf16.msra.mxu0 0
        %3123 = vmatprep.subr.bf16.mxu0 0
        %3124 = vmatpush1.bf16.msra.mxu0 0
        %3125 = vmatprep.subr.bf16.mxu0 0
        %3126 = vmatpush1.bf16.msra.mxu0 0
        %3127 = vmatprep.subr.bf16.mxu0 0
        %3128 = vmatpush1.bf16.msra.mxu0 0
        %3129 = vmatprep.mubr.bf16.mxu0 0
        %3130 = vmatmul.mubr.bf16.gmra.mrb[0].mxu0 %v3092
        %v3131 = vpop.f32.mrb[0].mxu0
        %v3132 = vadd.f32 0.0, %v3131
        %v3133 = vpop.f32.mrb[0].mxu0
        %v3134 = vpop.f32.mrb[0].mxu0
        %v3135 = vadd.f32 0.0, %v3134
        %v3136 = vpop.f32.mrb[0].mxu0
        %3137 = vdwg.mxu0
        %v3138 = vpack.c.bf16 %v3135, %v3132
        %3140 = vrot.lane.b32.xlu0 %v3138, 20
        %v3141 = vpop.permute.xlu0 %3140
        %3143 = vst.msk [vmem:[#allocation4] sm:$0xff] %vm1877, %v3141
        %3144 = vrot.lane.b32.xlu0 %v2341, 104
        %v3145 = vpop.permute.xlu0 %3144
        %3146 = vrot.lane.b32.xlu0 %v2425, 104
        %v3147 = vpop.permute.xlu0 %3146
        %v3149 = vsel %vm1092, %v3145, 0
        %v3152 = vsel %vm1092, %v3147, 0
        %3154 = vmatprep.subr.bf16.mxu0 0
        %3155 = vmatpush1.bf16.xpose.msra.mxu0 %v3152
        %3156 = vmatprep.subr.bf16.mxu0 0
        %3157 = vmatpush1.bf16.xpose.msra.mxu0 0
        %3158 = vmatprep.subr.bf16.mxu0 0
        %3159 = vmatpush1.bf16.xpose.msra.mxu0 0
        %3160 = vmatprep.subr.bf16.mxu0 0
        %3161 = vmatpush1.bf16.xpose.msra.mxu0 0
        %3162 = vmatprep.subr.bf16.mxu0 0
        %3163 = vmatpush1.bf16.xpose.msra.mxu0 0
        %3164 = vmatprep.subr.bf16.mxu0 0
        %3165 = vmatpush1.bf16.xpose.msra.mxu0 0
        %3166 = vmatprep.subr.bf16.mxu0 0
        %3167 = vmatpush1.bf16.xpose.msra.mxu0 0
        %3168 = vmatprep.subr.bf16.mxu0 0
        %3169 = vmatpush1.bf16.xpose.msra.mxu0 0
        %3170 = vmatprep.subr.bf16.mxu0 0
        %3171 = vmatpush1.bf16.xpose.msra.mxu0 0
        %3172 = vmatprep.subr.bf16.mxu0 0
        %3173 = vmatpush1.bf16.xpose.msra.mxu0 0
        %3174 = vmatprep.subr.bf16.mxu0 0
        %3175 = vmatpush1.bf16.xpose.msra.mxu0 0
        %3176 = vmatprep.subr.bf16.mxu0 0
        %3177 = vmatpush1.bf16.xpose.msra.mxu0 0
        %3178 = vmatprep.subr.bf16.mxu0 0
        %3179 = vmatpush1.bf16.xpose.msra.mxu0 0
        %3180 = vmatprep.subr.bf16.mxu0 0
        %3181 = vmatpush1.bf16.xpose.msra.mxu0 0
        %3182 = vmatprep.subr.bf16.mxu0 0
        %3183 = vmatpush1.bf16.xpose.msra.mxu0 0
        %3184 = vmatprep.subr.bf16.mxu0 0
        %3185 = vmatpush1.bf16.xpose.msra.mxu0 0
        %3186 = vmatprep.mubr.bf16.mxu0 0
        %3187 = vmatmul.mubr.bf16.gmra.mrb[0].mxu0 %v3149
        %v3188 = vpop.f32.mrb[0].mxu0
        %v3189 = vadd.f32 0.0, %v3188
        %v3190 = vpop.f32.mrb[0].mxu0
        %v3191 = vpop.f32.mrb[0].mxu0
        %v3192 = vadd.f32 0.0, %v3191
        %v3193 = vpop.f32.mrb[0].mxu0
        %3194 = vdwg.mxu0
        %v3195 = vmul.f32 %v3189, 0.5
        %v3196 = vmul.f32 %v3192, 0.5
        %v3197 = vadd.f32 %v3195, %v2346
        %v3198 = vadd.f32 %v3196, %v2346
        %v3199 = vsel %vm2399, %v3197, -inf
        %3200 = vmax.xlane.f32.xlu0 %v3199
        %v3201 = vpop.xlane.xlu0 %3200
        %v3202 = vsel %vm2399, %v3198, -inf
        %3203 = vmax.xlane.f32.xlu0 %v3202
        %v3204 = vpop.xlane.xlu0 %3203
        %v3205 = vsub.f32 %v3197, %v3201
        %v3206 = vsub.f32 %v3198, %v3204
        %v3207 = vmul.f32 %v3205, 1.442695
        %v3208 = vpow.pop %v3207
        %v3209 = vmul.f32 %v3206, 1.442695
        %v3210 = vpow.pop %v3209
        %v3211 = vsel %vm2399, %v3208, 0.0
        %3212 = vadd.xlane.f32.xlu0 %v3211
        %v3213 = vpop.xlane.xlu0 %3212
        %v3214 = vsel %vm2399, %v3210, 0.0
        %3215 = vadd.xlane.f32.xlu0 %v3214
        %v3216 = vpop.xlane.xlu0 %3215
        %v3217 = vrcp.pop %v3213
        %v3218 = vrcp.pop %v3216
        %v3219 = vmul.f32 %v3208, %v3217
        %v3220 = vmul.f32 %v3210, %v3218
        %v3221 = vpack.c.bf16 %v3220, %v3219
        %3222 = vrot.lane.b32.xlu0 %v2425, 72
        %v3223 = vpop.permute.xlu0 %3222
        %v3225 = vsel %vm2399, %v3221, 0
        %v3228 = vsel %vm2431, %v3223, 0
        %3230 = vmatprep.subr.bf16.mxu0 0
        %3231 = vmatpush1.bf16.msra.mxu0 %v3228
        %3232 = vmatprep.subr.bf16.mxu0 0
        %3233 = vmatpush1.bf16.msra.mxu0 0
        %3234 = vmatprep.subr.bf16.mxu0 0
        %3235 = vmatpush1.bf16.msra.mxu0 0
        %3236 = vmatprep.subr.bf16.mxu0 0
        %3237 = vmatpush1.bf16.msra.mxu0 0
        %3238 = vmatprep.subr.bf16.mxu0 0
        %3239 = vmatpush1.bf16.msra.mxu0 0
        %3240 = vmatprep.subr.bf16.mxu0 0
        %3241 = vmatpush1.bf16.msra.mxu0 0
        %3242 = vmatprep.subr.bf16.mxu0 0
        %3243 = vmatpush1.bf16.msra.mxu0 0
        %3244 = vmatprep.subr.bf16.mxu0 0
        %3245 = vmatpush1.bf16.msra.mxu0 0
        %3246 = vmatprep.subr.bf16.mxu0 0
        %3247 = vmatpush1.bf16.msra.mxu0 0
        %3248 = vmatprep.subr.bf16.mxu0 0
        %3249 = vmatpush1.bf16.msra.mxu0 0
        %3250 = vmatprep.subr.bf16.mxu0 0
        %3251 = vmatpush1.bf16.msra.mxu0 0
        %3252 = vmatprep.subr.bf16.mxu0 0
        %3253 = vmatpush1.bf16.msra.mxu0 0
        %3254 = vmatprep.subr.bf16.mxu0 0
        %3255 = vmatpush1.bf16.msra.mxu0 0
        %3256 = vmatprep.subr.bf16.mxu0 0
        %3257 = vmatpush1.bf16.msra.mxu0 0
        %3258 = vmatprep.subr.bf16.mxu0 0
        %3259 = vmatpush1.bf16.msra.mxu0 0
        %3260 = vmatprep.subr.bf16.mxu0 0
        %3261 = vmatpush1.bf16.msra.mxu0 0
        %3262 = vmatprep.mubr.bf16.mxu0 0
        %3263 = vmatmul.mubr.bf16.gmra.mrb[0].mxu0 %v3225
        %v3264 = vpop.f32.mrb[0].mxu0
        %v3265 = vadd.f32 0.0, %v3264
        %v3266 = vpop.f32.mrb[0].mxu0
        %v3267 = vpop.f32.mrb[0].mxu0
        %v3268 = vadd.f32 0.0, %v3267
        %v3269 = vpop.f32.mrb[0].mxu0
        %3270 = vdwg.mxu0
        %v3271 = vpack.c.bf16 %v3268, %v3265
        %3273 = vrot.lane.b32.xlu0 %v3271, 24
        %v3274 = vpop.permute.xlu0 %3273
        %3276 = vst.msk [vmem:[#allocation4] sm:$0xff] %vm2009, %v3274
        %3277 = vrot.lane.b32.xlu0 %v2341, 100
        %v3278 = vpop.permute.xlu0 %3277
        %3279 = vrot.lane.b32.xlu0 %v2425, 100
        %v3280 = vpop.permute.xlu0 %3279
        %v3282 = vsel %vm1092, %v3278, 0
        %v3285 = vsel %vm1092, %v3280, 0
        %3287 = vmatprep.subr.bf16.mxu0 0
        %3288 = vmatpush1.bf16.xpose.msra.mxu0 %v3285
        %3289 = vmatprep.subr.bf16.mxu0 0
        %3290 = vmatpush1.bf16.xpose.msra.mxu0 0
        %3291 = vmatprep.subr.bf16.mxu0 0
        %3292 = vmatpush1.bf16.xpose.msra.mxu0 0
        %3293 = vmatprep.subr.bf16.mxu0 0
        %3294 = vmatpush1.bf16.xpose.msra.mxu0 0
        %3295 = vmatprep.subr.bf16.mxu0 0
        %3296 = vmatpush1.bf16.xpose.msra.mxu0 0
        %3297 = vmatprep.subr.bf16.mxu0 0
        %3298 = vmatpush1.bf16.xpose.msra.mxu0 0
        %3299 = vmatprep.subr.bf16.mxu0 0
        %3300 = vmatpush1.bf16.xpose.msra.mxu0 0
        %3301 = vmatprep.subr.bf16.mxu0 0
        %3302 = vmatpush1.bf16.xpose.msra.mxu0 0
        %3303 = vmatprep.subr.bf16.mxu0 0
        %3304 = vmatpush1.bf16.xpose.msra.mxu0 0
        %3305 = vmatprep.subr.bf16.mxu0 0
        %3306 = vmatpush1.bf16.xpose.msra.mxu0 0
        %3307 = vmatprep.subr.bf16.mxu0 0
        %3308 = vmatpush1.bf16.xpose.msra.mxu0 0
        %3309 = vmatprep.subr.bf16.mxu0 0
        %3310 = vmatpush1.bf16.xpose.msra.mxu0 0
        %3311 = vmatprep.subr.bf16.mxu0 0
        %3312 = vmatpush1.bf16.xpose.msra.mxu0 0
        %3313 = vmatprep.subr.bf16.mxu0 0
        %3314 = vmatpush1.bf16.xpose.msra.mxu0 0
        %3315 = vmatprep.subr.bf16.mxu0 0
        %3316 = vmatpush1.bf16.xpose.msra.mxu0 0
        %3317 = vmatprep.subr.bf16.mxu0 0
        %3318 = vmatpush1.bf16.xpose.msra.mxu0 0
        %3319 = vmatprep.mubr.bf16.mxu0 0
        %3320 = vmatmul.mubr.bf16.gmra.mrb[0].mxu0 %v3282
        %v3321 = vpop.f32.mrb[0].mxu0
        %v3322 = vadd.f32 0.0, %v3321
        %v3323 = vpop.f32.mrb[0].mxu0
        %v3324 = vpop.f32.mrb[0].mxu0
        %v3325 = vadd.f32 0.0, %v3324
        %v3326 = vpop.f32.mrb[0].mxu0
        %3327 = vdwg.mxu0
        %v3328 = vmul.f32 %v3322, 0.5
        %v3329 = vmul.f32 %v3325, 0.5
        %v3330 = vadd.f32 %v3328, %v2346
        %v3331 = vadd.f32 %v3329, %v2346
        %v3332 = vsel %vm2399, %v3330, -inf
        %3333 = vmax.xlane.f32.xlu0 %v3332
        %v3334 = vpop.xlane.xlu0 %3333
        %v3335 = vsel %vm2399, %v3331, -inf
        %3336 = vmax.xlane.f32.xlu0 %v3335
        %v3337 = vpop.xlane.xlu0 %3336
        %v3338 = vsub.f32 %v3330, %v3334
        %v3339 = vsub.f32 %v3331, %v3337
        %v3340 = vmul.f32 %v3338, 1.442695
        %v3341 = vpow.pop %v3340
        %v3342 = vmul.f32 %v3339, 1.442695
        %v3343 = vpow.pop %v3342
        %v3344 = vsel %vm2399, %v3341, 0.0
        %3345 = vadd.xlane.f32.xlu0 %v3344
        %v3346 = vpop.xlane.xlu0 %3345
        %v3347 = vsel %vm2399, %v3343, 0.0
        %3348 = vadd.xlane.f32.xlu0 %v3347
        %v3349 = vpop.xlane.xlu0 %3348
        %v3350 = vrcp.pop %v3346
        %v3351 = vrcp.pop %v3349
        %v3352 = vmul.f32 %v3341, %v3350
        %v3353 = vmul.f32 %v3343, %v3351
        %v3354 = vpack.c.bf16 %v3353, %v3352
        %3355 = vrot.lane.b32.xlu0 %v2425, 68
        %v3356 = vpop.permute.xlu0 %3355
        %v3358 = vsel %vm2399, %v3354, 0
        %v3361 = vsel %vm2431, %v3356, 0
        %3363 = vmatprep.subr.bf16.mxu0 0
        %3364 = vmatpush1.bf16.msra.mxu0 %v3361
        %3365 = vmatprep.subr.bf16.mxu0 0
        %3366 = vmatpush1.bf16.msra.mxu0 0
        %3367 = vmatprep.subr.bf16.mxu0 0
        %3368 = vmatpush1.bf16.msra.mxu0 0
        %3369 = vmatprep.subr.bf16.mxu0 0
        %3370 = vmatpush1.bf16.msra.mxu0 0
        %3371 = vmatprep.subr.bf16.mxu0 0
        %3372 = vmatpush1.bf16.msra.mxu0 0
        %3373 = vmatprep.subr.bf16.mxu0 0
        %3374 = vmatpush1.bf16.msra.mxu0 0
        %3375 = vmatprep.subr.bf16.mxu0 0
        %3376 = vmatpush1.bf16.msra.mxu0 0
        %3377 = vmatprep.subr.bf16.mxu0 0
        %3378 = vmatpush1.bf16.msra.mxu0 0
        %3379 = vmatprep.subr.bf16.mxu0 0
        %3380 = vmatpush1.bf16.msra.mxu0 0
        %3381 = vmatprep.subr.bf16.mxu0 0
        %3382 = vmatpush1.bf16.msra.mxu0 0
        %3383 = vmatprep.subr.bf16.mxu0 0
        %3384 = vmatpush1.bf16.msra.mxu0 0
        %3385 = vmatprep.subr.bf16.mxu0 0
        %3386 = vmatpush1.bf16.msra.mxu0 0
        %3387 = vmatprep.subr.bf16.mxu0 0
        %3388 = vmatpush1.bf16.msra.mxu0 0
        %3389 = vmatprep.subr.bf16.mxu0 0
        %3390 = vmatpush1.bf16.msra.mxu0 0
        %3391 = vmatprep.subr.bf16.mxu0 0
        %3392 = vmatpush1.bf16.msra.mxu0 0
        %3393 = vmatprep.subr.bf16.mxu0 0
        %3394 = vmatpush1.bf16.msra.mxu0 0
        %3395 = vmatprep.mubr.bf16.mxu0 0
        %3396 = vmatmul.mubr.bf16.gmra.mrb[0].mxu0 %v3358
        %v3397 = vpop.f32.mrb[0].mxu0
        %v3398 = vadd.f32 0.0, %v3397
        %v3399 = vpop.f32.mrb[0].mxu0
        %v3400 = vpop.f32.mrb[0].mxu0
        %v3401 = vadd.f32 0.0, %v3400
        %v3402 = vpop.f32.mrb[0].mxu0
        %3403 = vdwg.mxu0
        %v3404 = vpack.c.bf16 %v3401, %v3398
        %3406 = vrot.lane.b32.xlu0 %v3404, 28
        %v3407 = vpop.permute.xlu0 %3406
        %3409 = vst.msk [vmem:[#allocation4] sm:$0xff] %vm2141, %v3407
        %v3410 = vld [vmem:[#allocation4] sm:$0xff]
        %v3411 = vld [vmem:[%s16] sm:$0xf]
        %v3412 = vld [vmem:[%s16 + $0x4] sm:$0xf]
        %v3413 = vld [vmem:[%s16 + $0x8] sm:$0xf]
        %v3414 = vld [vmem:[%s16 + $0xc] sm:$0xf]
        %v3415 = vld [vmem:[%s17] sm:$0x1]
        %v3417 = vlaneseq
        %v3418 = vshrl.u32 %v3417, 7
        %v3419 = vsub.s32 0, %v3418
        %v3420 = vrot.slane %v3415, %v3419
        %v3426 = vunpack.c.l.b16 %v3411
        %v3427 = vunpack.c.l.b16 %v3412
        %v3428 = vunpack.c.l.b16 %v3413
        %v3429 = vunpack.c.l.b16 %v3414
        %v3430 = vpack.c.b16 %v3427, %v3426
        %v3431 = vpack.c.b16 %v3429, %v3428
        %v3435 = vsel %vm1039, %v3410, 0
        %3437 = vmatprep.subr.bf16.mxu0 0
        %3438 = vmatpush1.bf16.msra.mxu0 %v3430
        %3439 = vmatprep.subr.bf16.mxu0 0
        %3440 = vmatpush1.bf16.msra.mxu0 %v3431
        %3441 = vmatprep.subr.bf16.mxu0 0
        %3442 = vmatpush1.bf16.msra.mxu0 0
        %3443 = vmatprep.subr.bf16.mxu0 0
        %3444 = vmatpush1.bf16.msra.mxu0 0
        %3445 = vmatprep.subr.bf16.mxu0 0
        %3446 = vmatpush1.bf16.msra.mxu0 0
        %3447 = vmatprep.subr.bf16.mxu0 0
        %3448 = vmatpush1.bf16.msra.mxu0 0
        %3449 = vmatprep.subr.bf16.mxu0 0
        %3450 = vmatpush1.bf16.msra.mxu0 0
        %3451 = vmatprep.subr.bf16.mxu0 0
        %3452 = vmatpush1.bf16.msra.mxu0 0
        %3453 = vmatprep.subr.bf16.mxu0 0
        %3454 = vmatpush1.bf16.msra.mxu0 0
        %3455 = vmatprep.subr.bf16.mxu0 0
        %3456 = vmatpush1.bf16.msra.mxu0 0
        %3457 = vmatprep.subr.bf16.mxu0 0
        %3458 = vmatpush1.bf16.msra.mxu0 0
        %3459 = vmatprep.subr.bf16.mxu0 0
        %3460 = vmatpush1.bf16.msra.mxu0 0
        %3461 = vmatprep.subr.bf16.mxu0 0
        %3462 = vmatpush1.bf16.msra.mxu0 0
        %3463 = vmatprep.subr.bf16.mxu0 0
        %3464 = vmatpush1.bf16.msra.mxu0 0
        %3465 = vmatprep.subr.bf16.mxu0 0
        %3466 = vmatpush1.bf16.msra.mxu0 0
        %3467 = vmatprep.subr.bf16.mxu0 0
        %3468 = vmatpush1.bf16.msra.mxu0 0
        %3469 = vmatprep.mubr.bf16.mxu0 0
        %3470 = vmatmul.mubr.bf16.gmra.mrb[0].mxu0 %v3435
        %v3471 = vpop.f32.mrb[0].mxu0
        %v3472 = vadd.f32 %v3420, %v3471
        %v3473 = vpop.f32.mrb[0].mxu0
        %v3474 = vpop.f32.mrb[0].mxu0
        %v3475 = vadd.f32 %v3420, %v3474
        %v3476 = vpop.f32.mrb[0].mxu0
        %3477 = vdwg.mxu0
        %v3478 = vadd.f32 %v2270, %v3472
        %v3479 = vadd.f32 %v2271, %v3475
        %v3480 = vld [vmem:[%s18] sm:$0x1]
        %v3481 = vld [vmem:[%s19] sm:$0x1]
        %v3482 = vsel %vm1039, %v3478, 0.0
        %3483 = vadd.xlane.f32.xlu0 %v3482
        %v3484 = vpop.xlane.xlu0 %3483
        %v3485 = vsel %vm1039, %v3479, 0.0
        %3486 = vadd.xlane.f32.xlu0 %v3485
        %v3487 = vpop.xlane.xlu0 %3486
        %v3488 = vmul.f32 %v3484, %v2221
        %v3489 = vmul.f32 %v3487, %v2221
        %v3490 = vsub.f32 %v3478, %v3488
        %v3491 = vsub.f32 %v3479, %v3489
        %v3492 = vmul.f32 %v3490, %v3490
        %v3493 = vmul.f32 %v3491, %v3491
        %v3494 = vsel %vm1039, %v3492, 0.0
        %3495 = vadd.xlane.f32.xlu0 %v3494
        %v3496 = vpop.xlane.xlu0 %3495
        %v3497 = vsel %vm1039, %v3493, 0.0
        %3498 = vadd.xlane.f32.xlu0 %v3497
        %v3499 = vpop.xlane.xlu0 %3498
        %v3500 = vmul.f32 %v3496, 0.032258064
        %v3501 = vmul.f32 %v3499, 0.032258064
        %v3502 = vrsqrt.pop %v3500
        %v3503 = vmul.f32 %v3500, %v3502
        %vm3504 = vcmp.eq.f32.partialorder %v3500, inf
        %v3505 = vsel %vm3504, %v3500, %v3503
        %vm3506 = vcmp.eq.f32.partialorder %v3500, 0.0
        %v3507 = vand.u32 %v3500, 2147483648
        %v3508 = vsel %vm3506, %v3507, %v3505
        %v3509 = vrsqrt.pop %v3501
        %v3510 = vmul.f32 %v3501, %v3509
        %vm3511 = vcmp.eq.f32.partialorder %v3501, inf
        %v3512 = vsel %vm3511, %v3501, %v3510
        %vm3513 = vcmp.eq.f32.partialorder %v3501, 0.0
        %v3514 = vand.u32 %v3501, 2147483648
        %v3515 = vsel %vm3513, %v3514, %v3512
        %v3516 = vadd.f32 %v3508, 1e-06
        %v3517 = vadd.f32 %v3515, 1e-06
        %v3518 = vrcp.pop %v3516
        %v3519 = vmul.f32 %v3490, %v3518
        %v3520 = vrcp.pop %v3517
        %v3521 = vmul.f32 %v3491, %v3520
        %v3523 = vlaneseq
        %v3524 = vshrl.u32 %v3523, 7
        %v3525 = vsub.s32 0, %v3524
        %v3526 = vrot.slane %v3480, %v3525
        %v3528 = vmul.f32 %v3526, %v3519
        %v3529 = vmul.f32 %v3526, %v3521
        %v3531 = vlaneseq
        %v3532 = vshrl.u32 %v3531, 7
        %v3533 = vsub.s32 0, %v3532
        %v3534 = vrot.slane %v3481, %v3533
        %v3536 = vadd.f32 %v3528, %v3534
        %v3537 = vadd.f32 %v3529, %v3534
        %v3538 = vpack.c.bf16 %v3537, %v3536
        %v3539 = vld [vmem:[%s20] sm:$0xf]
        %v3540 = vld [vmem:[%s20 + $0x4] sm:$0xf]
        %v3541 = vld [vmem:[%s20 + $0x8] sm:$0xf]
        %v3542 = vld [vmem:[%s20 + $0xc] sm:$0xf]
        %v3543 = vld [vmem:[%s21] sm:$0x1]
        %v3545 = vlaneseq
        %v3546 = vshrl.u32 %v3545, 7
        %v3547 = vsub.s32 0, %v3546
        %v3548 = vrot.slane %v3543, %v3547
        %v3554 = vunpack.c.l.b16 %v3539
        %v3555 = vunpack.c.l.b16 %v3540
        %v3556 = vunpack.c.l.b16 %v3541
        %v3557 = vunpack.c.l.b16 %v3542
        %v3558 = vpack.c.b16 %v3555, %v3554
        %v3559 = vpack.c.b16 %v3557, %v3556
        %v3563 = vsel %vm1039, %v3538, 0
        %3565 = vmatprep.subr.bf16.mxu0 0
        %3566 = vmatpush1.bf16.msra.mxu0 %v3558
        %3567 = vmatprep.subr.bf16.mxu0 0
        %3568 = vmatpush1.bf16.msra.mxu0 %v3559
        %3569 = vmatprep.subr.bf16.mxu0 0
        %3570 = vmatpush1.bf16.msra.mxu0 0
        %3571 = vmatprep.subr.bf16.mxu0 0
        %3572 = vmatpush1.bf16.msra.mxu0 0
        %3573 = vmatprep.subr.bf16.mxu0 0
        %3574 = vmatpush1.bf16.msra.mxu0 0
        %3575 = vmatprep.subr.bf16.mxu0 0
        %3576 = vmatpush1.bf16.msra.mxu0 0
        %3577 = vmatprep.subr.bf16.mxu0 0
        %3578 = vmatpush1.bf16.msra.mxu0 0
        %3579 = vmatprep.subr.bf16.mxu0 0
        %3580 = vmatpush1.bf16.msra.mxu0 0
        %3581 = vmatprep.subr.bf16.mxu0 0
        %3582 = vmatpush1.bf16.msra.mxu0 0
        %3583 = vmatprep.subr.bf16.mxu0 0
        %3584 = vmatpush1.bf16.msra.mxu0 0
        %3585 = vmatprep.subr.bf16.mxu0 0
        %3586 = vmatpush1.bf16.msra.mxu0 0
        %3587 = vmatprep.subr.bf16.mxu0 0
        %3588 = vmatpush1.bf16.msra.mxu0 0
        %3589 = vmatprep.subr.bf16.mxu0 0
        %3590 = vmatpush1.bf16.msra.mxu0 0
        %3591 = vmatprep.subr.bf16.mxu0 0
        %3592 = vmatpush1.bf16.msra.mxu0 0
        %3593 = vmatprep.subr.bf16.mxu0 0
        %3594 = vmatpush1.bf16.msra.mxu0 0
        %3595 = vmatprep.subr.bf16.mxu0 0
        %3596 = vmatpush1.bf16.msra.mxu0 0
        %3597 = vmatprep.mubr.bf16.mxu0 0
        %3598 = vmatmul.mubr.bf16.gmra.mrb[0].mxu0 %v3563
        %v3599 = vpop.f32.mrb[0].mxu0
        %v3600 = vadd.f32 %v3548, %v3599
        %v3601 = vpop.f32.mrb[0].mxu0
        %v3602 = vpop.f32.mrb[0].mxu0
        %v3603 = vadd.f32 %v3548, %v3602
        %v3604 = vpop.f32.mrb[0].mxu0
        %3605 = vdwg.mxu0
        %v3606 = vmax.f32 %v3600, 0.0
        %v3607 = vmax.f32 %v3603, 0.0
        %v3608 = vpack.c.bf16 %v3607, %v3606
        %v3609 = vld [vmem:[%s22] sm:$0xf]
        %v3610 = vld [vmem:[%s22 + $0x4] sm:$0xf]
        %v3611 = vld [vmem:[%s22 + $0x8] sm:$0xf]
        %v3612 = vld [vmem:[%s22 + $0xc] sm:$0xf]
        %v3613 = vld [vmem:[%s22 + $0x10] sm:$0xf]
        %v3614 = vld [vmem:[%s22 + $0x14] sm:$0xf]
        %v3615 = vld [vmem:[%s22 + $0x18] sm:$0xf]
        %v3616 = vld [vmem:[%s22 + $0x1c] sm:$0xf]
        %v3617 = vld [vmem:[%s22 + $0x20] sm:$0xf]
        %v3618 = vld [vmem:[%s22 + $0x24] sm:$0xf]
        %v3619 = vld [vmem:[%s22 + $0x28] sm:$0xf]
        %v3620 = vld [vmem:[%s22 + $0x2c] sm:$0xf]
        %v3621 = vld [vmem:[%s22 + $0x30] sm:$0xf]
        %v3622 = vld [vmem:[%s22 + $0x34] sm:$0xf]
        %v3623 = vld [vmem:[%s22 + $0x38] sm:$0xf]
        %v3624 = vld [vmem:[%s22 + $0x3c] sm:$0xf]
        %v3625 = vld [vmem:[%s23] sm:$0x1]
        %v3627 = vlaneseq
        %v3628 = vshrl.u32 %v3627, 7
        %v3629 = vsub.s32 0, %v3628
        %v3630 = vrot.slane %v3625, %v3629
        %v3648 = vunpack.c.l.b16 %v3609
        %v3649 = vunpack.c.l.b16 %v3610
        %v3650 = vunpack.c.l.b16 %v3611
        %v3651 = vunpack.c.l.b16 %v3612
        %v3652 = vunpack.c.l.b16 %v3613
        %v3653 = vunpack.c.l.b16 %v3614
        %v3654 = vunpack.c.l.b16 %v3615
        %v3655 = vunpack.c.l.b16 %v3616
        %v3656 = vunpack.c.l.b16 %v3617
        %v3657 = vunpack.c.l.b16 %v3618
        %v3658 = vunpack.c.l.b16 %v3619
        %v3659 = vunpack.c.l.b16 %v3620
        %v3660 = vunpack.c.l.b16 %v3621
        %v3661 = vunpack.c.l.b16 %v3622
        %v3662 = vunpack.c.l.b16 %v3623
        %v3663 = vunpack.c.l.b16 %v3624
        %v3664 = vpack.c.b16 %v3649, %v3648
        %v3665 = vpack.c.b16 %v3651, %v3650
        %v3666 = vpack.c.b16 %v3653, %v3652
        %v3667 = vpack.c.b16 %v3655, %v3654
        %v3668 = vpack.c.b16 %v3657, %v3656
        %v3669 = vpack.c.b16 %v3659, %v3658
        %v3670 = vpack.c.b16 %v3661, %v3660
        %v3671 = vpack.c.b16 %v3663, %v3662
        %3680 = vmatprep.subr.bf16.mxu0 0
        %3681 = vmatpush1.bf16.msra.mxu0 %v3664
        %3682 = vmatprep.subr.bf16.mxu0 0
        %3683 = vmatpush1.bf16.msra.mxu0 %v3665
        %3684 = vmatprep.subr.bf16.mxu0 0
        %3685 = vmatpush1.bf16.msra.mxu0 %v3666
        %3686 = vmatprep.subr.bf16.mxu0 0
        %3687 = vmatpush1.bf16.msra.mxu0 %v3667
        %3688 = vmatprep.subr.bf16.mxu0 0
        %3689 = vmatpush1.bf16.msra.mxu0 %v3668
        %3690 = vmatprep.subr.bf16.mxu0 0
        %3691 = vmatpush1.bf16.msra.mxu0 %v3669
        %3692 = vmatprep.subr.bf16.mxu0 0
        %3693 = vmatpush1.bf16.msra.mxu0 %v3670
        %3694 = vmatprep.subr.bf16.mxu0 0
        %3695 = vmatpush1.bf16.msra.mxu0 %v3671
        %3696 = vmatprep.subr.bf16.mxu0 0
        %3697 = vmatpush1.bf16.msra.mxu0 0
        %3698 = vmatprep.subr.bf16.mxu0 0
        %3699 = vmatpush1.bf16.msra.mxu0 0
        %3700 = vmatprep.subr.bf16.mxu0 0
        %3701 = vmatpush1.bf16.msra.mxu0 0
        %3702 = vmatprep.subr.bf16.mxu0 0
        %3703 = vmatpush1.bf16.msra.mxu0 0
        %3704 = vmatprep.subr.bf16.mxu0 0
        %3705 = vmatpush1.bf16.msra.mxu0 0
        %3706 = vmatprep.subr.bf16.mxu0 0
        %3707 = vmatpush1.bf16.msra.mxu0 0
        %3708 = vmatprep.subr.bf16.mxu0 0
        %3709 = vmatpush1.bf16.msra.mxu0 0
        %3710 = vmatprep.subr.bf16.mxu0 0
        %3711 = vmatpush1.bf16.msra.mxu0 0
        %3712 = vmatprep.mubr.bf16.mxu0 0
        %3713 = vmatmul.mubr.bf16.gmra.mrb[0].mxu0 %v3608
        %v3714 = vpop.f32.mrb[0].mxu0
        %v3715 = vadd.f32 %v3630, %v3714
        %v3716 = vpop.f32.mrb[0].mxu0
        %v3717 = vpop.f32.mrb[0].mxu0
        %v3718 = vadd.f32 %v3630, %v3717
        %v3719 = vpop.f32.mrb[0].mxu0
        %3720 = vdwg.mxu0
        %v3721 = vadd.f32 %v3536, %v3715
        %v3722 = vadd.f32 %v3537, %v3718
        %v3723 = vld [vmem:[%s24] sm:$0x1]
        %v3724 = vld [vmem:[%s25] sm:$0x1]
        %v3725 = vsel %vm1039, %v3721, 0.0
        %3726 = vadd.xlane.f32.xlu0 %v3725
        %v3727 = vpop.xlane.xlu0 %3726
        %v3728 = vsel %vm1039, %v3722, 0.0
        %3729 = vadd.xlane.f32.xlu0 %v3728
        %v3730 = vpop.xlane.xlu0 %3729
        %v3731 = vmul.f32 %v3727, %v2221
        %v3732 = vmul.f32 %v3730, %v2221
        %v3733 = vsub.f32 %v3721, %v3731
        %v3734 = vsub.f32 %v3722, %v3732
        %v3735 = vmul.f32 %v3733, %v3733
        %v3736 = vmul.f32 %v3734, %v3734
        %v3737 = vsel %vm1039, %v3735, 0.0
        %3738 = vadd.xlane.f32.xlu0 %v3737
        %v3739 = vpop.xlane.xlu0 %3738
        %v3740 = vsel %vm1039, %v3736, 0.0
        %3741 = vadd.xlane.f32.xlu0 %v3740
        %v3742 = vpop.xlane.xlu0 %3741
        %v3743 = vmul.f32 %v3739, 0.032258064
        %v3744 = vmul.f32 %v3742, 0.032258064
        %v3745 = vrsqrt.pop %v3743
        %v3746 = vmul.f32 %v3743, %v3745
        %vm3747 = vcmp.eq.f32.partialorder %v3743, inf
        %v3748 = vsel %vm3747, %v3743, %v3746
        %vm3749 = vcmp.eq.f32.partialorder %v3743, 0.0
        %v3750 = vand.u32 %v3743, 2147483648
        %v3751 = vsel %vm3749, %v3750, %v3748
        %v3752 = vrsqrt.pop %v3744
        %v3753 = vmul.f32 %v3744, %v3752
        %vm3754 = vcmp.eq.f32.partialorder %v3744, inf
        %v3755 = vsel %vm3754, %v3744, %v3753
        %vm3756 = vcmp.eq.f32.partialorder %v3744, 0.0
        %v3757 = vand.u32 %v3744, 2147483648
        %v3758 = vsel %vm3756, %v3757, %v3755
        %v3759 = vadd.f32 %v3751, 1e-06
        %v3760 = vadd.f32 %v3758, 1e-06
        %v3761 = vrcp.pop %v3759
        %v3762 = vmul.f32 %v3733, %v3761
        %v3763 = vrcp.pop %v3760
        %v3764 = vmul.f32 %v3734, %v3763
        %v3766 = vlaneseq
        %v3767 = vshrl.u32 %v3766, 7
        %v3768 = vsub.s32 0, %v3767
        %v3769 = vrot.slane %v3723, %v3768
        %v3771 = vmul.f32 %v3769, %v3762
        %v3772 = vmul.f32 %v3769, %v3764
        %v3774 = vlaneseq
        %v3775 = vshrl.u32 %v3774, 7
        %v3776 = vsub.s32 0, %v3775
        %v3777 = vrot.slane %v3724, %v3776
        %v3779 = vadd.f32 %v3771, %v3777
        %v3780 = vadd.f32 %v3772, %v3777
        %3781 = vst.msk [vmem:[%s833] sm:$0xff] %vm1039, %v3779
        %3782 = vst.msk [vmem:[%s833 + $0x8] sm:$0xff] %vm1039, %v3780
        %s3783 = sand.u32 %s628, 1
        %s3784 = scalar_lea.sflag [#allocation6], %s3783
        %s3785 = sand.u32 %s628, 1
        %s3786 = smul.addr %s3785, 16
        %s3787 = scalar_lea.vmem [#allocation5], %s3786
        // Predicated region
        $region129: #{sga_forward.1} parent=123 // pred_check
          %p3788 = pneg %p638
        $region130: #{sga_forward.1} parent=123 // pred_check_branch
          %3790 = sbr.rel (%p3788) target = $region132
        $region131: #{sga_forward.1} parent=123 // pred_region
          %s3791 = smul.u32 2, %s45
          %s3793 = ssub.s32 256, 256
          %3794 = vsyncadd %s3784, %s3793
          %s3795 = smul.addr %s44, 2
          %s3796 = sadd.s32 %s3791, %s3795
          %s3797 = smul.addr %s3796, 128
          %s3798 = scalar_lea.hbm %s26, %s3797
          %s3799 = sshll.u32 %s3787, 4
          %s3800 = int_to_ptr.vmem [resolvable:$true] %s3799
          %3805 = dma.vmem_to_hbm [thread:$0]  %s3800, 256, %s3798, %s3784, 128, 128, 8
        $region132: #{sga_forward.1} parent=123 // pred_fallthru
          _
      $region124: #{sga_forward.1} parent=5 // pred_fallthru
        _
      %p3806 = scmp.le.s32.totalorder 2, %s35
      // Predicated region
      $region133: #{sga_forward.1} parent=5 // pred_check
        %p3807 = pneg %p3806
      $region134: #{sga_forward.1} parent=5 // pred_check_branch
        %3809 = sbr.rel (%p3807) target = $region136
      $region135: #{sga_forward.1} parent=5 // pred_region
        %s3810 = ssub.s32 %s35, 2
        // Predicated region
        $region137: #{sga_forward.1} parent=135 // pred_check
          %p3811 = pneg %p644
        $region138: #{sga_forward.1} parent=135 // pred_check_branch
          %3813 = sbr.rel (%p3811) target = $region140
        $region139: #{sga_forward.1} parent=135 // pred_region
          %s3814 = sand.u32 %s629, 1
          %s3815 = scalar_lea.sflag [#allocation6], %s3814
          %s3816 = sand.u32 %s629, 1
          %s3817 = smul.addr %s3816, 16
          %s3818 = scalar_lea.vmem [#allocation5], %s3817
          %3819 = dma.done %s3815, 256
        $region140: #{sga_forward.1} parent=135 // pred_fallthru
          _
      $region136: #{sga_forward.1} parent=5 // pred_fallthru
        _
    $region6: #{sga_forward.1} parent=1 // loop_footer
      %s39 = sadd.s32 1, %s35
    $region7: #{sga_forward.1} parent=1 // loop_footer_branch
      %34 = sbr.rel target = $region3
    $region8: #{sga_forward.1} parent=1 // loop_exit
      _
    %3820 = vsyncpa [#allocation6], 1
    %s3821 = scalar_lea.sflag [#allocation6], 1
    %3822 = vsyncpa %s3821, 1

</llo_original>
